<compile_context>
chip_gen: v5e
topology: v5e:2x2
jax: 0.10.0
libtpu: 0.0.40
codegen_flags: <defaults>
</compile_context>

<pallas_src>
import math

import jax
import jax.numpy as jnp
from jax.experimental import pallas as pl
from jax.experimental.pallas import tpu as pltpu

_IN_DIM = 60
_HIDDEN = 512


def _round_up(n, m):
    return ((n + m - 1) // m) * m


def _mlp_kernel(x_ref,
                w1_ref, b1_ref,
                w2_ref, b2_ref,
                w3_ref, b3_ref,
                w4_ref, b4_ref,
                w5_ref, b5_ref,
                w6_ref, b6_ref,
                o_ref):
    """One batch tile of the fused 6-layer MLP.

    x:  bf16 [tile_b, 64]  (features padded 60 -> 64, pad is zero)
    w1..w5: bf16 [in, out]; b1..b5: f32 [1, out]
    w6: f32 row-vector [1, 512] (the final [512, 1] layer); b6: f32 [1, 1]
    """
    # fc1: no activation (matches the PyTorch forward).
    h = jnp.dot(x_ref[...], w1_ref[...],
                preferred_element_type=jnp.float32) + b1_ref[...]

    # fc2..fc5: dropout(eval) = identity, then ReLU.
    # TODO(synk): training-mode dropout omitted; would need pltpu.prng_seed +
    # pltpu.prng_random_bits masking.
    for w_ref, b_ref in ((w2_ref, b2_ref), (w3_ref, b3_ref),
                         (w4_ref, b4_ref), (w5_ref, b5_ref)):
        h = jnp.maximum(
            jnp.dot(h.astype(jnp.bfloat16), w_ref[...],
                    preferred_element_type=jnp.float32) + b_ref[...],
            0.0)

    # fc6 (512 -> 1): a [512, 1] RHS would run the MXU at ~1/256 column
    # utilization, so do it as a VPU multiply + cross-lane (XLU) reduction.
    out = jnp.sum(h * w6_ref[...], axis=-1, keepdims=True) + b6_ref[...]
    o_ref[...] = out.astype(o_ref.dtype)


def prepare_params(params):
    """Convert f32 params (W[in,out], b[1,out]) to the kernel layout.

    - w1 zero-padded 60 -> 64 along the contraction dim.
    - w1..w5 stored in bf16 (halves weight HBM->VMEM traffic, MXU-native).
    - fc6 weight kept f32, reshaped to a [1, 512] row for the VPU reduction.
    """
    (w1, b1), (w2, b2), (w3, b3), (w4, b4), (w5, b5), (w6, b6) = params
    k_pad = _round_up(w1.shape[0], 8)
    w1p = jnp.pad(w1, ((0, k_pad - w1.shape[0]), (0, 0)))
    flat = [
        w1p.astype(jnp.bfloat16), b1.astype(jnp.float32),
        w2.astype(jnp.bfloat16), b2.astype(jnp.float32),
        w3.astype(jnp.bfloat16), b3.astype(jnp.float32),
        w4.astype(jnp.bfloat16), b4.astype(jnp.float32),
        w5.astype(jnp.bfloat16), b5.astype(jnp.float32),
        w6.reshape(1, -1).astype(jnp.float32), b6.astype(jnp.float32),
    ]
    return flat, k_pad


def _pick_tile(batch):
    if batch >= 512:
        return 512
    if batch >= 256:
        return 256
    # bf16 activation tile: second-to-last dim must pack into 16-row sublanes.
    return _round_up(batch, 16)


def _forward_impl(x, flat_params, k_pad, tile_b=None):
    batch, in_dim = x.shape
    if tile_b is None:
        tile_b = _pick_tile(batch)
    padded_batch = _round_up(batch, tile_b)
    grid = (padded_batch // tile_b,)

    # Zero-pad: batch -> multiple of tile_b, features 60 -> 64; cast once to
    # bf16 so the streamed activation DMA is half-width.
    x_p = jnp.pad(x.astype(jnp.bfloat16),
                  ((0, padded_batch - batch), (0, k_pad - in_dim)))

    # Activation tile streams with the grid; weights/biases use a constant
    # index_map so they are fetched once and stay VMEM-resident.
    in_specs = [pl.BlockSpec((tile_b, k_pad), lambda i: (i, 0))]
    in_specs += [pl.BlockSpec(p.shape, lambda i: (0, 0)) for p in flat_params]
    out_specs = pl.BlockSpec((tile_b, 1), lambda i: (i, 0))

    param_bytes = sum(p.size * p.dtype.itemsize for p in flat_params)
    flops = 2 * padded_batch * (k_pad * _HIDDEN + 4 * _HIDDEN * _HIDDEN + _HIDDEN)
    cost = pl.CostEstimate(
        flops=flops,
        transcendentals=0,
        bytes_accessed=param_bytes + x_p.size * 2 + padded_batch * 4,
    )

    out = pl.pallas_call(
        _mlp_kernel,
        out_shape=jax.ShapeDtypeStruct((padded_batch, 1), jnp.float32),
        grid=grid,
        in_specs=in_specs,
        out_specs=out_specs,
        compiler_params=pltpu.CompilerParams(
            # Batch tiles are independent -> megacore sharding on v7x.
            dimension_semantics=("parallel",),
            # Footprint ~2.1 MB bf16 weights + double-buffered tiles; 32 MiB
            # leaves headroom and is well under v7x's 64 MiB physical VMEM.
            vmem_limit_bytes=32 * 1024 * 1024,
        ),
        cost_estimate=cost,
    )(x_p, *flat_params)

    return out[:batch]


def make_forward(params, *, tile_b=None):
    """Prepare params once (cast/pad outside jit) and return a jitted fwd."""
    flat_params, k_pad = prepare_params(params)
    flat_params = [jax.device_put(p) for p in flat_params]

    def _fwd(x):
        return _forward_impl(x, flat_params, k_pad, tile_b)

    return jax.jit(_fwd)


def bid_net_forward(x, params, *, tile_b=None):
    """Convenience one-shot entry point. x: [B, 60] f32."""
    flat_params, k_pad = prepare_params(params)
    return _forward_impl(x, flat_params, k_pad, tile_b)


def init_params(key):
    """PyTorch nn.Linear-style init (U[-1/sqrt(in), 1/sqrt(in)]), f32.

    Weights stored as [in, out] (transposed vs PyTorch's [out, in]).
    """
    dims = [(_IN_DIM, _HIDDEN), (_HIDDEN, _HIDDEN), (_HIDDEN, _HIDDEN),
            (_HIDDEN, _HIDDEN), (_HIDDEN, _HIDDEN), (_HIDDEN, 1)]
    params = []
    for fan_in, fan_out in dims:
        key, kw, kb = jax.random.split(key, 3)
        bound = 1.0 / math.sqrt(fan_in)
        w = jax.random.uniform(kw, (fan_in, fan_out), jnp.float32, -bound, bound)
        b = jax.random.uniform(kb, (1, fan_out), jnp.float32, -bound, bound)
        params.append((w, b))
    return params


def reference_forward(x, params):
    """Pure-JAX reference mirroring the kernel's bf16-weight inference math."""
    (w1, b1), (w2, b2), (w3, b3), (w4, b4), (w5, b5), (w6, b6) = params

    def bdot(a, w):
        return jnp.dot(a.astype(jnp.bfloat16), w.astype(jnp.bfloat16),
                       preferred_element_type=jnp.float32)

    h = bdot(x, w1) + b1
    h = jnp.maximum(bdot(h, w2) + b2, 0.0)
    h = jnp.maximum(bdot(h, w3) + b3, 0.0)
    h = jnp.maximum(bdot(h, w4) + b4, 0.0)
    h = jnp.maximum(bdot(h, w5) + b5, 0.0)
    return jnp.sum(h * w6[:, 0][None, :], axis=-1, keepdims=True) + b6


if __name__ == "__main__":
    key = jax.random.PRNGKey(0)
    kx, kx2, kp = jax.random.split(key, 3)
    params = init_params(kp)
    fwd = make_forward(params)

    # Small serving-style batch (single grid step).
    batch = 8
    x = jax.random.normal(kx, (batch, _IN_DIM), dtype=jnp.float32)
    out = jax.block_until_ready(fwd(x))
    ref = reference_forward(x, params)
    assert out.shape == (batch, 1), out.shape
    assert jnp.allclose(out, ref, atol=1e-3, rtol=1e-3), (
        float(jnp.max(jnp.abs(out - ref))))

    # Larger batch exercising multi-tile grid + batch padding/slicing.
    batch2 = 260
    x2 = jax.random.normal(kx2, (batch2, _IN_DIM), dtype=jnp.float32)
    out2 = jax.block_until_ready(fwd(x2))
    ref2 = reference_forward(x2, params)
    assert out2.shape == (batch2, 1), out2.shape
    assert jnp.allclose(out2, ref2, atol=1e-3, rtol=1e-3), (
        float(jnp.max(jnp.abs(out2 - ref2))))

    print("KERNEL_OK")
</pallas_src>

<mosaic_0001>
module attributes {stable_mosaic.version = 11 : i64} {
  func.func @_mlp_kernel(%arg0: i32, %arg1: memref<16x64xbf16, #tpu.memory_space<vmem>>, %arg2: memref<64x512xbf16, #tpu.memory_space<vmem>>, %arg3: memref<1x512xf32, #tpu.memory_space<vmem>>, %arg4: memref<512x512xbf16, #tpu.memory_space<vmem>>, %arg5: memref<1x512xf32, #tpu.memory_space<vmem>>, %arg6: memref<512x512xbf16, #tpu.memory_space<vmem>>, %arg7: memref<1x512xf32, #tpu.memory_space<vmem>>, %arg8: memref<512x512xbf16, #tpu.memory_space<vmem>>, %arg9: memref<1x512xf32, #tpu.memory_space<vmem>>, %arg10: memref<512x512xbf16, #tpu.memory_space<vmem>>, %arg11: memref<1x512xf32, #tpu.memory_space<vmem>>, %arg12: memref<1x512xf32, #tpu.memory_space<vmem>>, %arg13: memref<1x1xf32, #tpu.memory_space<vmem>>, %arg14: memref<16x1xf32, #tpu.memory_space<vmem>>) attributes {dimension_semantics = [#tpu.dimension_semantics<parallel>], iteration_bounds = array<i64: 1>, scalar_prefetch = 0 : i64, scratch_operands = 0 : i64, tpu.core_type = #tpu.core_type<tc>, window_params = [{transform_indices = @transform_0, window_bounds = array<i64: 16, 64>}, {pipeline_mode = #tpu.pipeline_mode<synchronous>, transform_indices = @transform_1, window_bounds = array<i64: 64, 512>}, {pipeline_mode = #tpu.pipeline_mode<synchronous>, transform_indices = @transform_2, window_bounds = array<i64: 1, 512>}, {pipeline_mode = #tpu.pipeline_mode<synchronous>, transform_indices = @transform_3, window_bounds = array<i64: 512, 512>}, {pipeline_mode = #tpu.pipeline_mode<synchronous>, transform_indices = @transform_4, window_bounds = array<i64: 1, 512>}, {pipeline_mode = #tpu.pipeline_mode<synchronous>, transform_indices = @transform_5, window_bounds = array<i64: 512, 512>}, {pipeline_mode = #tpu.pipeline_mode<synchronous>, transform_indices = @transform_6, window_bounds = array<i64: 1, 512>}, {pipeline_mode = #tpu.pipeline_mode<synchronous>, transform_indices = @transform_7, window_bounds = array<i64: 512, 512>}, {pipeline_mode = #tpu.pipeline_mode<synchronous>, transform_indices = @transform_8, window_bounds = array<i64: 1, 512>}, {pipeline_mode = #tpu.pipeline_mode<synchronous>, transform_indices = @transform_9, window_bounds = array<i64: 512, 512>}, {pipeline_mode = #tpu.pipeline_mode<synchronous>, transform_indices = @transform_10, window_bounds = array<i64: 1, 512>}, {pipeline_mode = #tpu.pipeline_mode<synchronous>, transform_indices = @transform_11, window_bounds = array<i64: 1, 512>}, {pipeline_mode = #tpu.pipeline_mode<synchronous>, transform_indices = @transform_12, window_bounds = array<i64: 1, 1>}, {transform_indices = @transform_13, window_bounds = array<i64: 16, 1>}]} {
    %c0 = arith.constant 0 : index
    %c0_0 = arith.constant 0 : index
    %0 = vector.load %arg1[%c0, %c0_0] : memref<16x64xbf16, #tpu.memory_space<vmem>>, vector<16x64xbf16>
    %c0_1 = arith.constant 0 : index
    %c0_2 = arith.constant 0 : index
    %1 = vector.load %arg2[%c0_1, %c0_2] : memref<64x512xbf16, #tpu.memory_space<vmem>>, vector<64x512xbf16>
    %cst = arith.constant dense<0.000000e+00> : vector<16x512xf32>
    %2 = tpu.matmul %0, %1, %cst {dimension_numbers = #tpu.dot_dimension_numbers<[1], [0], [0], [1], [0, 0, 1, 1], [], []>} : vector<16x64xbf16>, vector<64x512xbf16>, vector<16x512xf32> -> vector<16x512xf32>
    %c0_3 = arith.constant 0 : index
    %c0_4 = arith.constant 0 : index
    %3 = vector.load %arg3[%c0_3, %c0_4] : memref<1x512xf32, #tpu.memory_space<vmem>>, vector<1x512xf32>
    %4 = vector.broadcast %3 : vector<1x512xf32> to vector<16x512xf32>
    %5 = arith.addf %2, %4 : vector<16x512xf32>
    %6 = arith.truncf %5 : vector<16x512xf32> to vector<16x512xbf16>
    %c0_5 = arith.constant 0 : index
    %c0_6 = arith.constant 0 : index
    %7 = vector.load %arg4[%c0_5, %c0_6] : memref<512x512xbf16, #tpu.memory_space<vmem>>, vector<512x512xbf16>
    %cst_7 = arith.constant dense<0.000000e+00> : vector<16x512xf32>
    %8 = tpu.matmul %6, %7, %cst_7 {dimension_numbers = #tpu.dot_dimension_numbers<[1], [0], [0], [1], [0, 0, 1, 1], [], []>} : vector<16x512xbf16>, vector<512x512xbf16>, vector<16x512xf32> -> vector<16x512xf32>
    %c0_8 = arith.constant 0 : index
    %c0_9 = arith.constant 0 : index
    %9 = vector.load %arg5[%c0_8, %c0_9] : memref<1x512xf32, #tpu.memory_space<vmem>>, vector<1x512xf32>
    %10 = vector.broadcast %9 : vector<1x512xf32> to vector<16x512xf32>
    %11 = arith.addf %8, %10 : vector<16x512xf32>
    %cst_10 = arith.constant 0.000000e+00 : f32
    %12 = vector.broadcast %cst_10 : f32 to vector<16x512xf32>
    %13 = arith.maximumf %11, %12 : vector<16x512xf32>
    %14 = arith.truncf %13 : vector<16x512xf32> to vector<16x512xbf16>
    %c0_11 = arith.constant 0 : index
    %c0_12 = arith.constant 0 : index
    %15 = vector.load %arg6[%c0_11, %c0_12] : memref<512x512xbf16, #tpu.memory_space<vmem>>, vector<512x512xbf16>
    %cst_13 = arith.constant dense<0.000000e+00> : vector<16x512xf32>
    %16 = tpu.matmul %14, %15, %cst_13 {dimension_numbers = #tpu.dot_dimension_numbers<[1], [0], [0], [1], [0, 0, 1, 1], [], []>} : vector<16x512xbf16>, vector<512x512xbf16>, vector<16x512xf32> -> vector<16x512xf32>
    %c0_14 = arith.constant 0 : index
    %c0_15 = arith.constant 0 : index
    %17 = vector.load %arg7[%c0_14, %c0_15] : memref<1x512xf32, #tpu.memory_space<vmem>>, vector<1x512xf32>
    %18 = vector.broadcast %17 : vector<1x512xf32> to vector<16x512xf32>
    %19 = arith.addf %16, %18 : vector<16x512xf32>
    %cst_16 = arith.constant 0.000000e+00 : f32
    %20 = vector.broadcast %cst_16 : f32 to vector<16x512xf32>
    %21 = arith.maximumf %19, %20 : vector<16x512xf32>
    %22 = arith.truncf %21 : vector<16x512xf32> to vector<16x512xbf16>
    %c0_17 = arith.constant 0 : index
    %c0_18 = arith.constant 0 : index
    %23 = vector.load %arg8[%c0_17, %c0_18] : memref<512x512xbf16, #tpu.memory_space<vmem>>, vector<512x512xbf16>
    %cst_19 = arith.constant dense<0.000000e+00> : vector<16x512xf32>
    %24 = tpu.matmul %22, %23, %cst_19 {dimension_numbers = #tpu.dot_dimension_numbers<[1], [0], [0], [1], [0, 0, 1, 1], [], []>} : vector<16x512xbf16>, vector<512x512xbf16>, vector<16x512xf32> -> vector<16x512xf32>
    %c0_20 = arith.constant 0 : index
    %c0_21 = arith.constant 0 : index
    %25 = vector.load %arg9[%c0_20, %c0_21] : memref<1x512xf32, #tpu.memory_space<vmem>>, vector<1x512xf32>
    %26 = vector.broadcast %25 : vector<1x512xf32> to vector<16x512xf32>
    %27 = arith.addf %24, %26 : vector<16x512xf32>
    %cst_22 = arith.constant 0.000000e+00 : f32
    %28 = vector.broadcast %cst_22 : f32 to vector<16x512xf32>
    %29 = arith.maximumf %27, %28 : vector<16x512xf32>
    %30 = arith.truncf %29 : vector<16x512xf32> to vector<16x512xbf16>
    %c0_23 = arith.constant 0 : index
    %c0_24 = arith.constant 0 : index
    %31 = vector.load %arg10[%c0_23, %c0_24] : memref<512x512xbf16, #tpu.memory_space<vmem>>, vector<512x512xbf16>
    %cst_25 = arith.constant dense<0.000000e+00> : vector<16x512xf32>
    %32 = tpu.matmul %30, %31, %cst_25 {dimension_numbers = #tpu.dot_dimension_numbers<[1], [0], [0], [1], [0, 0, 1, 1], [], []>} : vector<16x512xbf16>, vector<512x512xbf16>, vector<16x512xf32> -> vector<16x512xf32>
    %c0_26 = arith.constant 0 : index
    %c0_27 = arith.constant 0 : index
    %33 = vector.load %arg11[%c0_26, %c0_27] : memref<1x512xf32, #tpu.memory_space<vmem>>, vector<1x512xf32>
    %34 = vector.broadcast %33 : vector<1x512xf32> to vector<16x512xf32>
    %35 = arith.addf %32, %34 : vector<16x512xf32>
    %cst_28 = arith.constant 0.000000e+00 : f32
    %36 = vector.broadcast %cst_28 : f32 to vector<16x512xf32>
    %37 = arith.maximumf %35, %36 : vector<16x512xf32>
    %c0_29 = arith.constant 0 : index
    %c0_30 = arith.constant 0 : index
    %38 = vector.load %arg12[%c0_29, %c0_30] : memref<1x512xf32, #tpu.memory_space<vmem>>, vector<1x512xf32>
    %39 = vector.broadcast %38 : vector<1x512xf32> to vector<16x512xf32>
    %40 = arith.mulf %37, %39 : vector<16x512xf32>
    %cst_31 = arith.constant dense<0.000000e+00> : vector<16xf32>
    %41 = vector.multi_reduction <add>, %40, %cst_31 [1] : vector<16x512xf32> to vector<16xf32>
    %42 = vector.shape_cast %41 : vector<16xf32> to vector<16x1xf32>
    %c0_32 = arith.constant 0 : index
    %c0_33 = arith.constant 0 : index
    %43 = vector.load %arg13[%c0_32, %c0_33] : memref<1x1xf32, #tpu.memory_space<vmem>>, vector<1x1xf32>
    %44 = vector.broadcast %43 : vector<1x1xf32> to vector<16x1xf32>
    %45 = arith.addf %42, %44 : vector<16x1xf32>
    %c0_34 = arith.constant 0 : index
    %c0_35 = arith.constant 0 : index
    %46 = vector.load %arg14[%c0_34, %c0_35] : memref<16x1xf32, #tpu.memory_space<vmem>>, vector<16x1xf32>
    tpu.vector_store %arg14[%c0_34, %c0_35], %45 {strides = array<i32>} : memref<16x1xf32, #tpu.memory_space<vmem>>, vector<16x1xf32>,
    return
  }
  func.func @transform_0(%arg0: i32) -> (i32, i32) {
    %c0_i32 = arith.constant 0 : i32
    %c0_i32_0 = arith.constant 0 : i32
    return %arg0, %c0_i32 : i32, i32
  }
  func.func @transform_1(%arg0: i32) -> (i32, i32) {
    %c0_i32 = arith.constant 0 : i32
    %c0_i32_0 = arith.constant 0 : i32
    %c0_i32_1 = arith.constant 0 : i32
    return %c0_i32, %c0_i32_0 : i32, i32
  }
  func.func @transform_2(%arg0: i32) -> (i32, i32) {
    %c0_i32 = arith.constant 0 : i32
    %c0_i32_0 = arith.constant 0 : i32
    %c0_i32_1 = arith.constant 0 : i32
    return %c0_i32, %c0_i32_0 : i32, i32
  }
  func.func @transform_3(%arg0: i32) -> (i32, i32) {
    %c0_i32 = arith.constant 0 : i32
    %c0_i32_0 = arith.constant 0 : i32
    %c0_i32_1 = arith.constant 0 : i32
    return %c0_i32, %c0_i32_0 : i32, i32
  }
  func.func @transform_4(%arg0: i32) -> (i32, i32) {
    %c0_i32 = arith.constant 0 : i32
    %c0_i32_0 = arith.constant 0 : i32
    %c0_i32_1 = arith.constant 0 : i32
    return %c0_i32, %c0_i32_0 : i32, i32
  }
  func.func @transform_5(%arg0: i32) -> (i32, i32) {
    %c0_i32 = arith.constant 0 : i32
    %c0_i32_0 = arith.constant 0 : i32
    %c0_i32_1 = arith.constant 0 : i32
    return %c0_i32, %c0_i32_0 : i32, i32
  }
  func.func @transform_6(%arg0: i32) -> (i32, i32) {
    %c0_i32 = arith.constant 0 : i32
    %c0_i32_0 = arith.constant 0 : i32
    %c0_i32_1 = arith.constant 0 : i32
    return %c0_i32, %c0_i32_0 : i32, i32
  }
  func.func @transform_7(%arg0: i32) -> (i32, i32) {
    %c0_i32 = arith.constant 0 : i32
    %c0_i32_0 = arith.constant 0 : i32
    %c0_i32_1 = arith.constant 0 : i32
    return %c0_i32, %c0_i32_0 : i32, i32
  }
  func.func @transform_8(%arg0: i32) -> (i32, i32) {
    %c0_i32 = arith.constant 0 : i32
    %c0_i32_0 = arith.constant 0 : i32
    %c0_i32_1 = arith.constant 0 : i32
    return %c0_i32, %c0_i32_0 : i32, i32
  }
  func.func @transform_9(%arg0: i32) -> (i32, i32) {
    %c0_i32 = arith.constant 0 : i32
    %c0_i32_0 = arith.constant 0 : i32
    %c0_i32_1 = arith.constant 0 : i32
    return %c0_i32, %c0_i32_0 : i32, i32
  }
  func.func @transform_10(%arg0: i32) -> (i32, i32) {
    %c0_i32 = arith.constant 0 : i32
    %c0_i32_0 = arith.constant 0 : i32
    %c0_i32_1 = arith.constant 0 : i32
    return %c0_i32, %c0_i32_0 : i32, i32
  }
  func.func @transform_11(%arg0: i32) -> (i32, i32) {
    %c0_i32 = arith.constant 0 : i32
    %c0_i32_0 = arith.constant 0 : i32
    %c0_i32_1 = arith.constant 0 : i32
    return %c0_i32, %c0_i32_0 : i32, i32
  }
  func.func @transform_12(%arg0: i32) -> (i32, i32) {
    %c0_i32 = arith.constant 0 : i32
    %c0_i32_0 = arith.constant 0 : i32
    %c0_i32_1 = arith.constant 0 : i32
    return %c0_i32, %c0_i32_0 : i32, i32
  }
  func.func @transform_13(%arg0: i32) -> (i32, i32) {
    %c0_i32 = arith.constant 0 : i32
    %c0_i32_0 = arith.constant 0 : i32
    return %arg0, %c0_i32 : i32, i32
  }
}

</mosaic_0001>

<llo_original>
// kernel: _fwd.1
$region0: #{_fwd.1}
  #allocation0 [shape = 'u32[]', space=smem, size = 0x4, offset = 0x4, fixed_abs, tag = 'smem constant byte address 0x4 - core index']
  #allocation1 [shape = 'u32[72,128]{1,0:T(1,128)}', space=vmem, size = 0x9000, scoped, tag = 'internal scratch']
  #allocation2 [shape = 'f32[1,1]{1,0:T(1,128)S(1)}', space=vmem, size = 0x200, scoped, tag = 'scoped memory for _fwd.1']
  %s0 = inlined_call_operand.vmem [shape: bf16[16,64], index: 0, kind: input, shape index: {}]
  %s1 = inlined_call_operand.hbm [shape: bf16[64,512], index: 1, kind: input, shape index: {}]
  %s2 = inlined_call_operand.vmem [shape: f32[1,512], index: 2, kind: input, shape index: {}]
  %s3 = inlined_call_operand.hbm [shape: bf16[512,512], index: 3, kind: input, shape index: {}]
  %s4 = inlined_call_operand.vmem [shape: f32[1,512], index: 4, kind: input, shape index: {}]
  %s5 = inlined_call_operand.hbm [shape: bf16[512,512], index: 5, kind: input, shape index: {}]
  %s6 = inlined_call_operand.vmem [shape: f32[1,512], index: 6, kind: input, shape index: {}]
  %s7 = inlined_call_operand.hbm [shape: bf16[512,512], index: 7, kind: input, shape index: {}]
  %s8 = inlined_call_operand.vmem [shape: f32[1,512], index: 8, kind: input, shape index: {}]
  %s9 = inlined_call_operand.hbm [shape: bf16[512,512], index: 9, kind: input, shape index: {}]
  %s10 = inlined_call_operand.vmem [shape: f32[1,512], index: 10, kind: input, shape index: {}]
  %s11 = inlined_call_operand.vmem [shape: f32[1,512], index: 11, kind: input, shape index: {}]
  %s12 = inlined_call_operand.<no memory space> [shape: f32[1,1], index: 12, kind: input, shape index: {}]
  %s13 = inlined_call_operand.vmem [shape: f32[16,1], index: 13, kind: output, shape index: {}]
  %s14 = sld [smem:[#allocation0]]
  $region82: #{_fwd.1} parent=0
    _
  %s16 = ssub.s32 1, %s14
  %s17 = scalar_select 0, %s16, %s14
  %v18 = vstv %s12
  %19 = vst [vmem:[#allocation2] sm:$0x1] %v18
  $region1: #{_fwd.1} parent=0
    #allocation3 [shape = 'u8[65536]{0}', space=vmem, size = 0x10000, scoped, tag = 'input window, operand 1, single buffered']
    #allocation4 [shape = 's32[1]{0}', space=sflag, size = 0x4, scoped, tag = 'scoped memory for _fwd.1']
    #allocation5 [shape = 'u8[524288]{0}', space=vmem, size = 0x80000, scoped, tag = 'input window, operand 3, single buffered']
    #allocation6 [shape = 's32[1]{0}', space=sflag, size = 0x4, scoped, tag = 'scoped memory for _fwd.1']
    #allocation7 [shape = 'u8[524288]{0}', space=vmem, size = 0x80000, scoped, tag = 'input window, operand 5, single buffered']
    #allocation8 [shape = 'u8[524288]{0}', space=vmem, size = 0x80000, scoped, tag = 'input window, operand 7, single buffered']
    #allocation9 [shape = 's32[1]{0}', space=sflag, size = 0x4, scoped, tag = 'scoped memory for _fwd.1']
    #allocation10 [shape = 'u8[524288]{0}', space=vmem, size = 0x80000, scoped, tag = 'input window, operand 9, single buffered']
    %20 = vsyncpa [#allocation4], 0
    %21 = vsyncpa [#allocation6], 0
    %22 = vsyncpa [#allocation9], 0
    // Predicated region
    $region2: #{_fwd.1} parent=1 // pred_check
      _
    $region3: #{_fwd.1} parent=1 // pred_check_branch
      %24 = sbr.rel (0) target = $region5
    $region4: #{_fwd.1} parent=1 // pred_region
      _
    $region5: #{_fwd.1} parent=1 // pred_fallthru
      _
    // Predicated region
    $region6: #{_fwd.1} parent=1 // pred_check
      _
    $region7: #{_fwd.1} parent=1 // pred_check_branch
      %26 = sbr.rel (0) target = $region9
    $region8: #{_fwd.1} parent=1 // pred_region
      %28 = vsyncadd [#allocation4], 0
      %s29 = sshll.u32 %s1, 4
      %s30 = int_to_ptr.hbm [resolvable:$true] %s29
      %s31 = sshll.u32 [#allocation3], 4
      %s32 = int_to_ptr.vmem [resolvable:$true] %s31
      %37 = dma.hbm_to_vmem [thread:$0]  %s30, 2048, %s32, [#allocation4], 256, 256, 16
    $region9: #{_fwd.1} parent=1 // pred_fallthru
      _
    // Predicated region
    $region10: #{_fwd.1} parent=1 // pred_check
      _
    $region11: #{_fwd.1} parent=1 // pred_check_branch
      %39 = sbr.rel (0) target = $region13
    $region12: #{_fwd.1} parent=1 // pred_region
      _
    $region13: #{_fwd.1} parent=1 // pred_fallthru
      _
    // Predicated region
    $region14: #{_fwd.1} parent=1 // pred_check
      _
    $region15: #{_fwd.1} parent=1 // pred_check_branch
      %41 = sbr.rel (0) target = $region17
    $region16: #{_fwd.1} parent=1 // pred_region
      %43 = vsyncadd [#allocation6], 0
      %s44 = sshll.u32 %s3, 4
      %s45 = int_to_ptr.hbm [resolvable:$true] %s44
      %s46 = sshll.u32 [#allocation5], 4
      %s47 = int_to_ptr.vmem [resolvable:$true] %s46
      %52 = dma.hbm_to_vmem [thread:$0]  %s45, 16384, %s47, [#allocation6], 256, 256, 16
    $region17: #{_fwd.1} parent=1 // pred_fallthru
      _
    // Predicated region
    $region18: #{_fwd.1} parent=1 // pred_check
      _
    $region19: #{_fwd.1} parent=1 // pred_check_branch
      %54 = sbr.rel (0) target = $region21
    $region20: #{_fwd.1} parent=1 // pred_region
      _
    $region21: #{_fwd.1} parent=1 // pred_fallthru
      _
    // Predicated region
    $region22: #{_fwd.1} parent=1 // pred_check
      _
    $region23: #{_fwd.1} parent=1 // pred_check_branch
      %56 = sbr.rel (0) target = $region25
    $region24: #{_fwd.1} parent=1 // pred_region
      %58 = vsyncadd [#allocation6], 0
      %s59 = sshll.u32 %s5, 4
      %s60 = int_to_ptr.hbm [resolvable:$true] %s59
      %s61 = sshll.u32 [#allocation7], 4
      %s62 = int_to_ptr.vmem [resolvable:$true] %s61
      %67 = dma.hbm_to_vmem [thread:$0]  %s60, 16384, %s62, [#allocation6], 256, 256, 16
    $region25: #{_fwd.1} parent=1 // pred_fallthru
      _
    // Predicated region
    $region26: #{_fwd.1} parent=1 // pred_check
      _
    $region27: #{_fwd.1} parent=1 // pred_check_branch
      %69 = sbr.rel (0) target = $region29
    $region28: #{_fwd.1} parent=1 // pred_region
      _
    $region29: #{_fwd.1} parent=1 // pred_fallthru
      _
    // Predicated region
    $region30: #{_fwd.1} parent=1 // pred_check
      _
    $region31: #{_fwd.1} parent=1 // pred_check_branch
      %71 = sbr.rel (0) target = $region33
    $region32: #{_fwd.1} parent=1 // pred_region
      %73 = vsyncadd [#allocation9], 0
      %s74 = sshll.u32 %s7, 4
      %s75 = int_to_ptr.hbm [resolvable:$true] %s74
      %s76 = sshll.u32 [#allocation8], 4
      %s77 = int_to_ptr.vmem [resolvable:$true] %s76
      %82 = dma.hbm_to_vmem [thread:$0]  %s75, 16384, %s77, [#allocation9], 256, 256, 16
    $region33: #{_fwd.1} parent=1 // pred_fallthru
      _
    // Predicated region
    $region34: #{_fwd.1} parent=1 // pred_check
      _
    $region35: #{_fwd.1} parent=1 // pred_check_branch
      %84 = sbr.rel (0) target = $region37
    $region36: #{_fwd.1} parent=1 // pred_region
      _
    $region37: #{_fwd.1} parent=1 // pred_fallthru
      _
    // Predicated region
    $region38: #{_fwd.1} parent=1 // pred_check
      _
    $region39: #{_fwd.1} parent=1 // pred_check_branch
      %86 = sbr.rel (0) target = $region41
    $region40: #{_fwd.1} parent=1 // pred_region
      %88 = vsyncadd [#allocation9], 0
      %s89 = sshll.u32 %s9, 4
      %s90 = int_to_ptr.hbm [resolvable:$true] %s89
      %s91 = sshll.u32 [#allocation10], 4
      %s92 = int_to_ptr.vmem [resolvable:$true] %s91
      %97 = dma.hbm_to_vmem [thread:$0]  %s90, 16384, %s92, [#allocation9], 256, 256, 16
    $region41: #{_fwd.1} parent=1 // pred_fallthru
      _
    // Predicated region
    $region42: #{_fwd.1} parent=1 // pred_check
      _
    $region43: #{_fwd.1} parent=1 // pred_check_branch
      %99 = sbr.rel (0) target = $region45
    $region44: #{_fwd.1} parent=1 // pred_region
      _
    $region45: #{_fwd.1} parent=1 // pred_fallthru
      _
    // Predicated region
    $region46: #{_fwd.1} parent=1 // pred_check
      _
    $region47: #{_fwd.1} parent=1 // pred_check_branch
      %101 = sbr.rel (0) target = $region49
    $region48: #{_fwd.1} parent=1 // pred_region
      _
    $region49: #{_fwd.1} parent=1 // pred_fallthru
      _
    // Predicated region
    $region50: #{_fwd.1} parent=1 // pred_check
      _
    $region51: #{_fwd.1} parent=1 // pred_check_branch
      %103 = sbr.rel (0) target = $region53
    $region52: #{_fwd.1} parent=1 // pred_region
      _
    $region53: #{_fwd.1} parent=1 // pred_fallthru
      _
    // Predicated region
    $region54: #{_fwd.1} parent=1 // pred_check
      _
    $region55: #{_fwd.1} parent=1 // pred_check_branch
      %105 = sbr.rel (0) target = $region57
    $region56: #{_fwd.1} parent=1 // pred_region
      %107 = dma.done [#allocation4], 2048
    $region57: #{_fwd.1} parent=1 // pred_fallthru
      _
    // Predicated region
    $region58: #{_fwd.1} parent=1 // pred_check
      _
    $region59: #{_fwd.1} parent=1 // pred_check_branch
      %109 = sbr.rel (0) target = $region61
    $region60: #{_fwd.1} parent=1 // pred_region
      %111 = dma.done [#allocation6], 16384
    $region61: #{_fwd.1} parent=1 // pred_fallthru
      _
    // Predicated region
    $region62: #{_fwd.1} parent=1 // pred_check
      _
    $region63: #{_fwd.1} parent=1 // pred_check_branch
      %113 = sbr.rel (0) target = $region65
    $region64: #{_fwd.1} parent=1 // pred_region
      %115 = dma.done [#allocation6], 16384
    $region65: #{_fwd.1} parent=1 // pred_fallthru
      _
    // Predicated region
    $region66: #{_fwd.1} parent=1 // pred_check
      _
    $region67: #{_fwd.1} parent=1 // pred_check_branch
      %117 = sbr.rel (0) target = $region69
    $region68: #{_fwd.1} parent=1 // pred_region
      %119 = dma.done [#allocation9], 16384
    $region69: #{_fwd.1} parent=1 // pred_fallthru
      _
    // Predicated region
    $region70: #{_fwd.1} parent=1 // pred_check
      _
    $region71: #{_fwd.1} parent=1 // pred_check_branch
      %121 = sbr.rel (0) target = $region73
    $region72: #{_fwd.1} parent=1 // pred_region
      %123 = dma.done [#allocation9], 16384
    $region73: #{_fwd.1} parent=1 // pred_fallthru
      _
    %v125 = vld [vmem:[%s0] sm:$0xf]
    %v126 = vld [vmem:[%s0 + $0x4] sm:$0xf]
    %v127 = vld [vmem:[#allocation3] sm:$0xff]
    %v128 = vld [vmem:[#allocation3 + $0x8] sm:$0xff]
    %v129 = vld [vmem:[#allocation3 + $0x10] sm:$0xff]
    %v130 = vld [vmem:[#allocation3 + $0x18] sm:$0xff]
    %v131 = vld [vmem:[#allocation3 + $0x20] sm:$0xff]
    %v132 = vld [vmem:[#allocation3 + $0x28] sm:$0xff]
    %v133 = vld [vmem:[#allocation3 + $0x30] sm:$0xff]
    %v134 = vld [vmem:[#allocation3 + $0x38] sm:$0xff]
    %v135 = vld [vmem:[#allocation3 + $0x40] sm:$0xff]
    %v136 = vld [vmem:[#allocation3 + $0x48] sm:$0xff]
    %v137 = vld [vmem:[#allocation3 + $0x50] sm:$0xff]
    %v138 = vld [vmem:[#allocation3 + $0x58] sm:$0xff]
    %v139 = vld [vmem:[#allocation3 + $0x60] sm:$0xff]
    %v140 = vld [vmem:[#allocation3 + $0x68] sm:$0xff]
    %v141 = vld [vmem:[#allocation3 + $0x70] sm:$0xff]
    %v142 = vld [vmem:[#allocation3 + $0x78] sm:$0xff]
    %v143 = vld [vmem:[%s2] sm:$0xf]
    %v145 = vperm.slane %v143, 0
    %v146 = vperm.slane %v143, 1
    %v147 = vperm.slane %v143, 2
    %v148 = vperm.slane %v143, 3
    %v155 = vunpack.c.l.b16 %v125
    %v156 = vunpack.c.l.b16 %v126
    %v157 = vpack.c.b16 %v156, %v155
    %v174 = vunpack.c.l.b16 %v127
    %v175 = vunpack.c.h.b16 %v127
    %v176 = vunpack.c.l.b16 %v128
    %v177 = vunpack.c.h.b16 %v128
    %v178 = vunpack.c.l.b16 %v129
    %v179 = vunpack.c.h.b16 %v129
    %v180 = vunpack.c.l.b16 %v130
    %v181 = vunpack.c.h.b16 %v130
    %v182 = vunpack.c.l.b16 %v131
    %v183 = vunpack.c.h.b16 %v131
    %v184 = vunpack.c.l.b16 %v132
    %v185 = vunpack.c.h.b16 %v132
    %v186 = vunpack.c.l.b16 %v133
    %v187 = vunpack.c.h.b16 %v133
    %v188 = vunpack.c.l.b16 %v134
    %v189 = vunpack.c.h.b16 %v134
    %v190 = vunpack.c.l.b16 %v135
    %v191 = vunpack.c.h.b16 %v135
    %v192 = vunpack.c.l.b16 %v136
    %v193 = vunpack.c.h.b16 %v136
    %v194 = vunpack.c.l.b16 %v137
    %v195 = vunpack.c.h.b16 %v137
    %v196 = vunpack.c.l.b16 %v138
    %v197 = vunpack.c.h.b16 %v138
    %v198 = vunpack.c.l.b16 %v139
    %v199 = vunpack.c.h.b16 %v139
    %v200 = vunpack.c.l.b16 %v140
    %v201 = vunpack.c.h.b16 %v140
    %v202 = vunpack.c.l.b16 %v141
    %v203 = vunpack.c.h.b16 %v141
    %v204 = vunpack.c.l.b16 %v142
    %v205 = vunpack.c.h.b16 %v142
    %v206 = vpack.c.b16 %v178, %v174
    %v207 = vpack.c.b16 %v179, %v175
    %v208 = vpack.c.b16 %v180, %v176
    %v209 = vpack.c.b16 %v181, %v177
    %v210 = vpack.c.b16 %v186, %v182
    %v211 = vpack.c.b16 %v187, %v183
    %v212 = vpack.c.b16 %v188, %v184
    %v213 = vpack.c.b16 %v189, %v185
    %v214 = vpack.c.b16 %v194, %v190
    %v215 = vpack.c.b16 %v195, %v191
    %v216 = vpack.c.b16 %v196, %v192
    %v217 = vpack.c.b16 %v197, %v193
    %v218 = vpack.c.b16 %v202, %v198
    %v219 = vpack.c.b16 %v203, %v199
    %v220 = vpack.c.b16 %v204, %v200
    %v221 = vpack.c.b16 %v205, %v201
    %vm238 = vcmask 523264
    %v240 = vsel %vm238, %v157, 0
    %242 = vmatpush.bf16.msra.mxu0 0
    %243 = vmatpush.bf16.msra.mxu0 0
    %244 = vmatpush.bf16.msra.mxu0 0
    %245 = vmatpush.bf16.msra.mxu0 0
    %246 = vmatpush.bf16.msra.mxu0 %v218
    %247 = vmatpush.bf16.msra.mxu0 %v214
    %248 = vmatpush.bf16.msra.mxu0 %v210
    %249 = vmatpush.bf16.msra.mxu0 %v206
    %250 = vmatmul.bf16.gmra.mxu0 %v240
    %v251 = vpop.f32.mrf.mxu0
    %v252 = vadd.f32 %v145, %v251
    %v253 = vpop.f32.mrf.mxu0
    %v254 = vadd.f32 %v145, %v253
    %255 = vdwg.mxu0
    %256 = vmatpush.bf16.msra.mxu0 0
    %257 = vmatpush.bf16.msra.mxu0 0
    %258 = vmatpush.bf16.msra.mxu0 0
    %259 = vmatpush.bf16.msra.mxu0 0
    %260 = vmatpush.bf16.msra.mxu0 %v219
    %261 = vmatpush.bf16.msra.mxu0 %v215
    %262 = vmatpush.bf16.msra.mxu0 %v211
    %263 = vmatpush.bf16.msra.mxu0 %v207
    %264 = vmatmul.bf16.gmra.mxu0 %v240
    %v265 = vpop.f32.mrf.mxu0
    %v266 = vadd.f32 %v146, %v265
    %v267 = vpop.f32.mrf.mxu0
    %v268 = vadd.f32 %v146, %v267
    %269 = vdwg.mxu0
    %270 = vmatpush.bf16.msra.mxu0 0
    %271 = vmatpush.bf16.msra.mxu0 0
    %272 = vmatpush.bf16.msra.mxu0 0
    %273 = vmatpush.bf16.msra.mxu0 0
    %274 = vmatpush.bf16.msra.mxu0 %v220
    %275 = vmatpush.bf16.msra.mxu0 %v216
    %276 = vmatpush.bf16.msra.mxu0 %v212
    %277 = vmatpush.bf16.msra.mxu0 %v208
    %278 = vmatmul.bf16.gmra.mxu0 %v240
    %v279 = vpop.f32.mrf.mxu0
    %v280 = vadd.f32 %v147, %v279
    %v281 = vpop.f32.mrf.mxu0
    %v282 = vadd.f32 %v147, %v281
    %283 = vdwg.mxu0
    %284 = vmatpush.bf16.msra.mxu0 0
    %285 = vmatpush.bf16.msra.mxu0 0
    %286 = vmatpush.bf16.msra.mxu0 0
    %287 = vmatpush.bf16.msra.mxu0 0
    %288 = vmatpush.bf16.msra.mxu0 %v221
    %289 = vmatpush.bf16.msra.mxu0 %v217
    %290 = vmatpush.bf16.msra.mxu0 %v213
    %291 = vmatpush.bf16.msra.mxu0 %v209
    %292 = vmatmul.bf16.gmra.mxu0 %v240
    %v293 = vpop.f32.mrf.mxu0
    %v294 = vadd.f32 %v148, %v293
    %v295 = vpop.f32.mrf.mxu0
    %v296 = vadd.f32 %v148, %v295
    %297 = vdwg.mxu0
    %v298 = vpack.c.bf16 %v254, %v252
    %v299 = vpack.c.bf16 %v268, %v266
    %v300 = vpack.c.bf16 %v282, %v280
    %v301 = vpack.c.bf16 %v296, %v294
    %v302 = vld [vmem:[#allocation5] sm:$0xff]
    %v303 = vld [vmem:[#allocation5 + $0x8] sm:$0xff]
    %v304 = vld [vmem:[#allocation5 + $0x10] sm:$0xff]
    %v305 = vld [vmem:[#allocation5 + $0x18] sm:$0xff]
    %v306 = vld [vmem:[#allocation5 + $0x20] sm:$0xff]
    %v307 = vld [vmem:[#allocation5 + $0x28] sm:$0xff]
    %v308 = vld [vmem:[#allocation5 + $0x30] sm:$0xff]
    %v309 = vld [vmem:[#allocation5 + $0x38] sm:$0xff]
    %v310 = vld [vmem:[#allocation5 + $0x40] sm:$0xff]
    %v311 = vld [vmem:[#allocation5 + $0x48] sm:$0xff]
    %v312 = vld [vmem:[#allocation5 + $0x50] sm:$0xff]
    %v313 = vld [vmem:[#allocation5 + $0x58] sm:$0xff]
    %v314 = vld [vmem:[#allocation5 + $0x60] sm:$0xff]
    %v315 = vld [vmem:[#allocation5 + $0x68] sm:$0xff]
    %v316 = vld [vmem:[#allocation5 + $0x70] sm:$0xff]
    %v317 = vld [vmem:[#allocation5 + $0x78] sm:$0xff]
    %v318 = vld [vmem:[#allocation5 + $0x80] sm:$0xff]
    %v319 = vld [vmem:[#allocation5 + $0x88] sm:$0xff]
    %v320 = vld [vmem:[#allocation5 + $0x90] sm:$0xff]
    %v321 = vld [vmem:[#allocation5 + $0x98] sm:$0xff]
    %v322 = vld [vmem:[#allocation5 + $0xa0] sm:$0xff]
    %v323 = vld [vmem:[#allocation5 + $0xa8] sm:$0xff]
    %v324 = vld [vmem:[#allocation5 + $0xb0] sm:$0xff]
    %v325 = vld [vmem:[#allocation5 + $0xb8] sm:$0xff]
    %v326 = vld [vmem:[#allocation5 + $0xc0] sm:$0xff]
    %v327 = vld [vmem:[#allocation5 + $0xc8] sm:$0xff]
    %v328 = vld [vmem:[#allocation5 + $0xd0] sm:$0xff]
    %v329 = vld [vmem:[#allocation5 + $0xd8] sm:$0xff]
    %v330 = vld [vmem:[#allocation5 + $0xe0] sm:$0xff]
    %v331 = vld [vmem:[#allocation5 + $0xe8] sm:$0xff]
    %v332 = vld [vmem:[#allocation5 + $0xf0] sm:$0xff]
    %v333 = vld [vmem:[#allocation5 + $0xf8] sm:$0xff]
    %v334 = vld [vmem:[#allocation5 + $0x100] sm:$0xff]
    %v335 = vld [vmem:[#allocation5 + $0x108] sm:$0xff]
    %v336 = vld [vmem:[#allocation5 + $0x110] sm:$0xff]
    %v337 = vld [vmem:[#allocation5 + $0x118] sm:$0xff]
    %v338 = vld [vmem:[#allocation5 + $0x120] sm:$0xff]
    %v339 = vld [vmem:[#allocation5 + $0x128] sm:$0xff]
    %v340 = vld [vmem:[#allocation5 + $0x130] sm:$0xff]
    %v341 = vld [vmem:[#allocation5 + $0x138] sm:$0xff]
    %v342 = vld [vmem:[#allocation5 + $0x140] sm:$0xff]
    %v343 = vld [vmem:[#allocation5 + $0x148] sm:$0xff]
    %v344 = vld [vmem:[#allocation5 + $0x150] sm:$0xff]
    %v345 = vld [vmem:[#allocation5 + $0x158] sm:$0xff]
    %v346 = vld [vmem:[#allocation5 + $0x160] sm:$0xff]
    %v347 = vld [vmem:[#allocation5 + $0x168] sm:$0xff]
    %v348 = vld [vmem:[#allocation5 + $0x170] sm:$0xff]
    %v349 = vld [vmem:[#allocation5 + $0x178] sm:$0xff]
    %v350 = vld [vmem:[#allocation5 + $0x180] sm:$0xff]
    %v351 = vld [vmem:[#allocation5 + $0x188] sm:$0xff]
    %v352 = vld [vmem:[#allocation5 + $0x190] sm:$0xff]
    %v353 = vld [vmem:[#allocation5 + $0x198] sm:$0xff]
    %v354 = vld [vmem:[#allocation5 + $0x1a0] sm:$0xff]
    %v355 = vld [vmem:[#allocation5 + $0x1a8] sm:$0xff]
    %v356 = vld [vmem:[#allocation5 + $0x1b0] sm:$0xff]
    %v357 = vld [vmem:[#allocation5 + $0x1b8] sm:$0xff]
    %v358 = vld [vmem:[#allocation5 + $0x1c0] sm:$0xff]
    %v359 = vld [vmem:[#allocation5 + $0x1c8] sm:$0xff]
    %v360 = vld [vmem:[#allocation5 + $0x1d0] sm:$0xff]
    %v361 = vld [vmem:[#allocation5 + $0x1d8] sm:$0xff]
    %v362 = vld [vmem:[#allocation5 + $0x1e0] sm:$0xff]
    %v363 = vld [vmem:[#allocation5 + $0x1e8] sm:$0xff]
    %v364 = vld [vmem:[#allocation5 + $0x1f0] sm:$0xff]
    %v365 = vld [vmem:[#allocation5 + $0x1f8] sm:$0xff]
    %v366 = vld [vmem:[#allocation5 + $0x200] sm:$0xff]
    %v367 = vld [vmem:[#allocation5 + $0x208] sm:$0xff]
    %v368 = vld [vmem:[#allocation5 + $0x210] sm:$0xff]
    %v369 = vld [vmem:[#allocation5 + $0x218] sm:$0xff]
    %v370 = vld [vmem:[#allocation5 + $0x220] sm:$0xff]
    %v371 = vld [vmem:[#allocation5 + $0x228] sm:$0xff]
    %v372 = vld [vmem:[#allocation5 + $0x230] sm:$0xff]
    %v373 = vld [vmem:[#allocation5 + $0x238] sm:$0xff]
    %v374 = vld [vmem:[#allocation5 + $0x240] sm:$0xff]
    %v375 = vld [vmem:[#allocation5 + $0x248] sm:$0xff]
    %v376 = vld [vmem:[#allocation5 + $0x250] sm:$0xff]
    %v377 = vld [vmem:[#allocation5 + $0x258] sm:$0xff]
    %v378 = vld [vmem:[#allocation5 + $0x260] sm:$0xff]
    %v379 = vld [vmem:[#allocation5 + $0x268] sm:$0xff]
    %v380 = vld [vmem:[#allocation5 + $0x270] sm:$0xff]
    %v381 = vld [vmem:[#allocation5 + $0x278] sm:$0xff]
    %v382 = vld [vmem:[#allocation5 + $0x280] sm:$0xff]
    %v383 = vld [vmem:[#allocation5 + $0x288] sm:$0xff]
    %v384 = vld [vmem:[#allocation5 + $0x290] sm:$0xff]
    %v385 = vld [vmem:[#allocation5 + $0x298] sm:$0xff]
    %v386 = vld [vmem:[#allocation5 + $0x2a0] sm:$0xff]
    %v387 = vld [vmem:[#allocation5 + $0x2a8] sm:$0xff]
    %v388 = vld [vmem:[#allocation5 + $0x2b0] sm:$0xff]
    %v389 = vld [vmem:[#allocation5 + $0x2b8] sm:$0xff]
    %v390 = vld [vmem:[#allocation5 + $0x2c0] sm:$0xff]
    %v391 = vld [vmem:[#allocation5 + $0x2c8] sm:$0xff]
    %v392 = vld [vmem:[#allocation5 + $0x2d0] sm:$0xff]
    %v393 = vld [vmem:[#allocation5 + $0x2d8] sm:$0xff]
    %v394 = vld [vmem:[#allocation5 + $0x2e0] sm:$0xff]
    %v395 = vld [vmem:[#allocation5 + $0x2e8] sm:$0xff]
    %v396 = vld [vmem:[#allocation5 + $0x2f0] sm:$0xff]
    %v397 = vld [vmem:[#allocation5 + $0x2f8] sm:$0xff]
    %v398 = vld [vmem:[#allocation5 + $0x300] sm:$0xff]
    %v399 = vld [vmem:[#allocation5 + $0x308] sm:$0xff]
    %v400 = vld [vmem:[#allocation5 + $0x310] sm:$0xff]
    %v401 = vld [vmem:[#allocation5 + $0x318] sm:$0xff]
    %v402 = vld [vmem:[#allocation5 + $0x320] sm:$0xff]
    %v403 = vld [vmem:[#allocation5 + $0x328] sm:$0xff]
    %v404 = vld [vmem:[#allocation5 + $0x330] sm:$0xff]
    %v405 = vld [vmem:[#allocation5 + $0x338] sm:$0xff]
    %v406 = vld [vmem:[#allocation5 + $0x340] sm:$0xff]
    %v407 = vld [vmem:[#allocation5 + $0x348] sm:$0xff]
    %v408 = vld [vmem:[#allocation5 + $0x350] sm:$0xff]
    %v409 = vld [vmem:[#allocation5 + $0x358] sm:$0xff]
    %v410 = vld [vmem:[#allocation5 + $0x360] sm:$0xff]
    %v411 = vld [vmem:[#allocation5 + $0x368] sm:$0xff]
    %v412 = vld [vmem:[#allocation5 + $0x370] sm:$0xff]
    %v413 = vld [vmem:[#allocation5 + $0x378] sm:$0xff]
    %v414 = vld [vmem:[#allocation5 + $0x380] sm:$0xff]
    %v415 = vld [vmem:[#allocation5 + $0x388] sm:$0xff]
    %v416 = vld [vmem:[#allocation5 + $0x390] sm:$0xff]
    %v417 = vld [vmem:[#allocation5 + $0x398] sm:$0xff]
    %v418 = vld [vmem:[#allocation5 + $0x3a0] sm:$0xff]
    %v419 = vld [vmem:[#allocation5 + $0x3a8] sm:$0xff]
    %v420 = vld [vmem:[#allocation5 + $0x3b0] sm:$0xff]
    %v421 = vld [vmem:[#allocation5 + $0x3b8] sm:$0xff]
    %v422 = vld [vmem:[#allocation5 + $0x3c0] sm:$0xff]
    %v423 = vld [vmem:[#allocation5 + $0x3c8] sm:$0xff]
    %v424 = vld [vmem:[#allocation5 + $0x3d0] sm:$0xff]
    %v425 = vld [vmem:[#allocation5 + $0x3d8] sm:$0xff]
    %v426 = vld [vmem:[#allocation5 + $0x3e0] sm:$0xff]
    %v427 = vld [vmem:[#allocation5 + $0x3e8] sm:$0xff]
    %v428 = vld [vmem:[#allocation5 + $0x3f0] sm:$0xff]
    %v429 = vld [vmem:[#allocation5 + $0x3f8] sm:$0xff]
    %v430 = vld [vmem:[%s4] sm:$0xf]
    %v432 = vperm.slane %v430, 0
    %v433 = vperm.slane %v430, 1
    %v434 = vperm.slane %v430, 2
    %v435 = vperm.slane %v430, 3
    %v568 = vunpack.c.l.b16 %v302
    %v569 = vunpack.c.h.b16 %v302
    %v570 = vunpack.c.l.b16 %v303
    %v571 = vunpack.c.h.b16 %v303
    %v572 = vunpack.c.l.b16 %v304
    %v573 = vunpack.c.h.b16 %v304
    %v574 = vunpack.c.l.b16 %v305
    %v575 = vunpack.c.h.b16 %v305
    %v576 = vunpack.c.l.b16 %v306
    %v577 = vunpack.c.h.b16 %v306
    %v578 = vunpack.c.l.b16 %v307
    %v579 = vunpack.c.h.b16 %v307
    %v580 = vunpack.c.l.b16 %v308
    %v581 = vunpack.c.h.b16 %v308
    %v582 = vunpack.c.l.b16 %v309
    %v583 = vunpack.c.h.b16 %v309
    %v584 = vunpack.c.l.b16 %v310
    %v585 = vunpack.c.h.b16 %v310
    %v586 = vunpack.c.l.b16 %v311
    %v587 = vunpack.c.h.b16 %v311
    %v588 = vunpack.c.l.b16 %v312
    %v589 = vunpack.c.h.b16 %v312
    %v590 = vunpack.c.l.b16 %v313
    %v591 = vunpack.c.h.b16 %v313
    %v592 = vunpack.c.l.b16 %v314
    %v593 = vunpack.c.h.b16 %v314
    %v594 = vunpack.c.l.b16 %v315
    %v595 = vunpack.c.h.b16 %v315
    %v596 = vunpack.c.l.b16 %v316
    %v597 = vunpack.c.h.b16 %v316
    %v598 = vunpack.c.l.b16 %v317
    %v599 = vunpack.c.h.b16 %v317
    %v600 = vunpack.c.l.b16 %v318
    %v601 = vunpack.c.h.b16 %v318
    %v602 = vunpack.c.l.b16 %v319
    %v603 = vunpack.c.h.b16 %v319
    %v604 = vunpack.c.l.b16 %v320
    %v605 = vunpack.c.h.b16 %v320
    %v606 = vunpack.c.l.b16 %v321
    %v607 = vunpack.c.h.b16 %v321
    %v608 = vunpack.c.l.b16 %v322
    %v609 = vunpack.c.h.b16 %v322
    %v610 = vunpack.c.l.b16 %v323
    %v611 = vunpack.c.h.b16 %v323
    %v612 = vunpack.c.l.b16 %v324
    %v613 = vunpack.c.h.b16 %v324
    %v614 = vunpack.c.l.b16 %v325
    %v615 = vunpack.c.h.b16 %v325
    %v616 = vunpack.c.l.b16 %v326
    %v617 = vunpack.c.h.b16 %v326
    %v618 = vunpack.c.l.b16 %v327
    %v619 = vunpack.c.h.b16 %v327
    %v620 = vunpack.c.l.b16 %v328
    %v621 = vunpack.c.h.b16 %v328
    %v622 = vunpack.c.l.b16 %v329
    %v623 = vunpack.c.h.b16 %v329
    %v624 = vunpack.c.l.b16 %v330
    %v625 = vunpack.c.h.b16 %v330
    %v626 = vunpack.c.l.b16 %v331
    %v627 = vunpack.c.h.b16 %v331
    %v628 = vunpack.c.l.b16 %v332
    %v629 = vunpack.c.h.b16 %v332
    %v630 = vunpack.c.l.b16 %v333
    %v631 = vunpack.c.h.b16 %v333
    %v632 = vunpack.c.l.b16 %v334
    %v633 = vunpack.c.h.b16 %v334
    %v634 = vunpack.c.l.b16 %v335
    %v635 = vunpack.c.h.b16 %v335
    %v636 = vunpack.c.l.b16 %v336
    %v637 = vunpack.c.h.b16 %v336
    %v638 = vunpack.c.l.b16 %v337
    %v639 = vunpack.c.h.b16 %v337
    %v640 = vunpack.c.l.b16 %v338
    %v641 = vunpack.c.h.b16 %v338
    %v642 = vunpack.c.l.b16 %v339
    %v643 = vunpack.c.h.b16 %v339
    %v644 = vunpack.c.l.b16 %v340
    %v645 = vunpack.c.h.b16 %v340
    %v646 = vunpack.c.l.b16 %v341
    %v647 = vunpack.c.h.b16 %v341
    %v648 = vunpack.c.l.b16 %v342
    %v649 = vunpack.c.h.b16 %v342
    %v650 = vunpack.c.l.b16 %v343
    %v651 = vunpack.c.h.b16 %v343
    %v652 = vunpack.c.l.b16 %v344
    %v653 = vunpack.c.h.b16 %v344
    %v654 = vunpack.c.l.b16 %v345
    %v655 = vunpack.c.h.b16 %v345
    %v656 = vunpack.c.l.b16 %v346
    %v657 = vunpack.c.h.b16 %v346
    %v658 = vunpack.c.l.b16 %v347
    %v659 = vunpack.c.h.b16 %v347
    %v660 = vunpack.c.l.b16 %v348
    %v661 = vunpack.c.h.b16 %v348
    %v662 = vunpack.c.l.b16 %v349
    %v663 = vunpack.c.h.b16 %v349
    %v664 = vunpack.c.l.b16 %v350
    %v665 = vunpack.c.h.b16 %v350
    %v666 = vunpack.c.l.b16 %v351
    %v667 = vunpack.c.h.b16 %v351
    %v668 = vunpack.c.l.b16 %v352
    %v669 = vunpack.c.h.b16 %v352
    %v670 = vunpack.c.l.b16 %v353
    %v671 = vunpack.c.h.b16 %v353
    %v672 = vunpack.c.l.b16 %v354
    %v673 = vunpack.c.h.b16 %v354
    %v674 = vunpack.c.l.b16 %v355
    %v675 = vunpack.c.h.b16 %v355
    %v676 = vunpack.c.l.b16 %v356
    %v677 = vunpack.c.h.b16 %v356
    %v678 = vunpack.c.l.b16 %v357
    %v679 = vunpack.c.h.b16 %v357
    %v680 = vunpack.c.l.b16 %v358
    %v681 = vunpack.c.h.b16 %v358
    %v682 = vunpack.c.l.b16 %v359
    %v683 = vunpack.c.h.b16 %v359
    %v684 = vunpack.c.l.b16 %v360
    %v685 = vunpack.c.h.b16 %v360
    %v686 = vunpack.c.l.b16 %v361
    %v687 = vunpack.c.h.b16 %v361
    %v688 = vunpack.c.l.b16 %v362
    %v689 = vunpack.c.h.b16 %v362
    %v690 = vunpack.c.l.b16 %v363
    %v691 = vunpack.c.h.b16 %v363
    %v692 = vunpack.c.l.b16 %v364
    %v693 = vunpack.c.h.b16 %v364
    %v694 = vunpack.c.l.b16 %v365
    %v695 = vunpack.c.h.b16 %v365
    %v696 = vunpack.c.l.b16 %v366
    %v697 = vunpack.c.h.b16 %v366
    %v698 = vunpack.c.l.b16 %v367
    %v699 = vunpack.c.h.b16 %v367
    %v700 = vunpack.c.l.b16 %v368
    %v701 = vunpack.c.h.b16 %v368
    %v702 = vunpack.c.l.b16 %v369
    %v703 = vunpack.c.h.b16 %v369
    %v704 = vunpack.c.l.b16 %v370
    %v705 = vunpack.c.h.b16 %v370
    %v706 = vunpack.c.l.b16 %v371
    %v707 = vunpack.c.h.b16 %v371
    %v708 = vunpack.c.l.b16 %v372
    %v709 = vunpack.c.h.b16 %v372
    %v710 = vunpack.c.l.b16 %v373
    %v711 = vunpack.c.h.b16 %v373
    %v712 = vunpack.c.l.b16 %v374
    %v713 = vunpack.c.h.b16 %v374
    %v714 = vunpack.c.l.b16 %v375
    %v715 = vunpack.c.h.b16 %v375
    %v716 = vunpack.c.l.b16 %v376
    %v717 = vunpack.c.h.b16 %v376
    %v718 = vunpack.c.l.b16 %v377
    %v719 = vunpack.c.h.b16 %v377
    %v720 = vunpack.c.l.b16 %v378
    %v721 = vunpack.c.h.b16 %v378
    %v722 = vunpack.c.l.b16 %v379
    %v723 = vunpack.c.h.b16 %v379
    %v724 = vunpack.c.l.b16 %v380
    %v725 = vunpack.c.h.b16 %v380
    %v726 = vunpack.c.l.b16 %v381
    %v727 = vunpack.c.h.b16 %v381
    %v728 = vunpack.c.l.b16 %v382
    %v729 = vunpack.c.h.b16 %v382
    %v730 = vunpack.c.l.b16 %v383
    %v731 = vunpack.c.h.b16 %v383
    %v732 = vunpack.c.l.b16 %v384
    %v733 = vunpack.c.h.b16 %v384
    %v734 = vunpack.c.l.b16 %v385
    %v735 = vunpack.c.h.b16 %v385
    %v736 = vunpack.c.l.b16 %v386
    %v737 = vunpack.c.h.b16 %v386
    %v738 = vunpack.c.l.b16 %v387
    %v739 = vunpack.c.h.b16 %v387
    %v740 = vunpack.c.l.b16 %v388
    %v741 = vunpack.c.h.b16 %v388
    %v742 = vunpack.c.l.b16 %v389
    %v743 = vunpack.c.h.b16 %v389
    %v744 = vunpack.c.l.b16 %v390
    %v745 = vunpack.c.h.b16 %v390
    %v746 = vunpack.c.l.b16 %v391
    %v747 = vunpack.c.h.b16 %v391
    %v748 = vunpack.c.l.b16 %v392
    %v749 = vunpack.c.h.b16 %v392
    %v750 = vunpack.c.l.b16 %v393
    %v751 = vunpack.c.h.b16 %v393
    %v752 = vunpack.c.l.b16 %v394
    %v753 = vunpack.c.h.b16 %v394
    %v754 = vunpack.c.l.b16 %v395
    %v755 = vunpack.c.h.b16 %v395
    %v756 = vunpack.c.l.b16 %v396
    %v757 = vunpack.c.h.b16 %v396
    %v758 = vunpack.c.l.b16 %v397
    %v759 = vunpack.c.h.b16 %v397
    %v760 = vunpack.c.l.b16 %v398
    %v761 = vunpack.c.h.b16 %v398
    %v762 = vunpack.c.l.b16 %v399
    %v763 = vunpack.c.h.b16 %v399
    %v764 = vunpack.c.l.b16 %v400
    %v765 = vunpack.c.h.b16 %v400
    %v766 = vunpack.c.l.b16 %v401
    %v767 = vunpack.c.h.b16 %v401
    %v768 = vunpack.c.l.b16 %v402
    %v769 = vunpack.c.h.b16 %v402
    %v770 = vunpack.c.l.b16 %v403
    %v771 = vunpack.c.h.b16 %v403
    %v772 = vunpack.c.l.b16 %v404
    %v773 = vunpack.c.h.b16 %v404
    %v774 = vunpack.c.l.b16 %v405
    %v775 = vunpack.c.h.b16 %v405
    %v776 = vunpack.c.l.b16 %v406
    %v777 = vunpack.c.h.b16 %v406
    %v778 = vunpack.c.l.b16 %v407
    %v779 = vunpack.c.h.b16 %v407
    %v780 = vunpack.c.l.b16 %v408
    %v781 = vunpack.c.h.b16 %v408
    %v782 = vunpack.c.l.b16 %v409
    %v783 = vunpack.c.h.b16 %v409
    %v784 = vunpack.c.l.b16 %v410
    %v785 = vunpack.c.h.b16 %v410
    %v786 = vunpack.c.l.b16 %v411
    %v787 = vunpack.c.h.b16 %v411
    %v788 = vunpack.c.l.b16 %v412
    %v789 = vunpack.c.h.b16 %v412
    %v790 = vunpack.c.l.b16 %v413
    %v791 = vunpack.c.h.b16 %v413
    %v792 = vunpack.c.l.b16 %v414
    %v793 = vunpack.c.h.b16 %v414
    %v794 = vunpack.c.l.b16 %v415
    %v795 = vunpack.c.h.b16 %v415
    %v796 = vunpack.c.l.b16 %v416
    %v797 = vunpack.c.h.b16 %v416
    %v798 = vunpack.c.l.b16 %v417
    %v799 = vunpack.c.h.b16 %v417
    %v800 = vunpack.c.l.b16 %v418
    %v801 = vunpack.c.h.b16 %v418
    %v802 = vunpack.c.l.b16 %v419
    %v803 = vunpack.c.h.b16 %v419
    %v804 = vunpack.c.l.b16 %v420
    %v805 = vunpack.c.h.b16 %v420
    %v806 = vunpack.c.l.b16 %v421
    %v807 = vunpack.c.h.b16 %v421
    %v808 = vunpack.c.l.b16 %v422
    %v809 = vunpack.c.h.b16 %v422
    %v810 = vunpack.c.l.b16 %v423
    %v811 = vunpack.c.h.b16 %v423
    %v812 = vunpack.c.l.b16 %v424
    %v813 = vunpack.c.h.b16 %v424
    %v814 = vunpack.c.l.b16 %v425
    %v815 = vunpack.c.h.b16 %v425
    %v816 = vunpack.c.l.b16 %v426
    %v817 = vunpack.c.h.b16 %v426
    %v818 = vunpack.c.l.b16 %v427
    %v819 = vunpack.c.h.b16 %v427
    %v820 = vunpack.c.l.b16 %v428
    %v821 = vunpack.c.h.b16 %v428
    %v822 = vunpack.c.l.b16 %v429
    %v823 = vunpack.c.h.b16 %v429
    %v824 = vpack.c.b16 %v572, %v568
    %v825 = vpack.c.b16 %v573, %v569
    %v826 = vpack.c.b16 %v574, %v570
    %v827 = vpack.c.b16 %v575, %v571
    %v828 = vpack.c.b16 %v580, %v576
    %v829 = vpack.c.b16 %v581, %v577
    %v830 = vpack.c.b16 %v582, %v578
    %v831 = vpack.c.b16 %v583, %v579
    %v832 = vpack.c.b16 %v588, %v584
    %v833 = vpack.c.b16 %v589, %v585
    %v834 = vpack.c.b16 %v590, %v586
    %v835 = vpack.c.b16 %v591, %v587
    %v836 = vpack.c.b16 %v596, %v592
    %v837 = vpack.c.b16 %v597, %v593
    %v838 = vpack.c.b16 %v598, %v594
    %v839 = vpack.c.b16 %v599, %v595
    %v840 = vpack.c.b16 %v604, %v600
    %v841 = vpack.c.b16 %v605, %v601
    %v842 = vpack.c.b16 %v606, %v602
    %v843 = vpack.c.b16 %v607, %v603
    %v844 = vpack.c.b16 %v612, %v608
    %v845 = vpack.c.b16 %v613, %v609
    %v846 = vpack.c.b16 %v614, %v610
    %v847 = vpack.c.b16 %v615, %v611
    %v848 = vpack.c.b16 %v620, %v616
    %v849 = vpack.c.b16 %v621, %v617
    %v850 = vpack.c.b16 %v622, %v618
    %v851 = vpack.c.b16 %v623, %v619
    %v852 = vpack.c.b16 %v628, %v624
    %v853 = vpack.c.b16 %v629, %v625
    %v854 = vpack.c.b16 %v630, %v626
    %v855 = vpack.c.b16 %v631, %v627
    %v856 = vpack.c.b16 %v636, %v632
    %v857 = vpack.c.b16 %v637, %v633
    %v858 = vpack.c.b16 %v638, %v634
    %v859 = vpack.c.b16 %v639, %v635
    %v860 = vpack.c.b16 %v644, %v640
    %v861 = vpack.c.b16 %v645, %v641
    %v862 = vpack.c.b16 %v646, %v642
    %v863 = vpack.c.b16 %v647, %v643
    %v864 = vpack.c.b16 %v652, %v648
    %v865 = vpack.c.b16 %v653, %v649
    %v866 = vpack.c.b16 %v654, %v650
    %v867 = vpack.c.b16 %v655, %v651
    %v868 = vpack.c.b16 %v660, %v656
    %v869 = vpack.c.b16 %v661, %v657
    %v870 = vpack.c.b16 %v662, %v658
    %v871 = vpack.c.b16 %v663, %v659
    %v872 = vpack.c.b16 %v668, %v664
    %v873 = vpack.c.b16 %v669, %v665
    %v874 = vpack.c.b16 %v670, %v666
    %v875 = vpack.c.b16 %v671, %v667
    %v876 = vpack.c.b16 %v676, %v672
    %v877 = vpack.c.b16 %v677, %v673
    %v878 = vpack.c.b16 %v678, %v674
    %v879 = vpack.c.b16 %v679, %v675
    %v880 = vpack.c.b16 %v684, %v680
    %v881 = vpack.c.b16 %v685, %v681
    %v882 = vpack.c.b16 %v686, %v682
    %v883 = vpack.c.b16 %v687, %v683
    %v884 = vpack.c.b16 %v692, %v688
    %v885 = vpack.c.b16 %v693, %v689
    %v886 = vpack.c.b16 %v694, %v690
    %v887 = vpack.c.b16 %v695, %v691
    %v888 = vpack.c.b16 %v700, %v696
    %v889 = vpack.c.b16 %v701, %v697
    %v890 = vpack.c.b16 %v702, %v698
    %v891 = vpack.c.b16 %v703, %v699
    %v892 = vpack.c.b16 %v708, %v704
    %v893 = vpack.c.b16 %v709, %v705
    %v894 = vpack.c.b16 %v710, %v706
    %v895 = vpack.c.b16 %v711, %v707
    %v896 = vpack.c.b16 %v716, %v712
    %v897 = vpack.c.b16 %v717, %v713
    %v898 = vpack.c.b16 %v718, %v714
    %v899 = vpack.c.b16 %v719, %v715
    %v900 = vpack.c.b16 %v724, %v720
    %v901 = vpack.c.b16 %v725, %v721
    %v902 = vpack.c.b16 %v726, %v722
    %v903 = vpack.c.b16 %v727, %v723
    %v904 = vpack.c.b16 %v732, %v728
    %v905 = vpack.c.b16 %v733, %v729
    %v906 = vpack.c.b16 %v734, %v730
    %v907 = vpack.c.b16 %v735, %v731
    %v908 = vpack.c.b16 %v740, %v736
    %v909 = vpack.c.b16 %v741, %v737
    %v910 = vpack.c.b16 %v742, %v738
    %v911 = vpack.c.b16 %v743, %v739
    %v912 = vpack.c.b16 %v748, %v744
    %v913 = vpack.c.b16 %v749, %v745
    %v914 = vpack.c.b16 %v750, %v746
    %v915 = vpack.c.b16 %v751, %v747
    %v916 = vpack.c.b16 %v756, %v752
    %v917 = vpack.c.b16 %v757, %v753
    %v918 = vpack.c.b16 %v758, %v754
    %v919 = vpack.c.b16 %v759, %v755
    %v920 = vpack.c.b16 %v764, %v760
    %v921 = vpack.c.b16 %v765, %v761
    %v922 = vpack.c.b16 %v766, %v762
    %v923 = vpack.c.b16 %v767, %v763
    %v924 = vpack.c.b16 %v772, %v768
    %v925 = vpack.c.b16 %v773, %v769
    %v926 = vpack.c.b16 %v774, %v770
    %v927 = vpack.c.b16 %v775, %v771
    %v928 = vpack.c.b16 %v780, %v776
    %v929 = vpack.c.b16 %v781, %v777
    %v930 = vpack.c.b16 %v782, %v778
    %v931 = vpack.c.b16 %v783, %v779
    %v932 = vpack.c.b16 %v788, %v784
    %v933 = vpack.c.b16 %v789, %v785
    %v934 = vpack.c.b16 %v790, %v786
    %v935 = vpack.c.b16 %v791, %v787
    %v936 = vpack.c.b16 %v796, %v792
    %v937 = vpack.c.b16 %v797, %v793
    %v938 = vpack.c.b16 %v798, %v794
    %v939 = vpack.c.b16 %v799, %v795
    %v940 = vpack.c.b16 %v804, %v800
    %v941 = vpack.c.b16 %v805, %v801
    %v942 = vpack.c.b16 %v806, %v802
    %v943 = vpack.c.b16 %v807, %v803
    %v944 = vpack.c.b16 %v812, %v808
    %v945 = vpack.c.b16 %v813, %v809
    %v946 = vpack.c.b16 %v814, %v810
    %v947 = vpack.c.b16 %v815, %v811
    %v948 = vpack.c.b16 %v820, %v816
    %v949 = vpack.c.b16 %v821, %v817
    %v950 = vpack.c.b16 %v822, %v818
    %v951 = vpack.c.b16 %v823, %v819
    %1080 = vmatpush.bf16.msra.mxu0 %v852
    %1081 = vmatpush.bf16.msra.mxu0 %v848
    %1082 = vmatpush.bf16.msra.mxu0 %v844
    %1083 = vmatpush.bf16.msra.mxu0 %v840
    %1084 = vmatpush.bf16.msra.mxu0 %v836
    %1085 = vmatpush.bf16.msra.mxu0 %v832
    %1086 = vmatpush.bf16.msra.mxu0 %v828
    %1087 = vmatpush.bf16.msra.mxu0 %v824
    %1088 = vmatmul.bf16.gmra.mxu0 %v298
    %v1089 = vpop.f32.mrf.mxu0
    %v1090 = vadd.f32 %v432, %v1089
    %v1091 = vpop.f32.mrf.mxu0
    %v1092 = vadd.f32 %v432, %v1091
    %1093 = vdwg.mxu0
    %1094 = vmatpush.bf16.msra.mxu0 %v884
    %1095 = vmatpush.bf16.msra.mxu0 %v880
    %1096 = vmatpush.bf16.msra.mxu0 %v876
    %1097 = vmatpush.bf16.msra.mxu0 %v872
    %1098 = vmatpush.bf16.msra.mxu0 %v868
    %1099 = vmatpush.bf16.msra.mxu0 %v864
    %1100 = vmatpush.bf16.msra.mxu0 %v860
    %1101 = vmatpush.bf16.msra.mxu0 %v856
    %1102 = vmatmul.bf16.gmra.mxu0 %v299
    %v1103 = vpop.f32.mrf.mxu0
    %v1104 = vadd.f32 %v1090, %v1103
    %v1105 = vpop.f32.mrf.mxu0
    %v1106 = vadd.f32 %v1092, %v1105
    %1107 = vdwg.mxu0
    %1108 = vmatpush.bf16.msra.mxu0 %v916
    %1109 = vmatpush.bf16.msra.mxu0 %v912
    %1110 = vmatpush.bf16.msra.mxu0 %v908
    %1111 = vmatpush.bf16.msra.mxu0 %v904
    %1112 = vmatpush.bf16.msra.mxu0 %v900
    %1113 = vmatpush.bf16.msra.mxu0 %v896
    %1114 = vmatpush.bf16.msra.mxu0 %v892
    %1115 = vmatpush.bf16.msra.mxu0 %v888
    %1116 = vmatmul.bf16.gmra.mxu0 %v300
    %v1117 = vpop.f32.mrf.mxu0
    %v1118 = vadd.f32 %v1104, %v1117
    %v1119 = vpop.f32.mrf.mxu0
    %v1120 = vadd.f32 %v1106, %v1119
    %1121 = vdwg.mxu0
    %1122 = vmatpush.bf16.msra.mxu0 %v948
    %1123 = vmatpush.bf16.msra.mxu0 %v944
    %1124 = vmatpush.bf16.msra.mxu0 %v940
    %1125 = vmatpush.bf16.msra.mxu0 %v936
    %1126 = vmatpush.bf16.msra.mxu0 %v932
    %1127 = vmatpush.bf16.msra.mxu0 %v928
    %1128 = vmatpush.bf16.msra.mxu0 %v924
    %1129 = vmatpush.bf16.msra.mxu0 %v920
    %1130 = vmatmul.bf16.gmra.mxu0 %v301
    %v1131 = vpop.f32.mrf.mxu0
    %v1132 = vadd.f32 %v1118, %v1131
    %v1133 = vpop.f32.mrf.mxu0
    %v1134 = vadd.f32 %v1120, %v1133
    %1135 = vdwg.mxu0
    %1136 = vmatpush.bf16.msra.mxu0 %v853
    %1137 = vmatpush.bf16.msra.mxu0 %v849
    %1138 = vmatpush.bf16.msra.mxu0 %v845
    %1139 = vmatpush.bf16.msra.mxu0 %v841
    %1140 = vmatpush.bf16.msra.mxu0 %v837
    %1141 = vmatpush.bf16.msra.mxu0 %v833
    %1142 = vmatpush.bf16.msra.mxu0 %v829
    %1143 = vmatpush.bf16.msra.mxu0 %v825
    %1144 = vmatmul.bf16.gmra.mxu0 %v298
    %v1145 = vpop.f32.mrf.mxu0
    %v1146 = vadd.f32 %v433, %v1145
    %v1147 = vpop.f32.mrf.mxu0
    %v1148 = vadd.f32 %v433, %v1147
    %1149 = vdwg.mxu0
    %1150 = vmatpush.bf16.msra.mxu0 %v885
    %1151 = vmatpush.bf16.msra.mxu0 %v881
    %1152 = vmatpush.bf16.msra.mxu0 %v877
    %1153 = vmatpush.bf16.msra.mxu0 %v873
    %1154 = vmatpush.bf16.msra.mxu0 %v869
    %1155 = vmatpush.bf16.msra.mxu0 %v865
    %1156 = vmatpush.bf16.msra.mxu0 %v861
    %1157 = vmatpush.bf16.msra.mxu0 %v857
    %1158 = vmatmul.bf16.gmra.mxu0 %v299
    %v1159 = vpop.f32.mrf.mxu0
    %v1160 = vadd.f32 %v1146, %v1159
    %v1161 = vpop.f32.mrf.mxu0
    %v1162 = vadd.f32 %v1148, %v1161
    %1163 = vdwg.mxu0
    %1164 = vmatpush.bf16.msra.mxu0 %v917
    %1165 = vmatpush.bf16.msra.mxu0 %v913
    %1166 = vmatpush.bf16.msra.mxu0 %v909
    %1167 = vmatpush.bf16.msra.mxu0 %v905
    %1168 = vmatpush.bf16.msra.mxu0 %v901
    %1169 = vmatpush.bf16.msra.mxu0 %v897
    %1170 = vmatpush.bf16.msra.mxu0 %v893
    %1171 = vmatpush.bf16.msra.mxu0 %v889
    %1172 = vmatmul.bf16.gmra.mxu0 %v300
    %v1173 = vpop.f32.mrf.mxu0
    %v1174 = vadd.f32 %v1160, %v1173
    %v1175 = vpop.f32.mrf.mxu0
    %v1176 = vadd.f32 %v1162, %v1175
    %1177 = vdwg.mxu0
    %1178 = vmatpush.bf16.msra.mxu0 %v949
    %1179 = vmatpush.bf16.msra.mxu0 %v945
    %1180 = vmatpush.bf16.msra.mxu0 %v941
    %1181 = vmatpush.bf16.msra.mxu0 %v937
    %1182 = vmatpush.bf16.msra.mxu0 %v933
    %1183 = vmatpush.bf16.msra.mxu0 %v929
    %1184 = vmatpush.bf16.msra.mxu0 %v925
    %1185 = vmatpush.bf16.msra.mxu0 %v921
    %1186 = vmatmul.bf16.gmra.mxu0 %v301
    %v1187 = vpop.f32.mrf.mxu0
    %v1188 = vadd.f32 %v1174, %v1187
    %v1189 = vpop.f32.mrf.mxu0
    %v1190 = vadd.f32 %v1176, %v1189
    %1191 = vdwg.mxu0
    %1192 = vmatpush.bf16.msra.mxu0 %v854
    %1193 = vmatpush.bf16.msra.mxu0 %v850
    %1194 = vmatpush.bf16.msra.mxu0 %v846
    %1195 = vmatpush.bf16.msra.mxu0 %v842
    %1196 = vmatpush.bf16.msra.mxu0 %v838
    %1197 = vmatpush.bf16.msra.mxu0 %v834
    %1198 = vmatpush.bf16.msra.mxu0 %v830
    %1199 = vmatpush.bf16.msra.mxu0 %v826
    %1200 = vmatmul.bf16.gmra.mxu0 %v298
    %v1201 = vpop.f32.mrf.mxu0
    %v1202 = vadd.f32 %v434, %v1201
    %v1203 = vpop.f32.mrf.mxu0
    %v1204 = vadd.f32 %v434, %v1203
    %1205 = vdwg.mxu0
    %1206 = vmatpush.bf16.msra.mxu0 %v886
    %1207 = vmatpush.bf16.msra.mxu0 %v882
    %1208 = vmatpush.bf16.msra.mxu0 %v878
    %1209 = vmatpush.bf16.msra.mxu0 %v874
    %1210 = vmatpush.bf16.msra.mxu0 %v870
    %1211 = vmatpush.bf16.msra.mxu0 %v866
    %1212 = vmatpush.bf16.msra.mxu0 %v862
    %1213 = vmatpush.bf16.msra.mxu0 %v858
    %1214 = vmatmul.bf16.gmra.mxu0 %v299
    %v1215 = vpop.f32.mrf.mxu0
    %v1216 = vadd.f32 %v1202, %v1215
    %v1217 = vpop.f32.mrf.mxu0
    %v1218 = vadd.f32 %v1204, %v1217
    %1219 = vdwg.mxu0
    %1220 = vmatpush.bf16.msra.mxu0 %v918
    %1221 = vmatpush.bf16.msra.mxu0 %v914
    %1222 = vmatpush.bf16.msra.mxu0 %v910
    %1223 = vmatpush.bf16.msra.mxu0 %v906
    %1224 = vmatpush.bf16.msra.mxu0 %v902
    %1225 = vmatpush.bf16.msra.mxu0 %v898
    %1226 = vmatpush.bf16.msra.mxu0 %v894
    %1227 = vmatpush.bf16.msra.mxu0 %v890
    %1228 = vmatmul.bf16.gmra.mxu0 %v300
    %v1229 = vpop.f32.mrf.mxu0
    %v1230 = vadd.f32 %v1216, %v1229
    %v1231 = vpop.f32.mrf.mxu0
    %v1232 = vadd.f32 %v1218, %v1231
    %1233 = vdwg.mxu0
    %1234 = vmatpush.bf16.msra.mxu0 %v950
    %1235 = vmatpush.bf16.msra.mxu0 %v946
    %1236 = vmatpush.bf16.msra.mxu0 %v942
    %1237 = vmatpush.bf16.msra.mxu0 %v938
    %1238 = vmatpush.bf16.msra.mxu0 %v934
    %1239 = vmatpush.bf16.msra.mxu0 %v930
    %1240 = vmatpush.bf16.msra.mxu0 %v926
    %1241 = vmatpush.bf16.msra.mxu0 %v922
    %1242 = vmatmul.bf16.gmra.mxu0 %v301
    %v1243 = vpop.f32.mrf.mxu0
    %v1244 = vadd.f32 %v1230, %v1243
    %v1245 = vpop.f32.mrf.mxu0
    %v1246 = vadd.f32 %v1232, %v1245
    %1247 = vdwg.mxu0
    %1248 = vmatpush.bf16.msra.mxu0 %v855
    %1249 = vmatpush.bf16.msra.mxu0 %v851
    %1250 = vmatpush.bf16.msra.mxu0 %v847
    %1251 = vmatpush.bf16.msra.mxu0 %v843
    %1252 = vmatpush.bf16.msra.mxu0 %v839
    %1253 = vmatpush.bf16.msra.mxu0 %v835
    %1254 = vmatpush.bf16.msra.mxu0 %v831
    %1255 = vmatpush.bf16.msra.mxu0 %v827
    %1256 = vmatmul.bf16.gmra.mxu0 %v298
    %v1257 = vpop.f32.mrf.mxu0
    %v1258 = vadd.f32 %v435, %v1257
    %v1259 = vpop.f32.mrf.mxu0
    %v1260 = vadd.f32 %v435, %v1259
    %1261 = vdwg.mxu0
    %1262 = vmatpush.bf16.msra.mxu0 %v887
    %1263 = vmatpush.bf16.msra.mxu0 %v883
    %1264 = vmatpush.bf16.msra.mxu0 %v879
    %1265 = vmatpush.bf16.msra.mxu0 %v875
    %1266 = vmatpush.bf16.msra.mxu0 %v871
    %1267 = vmatpush.bf16.msra.mxu0 %v867
    %1268 = vmatpush.bf16.msra.mxu0 %v863
    %1269 = vmatpush.bf16.msra.mxu0 %v859
    %1270 = vmatmul.bf16.gmra.mxu0 %v299
    %v1271 = vpop.f32.mrf.mxu0
    %v1272 = vadd.f32 %v1258, %v1271
    %v1273 = vpop.f32.mrf.mxu0
    %v1274 = vadd.f32 %v1260, %v1273
    %1275 = vdwg.mxu0
    %1276 = vmatpush.bf16.msra.mxu0 %v919
    %1277 = vmatpush.bf16.msra.mxu0 %v915
    %1278 = vmatpush.bf16.msra.mxu0 %v911
    %1279 = vmatpush.bf16.msra.mxu0 %v907
    %1280 = vmatpush.bf16.msra.mxu0 %v903
    %1281 = vmatpush.bf16.msra.mxu0 %v899
    %1282 = vmatpush.bf16.msra.mxu0 %v895
    %1283 = vmatpush.bf16.msra.mxu0 %v891
    %1284 = vmatmul.bf16.gmra.mxu0 %v300
    %v1285 = vpop.f32.mrf.mxu0
    %v1286 = vadd.f32 %v1272, %v1285
    %v1287 = vpop.f32.mrf.mxu0
    %v1288 = vadd.f32 %v1274, %v1287
    %1289 = vdwg.mxu0
    %1290 = vmatpush.bf16.msra.mxu0 %v951
    %1291 = vmatpush.bf16.msra.mxu0 %v947
    %1292 = vmatpush.bf16.msra.mxu0 %v943
    %1293 = vmatpush.bf16.msra.mxu0 %v939
    %1294 = vmatpush.bf16.msra.mxu0 %v935
    %1295 = vmatpush.bf16.msra.mxu0 %v931
    %1296 = vmatpush.bf16.msra.mxu0 %v927
    %1297 = vmatpush.bf16.msra.mxu0 %v923
    %1298 = vmatmul.bf16.gmra.mxu0 %v301
    %v1299 = vpop.f32.mrf.mxu0
    %v1300 = vadd.f32 %v1286, %v1299
    %v1301 = vpop.f32.mrf.mxu0
    %v1302 = vadd.f32 %v1288, %v1301
    %1303 = vdwg.mxu0
    %v1304 = vmax.f32 %v1132, 0.0
    %v1305 = vmax.f32 %v1188, 0.0
    %v1306 = vmax.f32 %v1244, 0.0
    %v1307 = vmax.f32 %v1300, 0.0
    %v1308 = vmax.f32 %v1134, 0.0
    %v1309 = vmax.f32 %v1190, 0.0
    %v1310 = vmax.f32 %v1246, 0.0
    %v1311 = vmax.f32 %v1302, 0.0
    %v1312 = vpack.c.bf16 %v1308, %v1304
    %v1313 = vpack.c.bf16 %v1309, %v1305
    %v1314 = vpack.c.bf16 %v1310, %v1306
    %v1315 = vpack.c.bf16 %v1311, %v1307
    %v1316 = vld [vmem:[#allocation7] sm:$0xff]
    %v1317 = vld [vmem:[#allocation7 + $0x8] sm:$0xff]
    %v1318 = vld [vmem:[#allocation7 + $0x10] sm:$0xff]
    %v1319 = vld [vmem:[#allocation7 + $0x18] sm:$0xff]
    %v1320 = vld [vmem:[#allocation7 + $0x20] sm:$0xff]
    %v1321 = vld [vmem:[#allocation7 + $0x28] sm:$0xff]
    %v1322 = vld [vmem:[#allocation7 + $0x30] sm:$0xff]
    %v1323 = vld [vmem:[#allocation7 + $0x38] sm:$0xff]
    %v1324 = vld [vmem:[#allocation7 + $0x40] sm:$0xff]
    %v1325 = vld [vmem:[#allocation7 + $0x48] sm:$0xff]
    %v1326 = vld [vmem:[#allocation7 + $0x50] sm:$0xff]
    %v1327 = vld [vmem:[#allocation7 + $0x58] sm:$0xff]
    %v1328 = vld [vmem:[#allocation7 + $0x60] sm:$0xff]
    %v1329 = vld [vmem:[#allocation7 + $0x68] sm:$0xff]
    %v1330 = vld [vmem:[#allocation7 + $0x70] sm:$0xff]
    %v1331 = vld [vmem:[#allocation7 + $0x78] sm:$0xff]
    %v1332 = vld [vmem:[#allocation7 + $0x80] sm:$0xff]
    %v1333 = vld [vmem:[#allocation7 + $0x88] sm:$0xff]
    %v1334 = vld [vmem:[#allocation7 + $0x90] sm:$0xff]
    %v1335 = vld [vmem:[#allocation7 + $0x98] sm:$0xff]
    %v1336 = vld [vmem:[#allocation7 + $0xa0] sm:$0xff]
    %v1337 = vld [vmem:[#allocation7 + $0xa8] sm:$0xff]
    %v1338 = vld [vmem:[#allocation7 + $0xb0] sm:$0xff]
    %v1339 = vld [vmem:[#allocation7 + $0xb8] sm:$0xff]
    %v1340 = vld [vmem:[#allocation7 + $0xc0] sm:$0xff]
    %v1341 = vld [vmem:[#allocation7 + $0xc8] sm:$0xff]
    %v1342 = vld [vmem:[#allocation7 + $0xd0] sm:$0xff]
    %v1343 = vld [vmem:[#allocation7 + $0xd8] sm:$0xff]
    %v1344 = vld [vmem:[#allocation7 + $0xe0] sm:$0xff]
    %v1345 = vld [vmem:[#allocation7 + $0xe8] sm:$0xff]
    %v1346 = vld [vmem:[#allocation7 + $0xf0] sm:$0xff]
    %v1347 = vld [vmem:[#allocation7 + $0xf8] sm:$0xff]
    %v1348 = vld [vmem:[#allocation7 + $0x100] sm:$0xff]
    %v1349 = vld [vmem:[#allocation7 + $0x108] sm:$0xff]
    %v1350 = vld [vmem:[#allocation7 + $0x110] sm:$0xff]
    %v1351 = vld [vmem:[#allocation7 + $0x118] sm:$0xff]
    %v1352 = vld [vmem:[#allocation7 + $0x120] sm:$0xff]
    %v1353 = vld [vmem:[#allocation7 + $0x128] sm:$0xff]
    %v1354 = vld [vmem:[#allocation7 + $0x130] sm:$0xff]
    %v1355 = vld [vmem:[#allocation7 + $0x138] sm:$0xff]
    %v1356 = vld [vmem:[#allocation7 + $0x140] sm:$0xff]
    %v1357 = vld [vmem:[#allocation7 + $0x148] sm:$0xff]
    %v1358 = vld [vmem:[#allocation7 + $0x150] sm:$0xff]
    %v1359 = vld [vmem:[#allocation7 + $0x158] sm:$0xff]
    %v1360 = vld [vmem:[#allocation7 + $0x160] sm:$0xff]
    %v1361 = vld [vmem:[#allocation7 + $0x168] sm:$0xff]
    %v1362 = vld [vmem:[#allocation7 + $0x170] sm:$0xff]
    %v1363 = vld [vmem:[#allocation7 + $0x178] sm:$0xff]
    %v1364 = vld [vmem:[#allocation7 + $0x180] sm:$0xff]
    %v1365 = vld [vmem:[#allocation7 + $0x188] sm:$0xff]
    %v1366 = vld [vmem:[#allocation7 + $0x190] sm:$0xff]
    %v1367 = vld [vmem:[#allocation7 + $0x198] sm:$0xff]
    %v1368 = vld [vmem:[#allocation7 + $0x1a0] sm:$0xff]
    %v1369 = vld [vmem:[#allocation7 + $0x1a8] sm:$0xff]
    %v1370 = vld [vmem:[#allocation7 + $0x1b0] sm:$0xff]
    %v1371 = vld [vmem:[#allocation7 + $0x1b8] sm:$0xff]
    %v1372 = vld [vmem:[#allocation7 + $0x1c0] sm:$0xff]
    %v1373 = vld [vmem:[#allocation7 + $0x1c8] sm:$0xff]
    %v1374 = vld [vmem:[#allocation7 + $0x1d0] sm:$0xff]
    %v1375 = vld [vmem:[#allocation7 + $0x1d8] sm:$0xff]
    %v1376 = vld [vmem:[#allocation7 + $0x1e0] sm:$0xff]
    %v1377 = vld [vmem:[#allocation7 + $0x1e8] sm:$0xff]
    %v1378 = vld [vmem:[#allocation7 + $0x1f0] sm:$0xff]
    %v1379 = vld [vmem:[#allocation7 + $0x1f8] sm:$0xff]
    %v1380 = vld [vmem:[#allocation7 + $0x200] sm:$0xff]
    %v1381 = vld [vmem:[#allocation7 + $0x208] sm:$0xff]
    %v1382 = vld [vmem:[#allocation7 + $0x210] sm:$0xff]
    %v1383 = vld [vmem:[#allocation7 + $0x218] sm:$0xff]
    %v1384 = vld [vmem:[#allocation7 + $0x220] sm:$0xff]
    %v1385 = vld [vmem:[#allocation7 + $0x228] sm:$0xff]
    %v1386 = vld [vmem:[#allocation7 + $0x230] sm:$0xff]
    %v1387 = vld [vmem:[#allocation7 + $0x238] sm:$0xff]
    %v1388 = vld [vmem:[#allocation7 + $0x240] sm:$0xff]
    %v1389 = vld [vmem:[#allocation7 + $0x248] sm:$0xff]
    %v1390 = vld [vmem:[#allocation7 + $0x250] sm:$0xff]
    %v1391 = vld [vmem:[#allocation7 + $0x258] sm:$0xff]
    %v1392 = vld [vmem:[#allocation7 + $0x260] sm:$0xff]
    %v1393 = vld [vmem:[#allocation7 + $0x268] sm:$0xff]
    %v1394 = vld [vmem:[#allocation7 + $0x270] sm:$0xff]
    %v1395 = vld [vmem:[#allocation7 + $0x278] sm:$0xff]
    %v1396 = vld [vmem:[#allocation7 + $0x280] sm:$0xff]
    %v1397 = vld [vmem:[#allocation7 + $0x288] sm:$0xff]
    %v1398 = vld [vmem:[#allocation7 + $0x290] sm:$0xff]
    %v1399 = vld [vmem:[#allocation7 + $0x298] sm:$0xff]
    %v1400 = vld [vmem:[#allocation7 + $0x2a0] sm:$0xff]
    %v1401 = vld [vmem:[#allocation7 + $0x2a8] sm:$0xff]
    %v1402 = vld [vmem:[#allocation7 + $0x2b0] sm:$0xff]
    %v1403 = vld [vmem:[#allocation7 + $0x2b8] sm:$0xff]
    %v1404 = vld [vmem:[#allocation7 + $0x2c0] sm:$0xff]
    %v1405 = vld [vmem:[#allocation7 + $0x2c8] sm:$0xff]
    %v1406 = vld [vmem:[#allocation7 + $0x2d0] sm:$0xff]
    %v1407 = vld [vmem:[#allocation7 + $0x2d8] sm:$0xff]
    %v1408 = vld [vmem:[#allocation7 + $0x2e0] sm:$0xff]
    %v1409 = vld [vmem:[#allocation7 + $0x2e8] sm:$0xff]
    %v1410 = vld [vmem:[#allocation7 + $0x2f0] sm:$0xff]
    %v1411 = vld [vmem:[#allocation7 + $0x2f8] sm:$0xff]
    %v1412 = vld [vmem:[#allocation7 + $0x300] sm:$0xff]
    %v1413 = vld [vmem:[#allocation7 + $0x308] sm:$0xff]
    %v1414 = vld [vmem:[#allocation7 + $0x310] sm:$0xff]
    %v1415 = vld [vmem:[#allocation7 + $0x318] sm:$0xff]
    %v1416 = vld [vmem:[#allocation7 + $0x320] sm:$0xff]
    %v1417 = vld [vmem:[#allocation7 + $0x328] sm:$0xff]
    %v1418 = vld [vmem:[#allocation7 + $0x330] sm:$0xff]
    %v1419 = vld [vmem:[#allocation7 + $0x338] sm:$0xff]
    %v1420 = vld [vmem:[#allocation7 + $0x340] sm:$0xff]
    %v1421 = vld [vmem:[#allocation7 + $0x348] sm:$0xff]
    %v1422 = vld [vmem:[#allocation7 + $0x350] sm:$0xff]
    %v1423 = vld [vmem:[#allocation7 + $0x358] sm:$0xff]
    %v1424 = vld [vmem:[#allocation7 + $0x360] sm:$0xff]
    %v1425 = vld [vmem:[#allocation7 + $0x368] sm:$0xff]
    %v1426 = vld [vmem:[#allocation7 + $0x370] sm:$0xff]
    %v1427 = vld [vmem:[#allocation7 + $0x378] sm:$0xff]
    %v1428 = vld [vmem:[#allocation7 + $0x380] sm:$0xff]
    %v1429 = vld [vmem:[#allocation7 + $0x388] sm:$0xff]
    %v1430 = vld [vmem:[#allocation7 + $0x390] sm:$0xff]
    %v1431 = vld [vmem:[#allocation7 + $0x398] sm:$0xff]
    %v1432 = vld [vmem:[#allocation7 + $0x3a0] sm:$0xff]
    %v1433 = vld [vmem:[#allocation7 + $0x3a8] sm:$0xff]
    %v1434 = vld [vmem:[#allocation7 + $0x3b0] sm:$0xff]
    %v1435 = vld [vmem:[#allocation7 + $0x3b8] sm:$0xff]
    %v1436 = vld [vmem:[#allocation7 + $0x3c0] sm:$0xff]
    %v1437 = vld [vmem:[#allocation7 + $0x3c8] sm:$0xff]
    %v1438 = vld [vmem:[#allocation7 + $0x3d0] sm:$0xff]
    %v1439 = vld [vmem:[#allocation7 + $0x3d8] sm:$0xff]
    %v1440 = vld [vmem:[#allocation7 + $0x3e0] sm:$0xff]
    %v1441 = vld [vmem:[#allocation7 + $0x3e8] sm:$0xff]
    %v1442 = vld [vmem:[#allocation7 + $0x3f0] sm:$0xff]
    %v1443 = vld [vmem:[#allocation7 + $0x3f8] sm:$0xff]
    %v1444 = vld [vmem:[%s6] sm:$0xf]
    %v1446 = vperm.slane %v1444, 0
    %v1447 = vperm.slane %v1444, 1
    %v1448 = vperm.slane %v1444, 2
    %v1449 = vperm.slane %v1444, 3
    %v1582 = vunpack.c.l.b16 %v1316
    %v1583 = vunpack.c.h.b16 %v1316
    %v1584 = vunpack.c.l.b16 %v1317
    %v1585 = vunpack.c.h.b16 %v1317
    %v1586 = vunpack.c.l.b16 %v1318
    %v1587 = vunpack.c.h.b16 %v1318
    %v1588 = vunpack.c.l.b16 %v1319
    %v1589 = vunpack.c.h.b16 %v1319
    %v1590 = vunpack.c.l.b16 %v1320
    %v1591 = vunpack.c.h.b16 %v1320
    %v1592 = vunpack.c.l.b16 %v1321
    %v1593 = vunpack.c.h.b16 %v1321
    %v1594 = vunpack.c.l.b16 %v1322
    %v1595 = vunpack.c.h.b16 %v1322
    %v1596 = vunpack.c.l.b16 %v1323
    %v1597 = vunpack.c.h.b16 %v1323
    %v1598 = vunpack.c.l.b16 %v1324
    %v1599 = vunpack.c.h.b16 %v1324
    %v1600 = vunpack.c.l.b16 %v1325
    %v1601 = vunpack.c.h.b16 %v1325
    %v1602 = vunpack.c.l.b16 %v1326
    %v1603 = vunpack.c.h.b16 %v1326
    %v1604 = vunpack.c.l.b16 %v1327
    %v1605 = vunpack.c.h.b16 %v1327
    %v1606 = vunpack.c.l.b16 %v1328
    %v1607 = vunpack.c.h.b16 %v1328
    %v1608 = vunpack.c.l.b16 %v1329
    %v1609 = vunpack.c.h.b16 %v1329
    %v1610 = vunpack.c.l.b16 %v1330
    %v1611 = vunpack.c.h.b16 %v1330
    %v1612 = vunpack.c.l.b16 %v1331
    %v1613 = vunpack.c.h.b16 %v1331
    %v1614 = vunpack.c.l.b16 %v1332
    %v1615 = vunpack.c.h.b16 %v1332
    %v1616 = vunpack.c.l.b16 %v1333
    %v1617 = vunpack.c.h.b16 %v1333
    %v1618 = vunpack.c.l.b16 %v1334
    %v1619 = vunpack.c.h.b16 %v1334
    %v1620 = vunpack.c.l.b16 %v1335
    %v1621 = vunpack.c.h.b16 %v1335
    %v1622 = vunpack.c.l.b16 %v1336
    %v1623 = vunpack.c.h.b16 %v1336
    %v1624 = vunpack.c.l.b16 %v1337
    %v1625 = vunpack.c.h.b16 %v1337
    %v1626 = vunpack.c.l.b16 %v1338
    %v1627 = vunpack.c.h.b16 %v1338
    %v1628 = vunpack.c.l.b16 %v1339
    %v1629 = vunpack.c.h.b16 %v1339
    %v1630 = vunpack.c.l.b16 %v1340
    %v1631 = vunpack.c.h.b16 %v1340
    %v1632 = vunpack.c.l.b16 %v1341
    %v1633 = vunpack.c.h.b16 %v1341
    %v1634 = vunpack.c.l.b16 %v1342
    %v1635 = vunpack.c.h.b16 %v1342
    %v1636 = vunpack.c.l.b16 %v1343
    %v1637 = vunpack.c.h.b16 %v1343
    %v1638 = vunpack.c.l.b16 %v1344
    %v1639 = vunpack.c.h.b16 %v1344
    %v1640 = vunpack.c.l.b16 %v1345
    %v1641 = vunpack.c.h.b16 %v1345
    %v1642 = vunpack.c.l.b16 %v1346
    %v1643 = vunpack.c.h.b16 %v1346
    %v1644 = vunpack.c.l.b16 %v1347
    %v1645 = vunpack.c.h.b16 %v1347
    %v1646 = vunpack.c.l.b16 %v1348
    %v1647 = vunpack.c.h.b16 %v1348
    %v1648 = vunpack.c.l.b16 %v1349
    %v1649 = vunpack.c.h.b16 %v1349
    %v1650 = vunpack.c.l.b16 %v1350
    %v1651 = vunpack.c.h.b16 %v1350
    %v1652 = vunpack.c.l.b16 %v1351
    %v1653 = vunpack.c.h.b16 %v1351
    %v1654 = vunpack.c.l.b16 %v1352
    %v1655 = vunpack.c.h.b16 %v1352
    %v1656 = vunpack.c.l.b16 %v1353
    %v1657 = vunpack.c.h.b16 %v1353
    %v1658 = vunpack.c.l.b16 %v1354
    %v1659 = vunpack.c.h.b16 %v1354
    %v1660 = vunpack.c.l.b16 %v1355
    %v1661 = vunpack.c.h.b16 %v1355
    %v1662 = vunpack.c.l.b16 %v1356
    %v1663 = vunpack.c.h.b16 %v1356
    %v1664 = vunpack.c.l.b16 %v1357
    %v1665 = vunpack.c.h.b16 %v1357
    %v1666 = vunpack.c.l.b16 %v1358
    %v1667 = vunpack.c.h.b16 %v1358
    %v1668 = vunpack.c.l.b16 %v1359
    %v1669 = vunpack.c.h.b16 %v1359
    %v1670 = vunpack.c.l.b16 %v1360
    %v1671 = vunpack.c.h.b16 %v1360
    %v1672 = vunpack.c.l.b16 %v1361
    %v1673 = vunpack.c.h.b16 %v1361
    %v1674 = vunpack.c.l.b16 %v1362
    %v1675 = vunpack.c.h.b16 %v1362
    %v1676 = vunpack.c.l.b16 %v1363
    %v1677 = vunpack.c.h.b16 %v1363
    %v1678 = vunpack.c.l.b16 %v1364
    %v1679 = vunpack.c.h.b16 %v1364
    %v1680 = vunpack.c.l.b16 %v1365
    %v1681 = vunpack.c.h.b16 %v1365
    %v1682 = vunpack.c.l.b16 %v1366
    %v1683 = vunpack.c.h.b16 %v1366
    %v1684 = vunpack.c.l.b16 %v1367
    %v1685 = vunpack.c.h.b16 %v1367
    %v1686 = vunpack.c.l.b16 %v1368
    %v1687 = vunpack.c.h.b16 %v1368
    %v1688 = vunpack.c.l.b16 %v1369
    %v1689 = vunpack.c.h.b16 %v1369
    %v1690 = vunpack.c.l.b16 %v1370
    %v1691 = vunpack.c.h.b16 %v1370
    %v1692 = vunpack.c.l.b16 %v1371
    %v1693 = vunpack.c.h.b16 %v1371
    %v1694 = vunpack.c.l.b16 %v1372
    %v1695 = vunpack.c.h.b16 %v1372
    %v1696 = vunpack.c.l.b16 %v1373
    %v1697 = vunpack.c.h.b16 %v1373
    %v1698 = vunpack.c.l.b16 %v1374
    %v1699 = vunpack.c.h.b16 %v1374
    %v1700 = vunpack.c.l.b16 %v1375
    %v1701 = vunpack.c.h.b16 %v1375
    %v1702 = vunpack.c.l.b16 %v1376
    %v1703 = vunpack.c.h.b16 %v1376
    %v1704 = vunpack.c.l.b16 %v1377
    %v1705 = vunpack.c.h.b16 %v1377
    %v1706 = vunpack.c.l.b16 %v1378
    %v1707 = vunpack.c.h.b16 %v1378
    %v1708 = vunpack.c.l.b16 %v1379
    %v1709 = vunpack.c.h.b16 %v1379
    %v1710 = vunpack.c.l.b16 %v1380
    %v1711 = vunpack.c.h.b16 %v1380
    %v1712 = vunpack.c.l.b16 %v1381
    %v1713 = vunpack.c.h.b16 %v1381
    %v1714 = vunpack.c.l.b16 %v1382
    %v1715 = vunpack.c.h.b16 %v1382
    %v1716 = vunpack.c.l.b16 %v1383
    %v1717 = vunpack.c.h.b16 %v1383
    %v1718 = vunpack.c.l.b16 %v1384
    %v1719 = vunpack.c.h.b16 %v1384
    %v1720 = vunpack.c.l.b16 %v1385
    %v1721 = vunpack.c.h.b16 %v1385
    %v1722 = vunpack.c.l.b16 %v1386
    %v1723 = vunpack.c.h.b16 %v1386
    %v1724 = vunpack.c.l.b16 %v1387
    %v1725 = vunpack.c.h.b16 %v1387
    %v1726 = vunpack.c.l.b16 %v1388
    %v1727 = vunpack.c.h.b16 %v1388
    %v1728 = vunpack.c.l.b16 %v1389
    %v1729 = vunpack.c.h.b16 %v1389
    %v1730 = vunpack.c.l.b16 %v1390
    %v1731 = vunpack.c.h.b16 %v1390
    %v1732 = vunpack.c.l.b16 %v1391
    %v1733 = vunpack.c.h.b16 %v1391
    %v1734 = vunpack.c.l.b16 %v1392
    %v1735 = vunpack.c.h.b16 %v1392
    %v1736 = vunpack.c.l.b16 %v1393
    %v1737 = vunpack.c.h.b16 %v1393
    %v1738 = vunpack.c.l.b16 %v1394
    %v1739 = vunpack.c.h.b16 %v1394
    %v1740 = vunpack.c.l.b16 %v1395
    %v1741 = vunpack.c.h.b16 %v1395
    %v1742 = vunpack.c.l.b16 %v1396
    %v1743 = vunpack.c.h.b16 %v1396
    %v1744 = vunpack.c.l.b16 %v1397
    %v1745 = vunpack.c.h.b16 %v1397
    %v1746 = vunpack.c.l.b16 %v1398
    %v1747 = vunpack.c.h.b16 %v1398
    %v1748 = vunpack.c.l.b16 %v1399
    %v1749 = vunpack.c.h.b16 %v1399
    %v1750 = vunpack.c.l.b16 %v1400
    %v1751 = vunpack.c.h.b16 %v1400
    %v1752 = vunpack.c.l.b16 %v1401
    %v1753 = vunpack.c.h.b16 %v1401
    %v1754 = vunpack.c.l.b16 %v1402
    %v1755 = vunpack.c.h.b16 %v1402
    %v1756 = vunpack.c.l.b16 %v1403
    %v1757 = vunpack.c.h.b16 %v1403
    %v1758 = vunpack.c.l.b16 %v1404
    %v1759 = vunpack.c.h.b16 %v1404
    %v1760 = vunpack.c.l.b16 %v1405
    %v1761 = vunpack.c.h.b16 %v1405
    %v1762 = vunpack.c.l.b16 %v1406
    %v1763 = vunpack.c.h.b16 %v1406
    %v1764 = vunpack.c.l.b16 %v1407
    %v1765 = vunpack.c.h.b16 %v1407
    %v1766 = vunpack.c.l.b16 %v1408
    %v1767 = vunpack.c.h.b16 %v1408
    %v1768 = vunpack.c.l.b16 %v1409
    %v1769 = vunpack.c.h.b16 %v1409
    %v1770 = vunpack.c.l.b16 %v1410
    %v1771 = vunpack.c.h.b16 %v1410
    %v1772 = vunpack.c.l.b16 %v1411
    %v1773 = vunpack.c.h.b16 %v1411
    %v1774 = vunpack.c.l.b16 %v1412
    %v1775 = vunpack.c.h.b16 %v1412
    %v1776 = vunpack.c.l.b16 %v1413
    %v1777 = vunpack.c.h.b16 %v1413
    %v1778 = vunpack.c.l.b16 %v1414
    %v1779 = vunpack.c.h.b16 %v1414
    %v1780 = vunpack.c.l.b16 %v1415
    %v1781 = vunpack.c.h.b16 %v1415
    %v1782 = vunpack.c.l.b16 %v1416
    %v1783 = vunpack.c.h.b16 %v1416
    %v1784 = vunpack.c.l.b16 %v1417
    %v1785 = vunpack.c.h.b16 %v1417
    %v1786 = vunpack.c.l.b16 %v1418
    %v1787 = vunpack.c.h.b16 %v1418
    %v1788 = vunpack.c.l.b16 %v1419
    %v1789 = vunpack.c.h.b16 %v1419
    %v1790 = vunpack.c.l.b16 %v1420
    %v1791 = vunpack.c.h.b16 %v1420
    %v1792 = vunpack.c.l.b16 %v1421
    %v1793 = vunpack.c.h.b16 %v1421
    %v1794 = vunpack.c.l.b16 %v1422
    %v1795 = vunpack.c.h.b16 %v1422
    %v1796 = vunpack.c.l.b16 %v1423
    %v1797 = vunpack.c.h.b16 %v1423
    %v1798 = vunpack.c.l.b16 %v1424
    %v1799 = vunpack.c.h.b16 %v1424
    %v1800 = vunpack.c.l.b16 %v1425
    %v1801 = vunpack.c.h.b16 %v1425
    %v1802 = vunpack.c.l.b16 %v1426
    %v1803 = vunpack.c.h.b16 %v1426
    %v1804 = vunpack.c.l.b16 %v1427
    %v1805 = vunpack.c.h.b16 %v1427
    %v1806 = vunpack.c.l.b16 %v1428
    %v1807 = vunpack.c.h.b16 %v1428
    %v1808 = vunpack.c.l.b16 %v1429
    %v1809 = vunpack.c.h.b16 %v1429
    %v1810 = vunpack.c.l.b16 %v1430
    %v1811 = vunpack.c.h.b16 %v1430
    %v1812 = vunpack.c.l.b16 %v1431
    %v1813 = vunpack.c.h.b16 %v1431
    %v1814 = vunpack.c.l.b16 %v1432
    %v1815 = vunpack.c.h.b16 %v1432
    %v1816 = vunpack.c.l.b16 %v1433
    %v1817 = vunpack.c.h.b16 %v1433
    %v1818 = vunpack.c.l.b16 %v1434
    %v1819 = vunpack.c.h.b16 %v1434
    %v1820 = vunpack.c.l.b16 %v1435
    %v1821 = vunpack.c.h.b16 %v1435
    %v1822 = vunpack.c.l.b16 %v1436
    %v1823 = vunpack.c.h.b16 %v1436
    %v1824 = vunpack.c.l.b16 %v1437
    %v1825 = vunpack.c.h.b16 %v1437
    %v1826 = vunpack.c.l.b16 %v1438
    %v1827 = vunpack.c.h.b16 %v1438
    %v1828 = vunpack.c.l.b16 %v1439
    %v1829 = vunpack.c.h.b16 %v1439
    %v1830 = vunpack.c.l.b16 %v1440
    %v1831 = vunpack.c.h.b16 %v1440
    %v1832 = vunpack.c.l.b16 %v1441
    %v1833 = vunpack.c.h.b16 %v1441
    %v1834 = vunpack.c.l.b16 %v1442
    %v1835 = vunpack.c.h.b16 %v1442
    %v1836 = vunpack.c.l.b16 %v1443
    %v1837 = vunpack.c.h.b16 %v1443
    %v1838 = vpack.c.b16 %v1586, %v1582
    %v1839 = vpack.c.b16 %v1587, %v1583
    %v1840 = vpack.c.b16 %v1588, %v1584
    %v1841 = vpack.c.b16 %v1589, %v1585
    %v1842 = vpack.c.b16 %v1594, %v1590
    %v1843 = vpack.c.b16 %v1595, %v1591
    %v1844 = vpack.c.b16 %v1596, %v1592
    %v1845 = vpack.c.b16 %v1597, %v1593
    %v1846 = vpack.c.b16 %v1602, %v1598
    %v1847 = vpack.c.b16 %v1603, %v1599
    %v1848 = vpack.c.b16 %v1604, %v1600
    %v1849 = vpack.c.b16 %v1605, %v1601
    %v1850 = vpack.c.b16 %v1610, %v1606
    %v1851 = vpack.c.b16 %v1611, %v1607
    %v1852 = vpack.c.b16 %v1612, %v1608
    %v1853 = vpack.c.b16 %v1613, %v1609
    %v1854 = vpack.c.b16 %v1618, %v1614
    %v1855 = vpack.c.b16 %v1619, %v1615
    %v1856 = vpack.c.b16 %v1620, %v1616
    %v1857 = vpack.c.b16 %v1621, %v1617
    %v1858 = vpack.c.b16 %v1626, %v1622
    %v1859 = vpack.c.b16 %v1627, %v1623
    %v1860 = vpack.c.b16 %v1628, %v1624
    %v1861 = vpack.c.b16 %v1629, %v1625
    %v1862 = vpack.c.b16 %v1634, %v1630
    %v1863 = vpack.c.b16 %v1635, %v1631
    %v1864 = vpack.c.b16 %v1636, %v1632
    %v1865 = vpack.c.b16 %v1637, %v1633
    %v1866 = vpack.c.b16 %v1642, %v1638
    %v1867 = vpack.c.b16 %v1643, %v1639
    %v1868 = vpack.c.b16 %v1644, %v1640
    %v1869 = vpack.c.b16 %v1645, %v1641
    %v1870 = vpack.c.b16 %v1650, %v1646
    %v1871 = vpack.c.b16 %v1651, %v1647
    %v1872 = vpack.c.b16 %v1652, %v1648
    %v1873 = vpack.c.b16 %v1653, %v1649
    %v1874 = vpack.c.b16 %v1658, %v1654
    %v1875 = vpack.c.b16 %v1659, %v1655
    %v1876 = vpack.c.b16 %v1660, %v1656
    %v1877 = vpack.c.b16 %v1661, %v1657
    %v1878 = vpack.c.b16 %v1666, %v1662
    %v1879 = vpack.c.b16 %v1667, %v1663
    %v1880 = vpack.c.b16 %v1668, %v1664
    %v1881 = vpack.c.b16 %v1669, %v1665
    %v1882 = vpack.c.b16 %v1674, %v1670
    %v1883 = vpack.c.b16 %v1675, %v1671
    %v1884 = vpack.c.b16 %v1676, %v1672
    %v1885 = vpack.c.b16 %v1677, %v1673
    %v1886 = vpack.c.b16 %v1682, %v1678
    %v1887 = vpack.c.b16 %v1683, %v1679
    %v1888 = vpack.c.b16 %v1684, %v1680
    %v1889 = vpack.c.b16 %v1685, %v1681
    %v1890 = vpack.c.b16 %v1690, %v1686
    %v1891 = vpack.c.b16 %v1691, %v1687
    %v1892 = vpack.c.b16 %v1692, %v1688
    %v1893 = vpack.c.b16 %v1693, %v1689
    %v1894 = vpack.c.b16 %v1698, %v1694
    %v1895 = vpack.c.b16 %v1699, %v1695
    %v1896 = vpack.c.b16 %v1700, %v1696
    %v1897 = vpack.c.b16 %v1701, %v1697
    %v1898 = vpack.c.b16 %v1706, %v1702
    %v1899 = vpack.c.b16 %v1707, %v1703
    %v1900 = vpack.c.b16 %v1708, %v1704
    %v1901 = vpack.c.b16 %v1709, %v1705
    %v1902 = vpack.c.b16 %v1714, %v1710
    %v1903 = vpack.c.b16 %v1715, %v1711
    %v1904 = vpack.c.b16 %v1716, %v1712
    %v1905 = vpack.c.b16 %v1717, %v1713
    %v1906 = vpack.c.b16 %v1722, %v1718
    %v1907 = vpack.c.b16 %v1723, %v1719
    %v1908 = vpack.c.b16 %v1724, %v1720
    %v1909 = vpack.c.b16 %v1725, %v1721
    %v1910 = vpack.c.b16 %v1730, %v1726
    %v1911 = vpack.c.b16 %v1731, %v1727
    %v1912 = vpack.c.b16 %v1732, %v1728
    %v1913 = vpack.c.b16 %v1733, %v1729
    %v1914 = vpack.c.b16 %v1738, %v1734
    %v1915 = vpack.c.b16 %v1739, %v1735
    %v1916 = vpack.c.b16 %v1740, %v1736
    %v1917 = vpack.c.b16 %v1741, %v1737
    %v1918 = vpack.c.b16 %v1746, %v1742
    %v1919 = vpack.c.b16 %v1747, %v1743
    %v1920 = vpack.c.b16 %v1748, %v1744
    %v1921 = vpack.c.b16 %v1749, %v1745
    %v1922 = vpack.c.b16 %v1754, %v1750
    %v1923 = vpack.c.b16 %v1755, %v1751
    %v1924 = vpack.c.b16 %v1756, %v1752
    %v1925 = vpack.c.b16 %v1757, %v1753
    %v1926 = vpack.c.b16 %v1762, %v1758
    %v1927 = vpack.c.b16 %v1763, %v1759
    %v1928 = vpack.c.b16 %v1764, %v1760
    %v1929 = vpack.c.b16 %v1765, %v1761
    %v1930 = vpack.c.b16 %v1770, %v1766
    %v1931 = vpack.c.b16 %v1771, %v1767
    %v1932 = vpack.c.b16 %v1772, %v1768
    %v1933 = vpack.c.b16 %v1773, %v1769
    %v1934 = vpack.c.b16 %v1778, %v1774
    %v1935 = vpack.c.b16 %v1779, %v1775
    %v1936 = vpack.c.b16 %v1780, %v1776
    %v1937 = vpack.c.b16 %v1781, %v1777
    %v1938 = vpack.c.b16 %v1786, %v1782
    %v1939 = vpack.c.b16 %v1787, %v1783
    %v1940 = vpack.c.b16 %v1788, %v1784
    %v1941 = vpack.c.b16 %v1789, %v1785
    %v1942 = vpack.c.b16 %v1794, %v1790
    %v1943 = vpack.c.b16 %v1795, %v1791
    %v1944 = vpack.c.b16 %v1796, %v1792
    %v1945 = vpack.c.b16 %v1797, %v1793
    %v1946 = vpack.c.b16 %v1802, %v1798
    %v1947 = vpack.c.b16 %v1803, %v1799
    %v1948 = vpack.c.b16 %v1804, %v1800
    %v1949 = vpack.c.b16 %v1805, %v1801
    %v1950 = vpack.c.b16 %v1810, %v1806
    %v1951 = vpack.c.b16 %v1811, %v1807
    %v1952 = vpack.c.b16 %v1812, %v1808
    %v1953 = vpack.c.b16 %v1813, %v1809
    %v1954 = vpack.c.b16 %v1818, %v1814
    %v1955 = vpack.c.b16 %v1819, %v1815
    %v1956 = vpack.c.b16 %v1820, %v1816
    %v1957 = vpack.c.b16 %v1821, %v1817
    %v1958 = vpack.c.b16 %v1826, %v1822
    %v1959 = vpack.c.b16 %v1827, %v1823
    %v1960 = vpack.c.b16 %v1828, %v1824
    %v1961 = vpack.c.b16 %v1829, %v1825
    %v1962 = vpack.c.b16 %v1834, %v1830
    %v1963 = vpack.c.b16 %v1835, %v1831
    %v1964 = vpack.c.b16 %v1836, %v1832
    %v1965 = vpack.c.b16 %v1837, %v1833
    %2094 = vmatpush.bf16.msra.mxu0 %v1866
    %2095 = vmatpush.bf16.msra.mxu0 %v1862
    %2096 = vmatpush.bf16.msra.mxu0 %v1858
    %2097 = vmatpush.bf16.msra.mxu0 %v1854
    %2098 = vmatpush.bf16.msra.mxu0 %v1850
    %2099 = vmatpush.bf16.msra.mxu0 %v1846
    %2100 = vmatpush.bf16.msra.mxu0 %v1842
    %2101 = vmatpush.bf16.msra.mxu0 %v1838
    %2102 = vmatmul.bf16.gmra.mxu0 %v1312
    %v2103 = vpop.f32.mrf.mxu0
    %v2104 = vadd.f32 %v1446, %v2103
    %v2105 = vpop.f32.mrf.mxu0
    %v2106 = vadd.f32 %v1446, %v2105
    %2107 = vdwg.mxu0
    %2108 = vmatpush.bf16.msra.mxu0 %v1898
    %2109 = vmatpush.bf16.msra.mxu0 %v1894
    %2110 = vmatpush.bf16.msra.mxu0 %v1890
    %2111 = vmatpush.bf16.msra.mxu0 %v1886
    %2112 = vmatpush.bf16.msra.mxu0 %v1882
    %2113 = vmatpush.bf16.msra.mxu0 %v1878
    %2114 = vmatpush.bf16.msra.mxu0 %v1874
    %2115 = vmatpush.bf16.msra.mxu0 %v1870
    %2116 = vmatmul.bf16.gmra.mxu0 %v1313
    %v2117 = vpop.f32.mrf.mxu0
    %v2118 = vadd.f32 %v2104, %v2117
    %v2119 = vpop.f32.mrf.mxu0
    %v2120 = vadd.f32 %v2106, %v2119
    %2121 = vdwg.mxu0
    %2122 = vmatpush.bf16.msra.mxu0 %v1930
    %2123 = vmatpush.bf16.msra.mxu0 %v1926
    %2124 = vmatpush.bf16.msra.mxu0 %v1922
    %2125 = vmatpush.bf16.msra.mxu0 %v1918
    %2126 = vmatpush.bf16.msra.mxu0 %v1914
    %2127 = vmatpush.bf16.msra.mxu0 %v1910
    %2128 = vmatpush.bf16.msra.mxu0 %v1906
    %2129 = vmatpush.bf16.msra.mxu0 %v1902
    %2130 = vmatmul.bf16.gmra.mxu0 %v1314
    %v2131 = vpop.f32.mrf.mxu0
    %v2132 = vadd.f32 %v2118, %v2131
    %v2133 = vpop.f32.mrf.mxu0
    %v2134 = vadd.f32 %v2120, %v2133
    %2135 = vdwg.mxu0
    %2136 = vmatpush.bf16.msra.mxu0 %v1962
    %2137 = vmatpush.bf16.msra.mxu0 %v1958
    %2138 = vmatpush.bf16.msra.mxu0 %v1954
    %2139 = vmatpush.bf16.msra.mxu0 %v1950
    %2140 = vmatpush.bf16.msra.mxu0 %v1946
    %2141 = vmatpush.bf16.msra.mxu0 %v1942
    %2142 = vmatpush.bf16.msra.mxu0 %v1938
    %2143 = vmatpush.bf16.msra.mxu0 %v1934
    %2144 = vmatmul.bf16.gmra.mxu0 %v1315
    %v2145 = vpop.f32.mrf.mxu0
    %v2146 = vadd.f32 %v2132, %v2145
    %v2147 = vpop.f32.mrf.mxu0
    %v2148 = vadd.f32 %v2134, %v2147
    %2149 = vdwg.mxu0
    %2150 = vmatpush.bf16.msra.mxu0 %v1867
    %2151 = vmatpush.bf16.msra.mxu0 %v1863
    %2152 = vmatpush.bf16.msra.mxu0 %v1859
    %2153 = vmatpush.bf16.msra.mxu0 %v1855
    %2154 = vmatpush.bf16.msra.mxu0 %v1851
    %2155 = vmatpush.bf16.msra.mxu0 %v1847
    %2156 = vmatpush.bf16.msra.mxu0 %v1843
    %2157 = vmatpush.bf16.msra.mxu0 %v1839
    %2158 = vmatmul.bf16.gmra.mxu0 %v1312
    %v2159 = vpop.f32.mrf.mxu0
    %v2160 = vadd.f32 %v1447, %v2159
    %v2161 = vpop.f32.mrf.mxu0
    %v2162 = vadd.f32 %v1447, %v2161
    %2163 = vdwg.mxu0
    %2164 = vmatpush.bf16.msra.mxu0 %v1899
    %2165 = vmatpush.bf16.msra.mxu0 %v1895
    %2166 = vmatpush.bf16.msra.mxu0 %v1891
    %2167 = vmatpush.bf16.msra.mxu0 %v1887
    %2168 = vmatpush.bf16.msra.mxu0 %v1883
    %2169 = vmatpush.bf16.msra.mxu0 %v1879
    %2170 = vmatpush.bf16.msra.mxu0 %v1875
    %2171 = vmatpush.bf16.msra.mxu0 %v1871
    %2172 = vmatmul.bf16.gmra.mxu0 %v1313
    %v2173 = vpop.f32.mrf.mxu0
    %v2174 = vadd.f32 %v2160, %v2173
    %v2175 = vpop.f32.mrf.mxu0
    %v2176 = vadd.f32 %v2162, %v2175
    %2177 = vdwg.mxu0
    %2178 = vmatpush.bf16.msra.mxu0 %v1931
    %2179 = vmatpush.bf16.msra.mxu0 %v1927
    %2180 = vmatpush.bf16.msra.mxu0 %v1923
    %2181 = vmatpush.bf16.msra.mxu0 %v1919
    %2182 = vmatpush.bf16.msra.mxu0 %v1915
    %2183 = vmatpush.bf16.msra.mxu0 %v1911
    %2184 = vmatpush.bf16.msra.mxu0 %v1907
    %2185 = vmatpush.bf16.msra.mxu0 %v1903
    %2186 = vmatmul.bf16.gmra.mxu0 %v1314
    %v2187 = vpop.f32.mrf.mxu0
    %v2188 = vadd.f32 %v2174, %v2187
    %v2189 = vpop.f32.mrf.mxu0
    %v2190 = vadd.f32 %v2176, %v2189
    %2191 = vdwg.mxu0
    %2192 = vmatpush.bf16.msra.mxu0 %v1963
    %2193 = vmatpush.bf16.msra.mxu0 %v1959
    %2194 = vmatpush.bf16.msra.mxu0 %v1955
    %2195 = vmatpush.bf16.msra.mxu0 %v1951
    %2196 = vmatpush.bf16.msra.mxu0 %v1947
    %2197 = vmatpush.bf16.msra.mxu0 %v1943
    %2198 = vmatpush.bf16.msra.mxu0 %v1939
    %2199 = vmatpush.bf16.msra.mxu0 %v1935
    %2200 = vmatmul.bf16.gmra.mxu0 %v1315
    %v2201 = vpop.f32.mrf.mxu0
    %v2202 = vadd.f32 %v2188, %v2201
    %v2203 = vpop.f32.mrf.mxu0
    %v2204 = vadd.f32 %v2190, %v2203
    %2205 = vdwg.mxu0
    %2206 = vmatpush.bf16.msra.mxu0 %v1868
    %2207 = vmatpush.bf16.msra.mxu0 %v1864
    %2208 = vmatpush.bf16.msra.mxu0 %v1860
    %2209 = vmatpush.bf16.msra.mxu0 %v1856
    %2210 = vmatpush.bf16.msra.mxu0 %v1852
    %2211 = vmatpush.bf16.msra.mxu0 %v1848
    %2212 = vmatpush.bf16.msra.mxu0 %v1844
    %2213 = vmatpush.bf16.msra.mxu0 %v1840
    %2214 = vmatmul.bf16.gmra.mxu0 %v1312
    %v2215 = vpop.f32.mrf.mxu0
    %v2216 = vadd.f32 %v1448, %v2215
    %v2217 = vpop.f32.mrf.mxu0
    %v2218 = vadd.f32 %v1448, %v2217
    %2219 = vdwg.mxu0
    %2220 = vmatpush.bf16.msra.mxu0 %v1900
    %2221 = vmatpush.bf16.msra.mxu0 %v1896
    %2222 = vmatpush.bf16.msra.mxu0 %v1892
    %2223 = vmatpush.bf16.msra.mxu0 %v1888
    %2224 = vmatpush.bf16.msra.mxu0 %v1884
    %2225 = vmatpush.bf16.msra.mxu0 %v1880
    %2226 = vmatpush.bf16.msra.mxu0 %v1876
    %2227 = vmatpush.bf16.msra.mxu0 %v1872
    %2228 = vmatmul.bf16.gmra.mxu0 %v1313
    %v2229 = vpop.f32.mrf.mxu0
    %v2230 = vadd.f32 %v2216, %v2229
    %v2231 = vpop.f32.mrf.mxu0
    %v2232 = vadd.f32 %v2218, %v2231
    %2233 = vdwg.mxu0
    %2234 = vmatpush.bf16.msra.mxu0 %v1932
    %2235 = vmatpush.bf16.msra.mxu0 %v1928
    %2236 = vmatpush.bf16.msra.mxu0 %v1924
    %2237 = vmatpush.bf16.msra.mxu0 %v1920
    %2238 = vmatpush.bf16.msra.mxu0 %v1916
    %2239 = vmatpush.bf16.msra.mxu0 %v1912
    %2240 = vmatpush.bf16.msra.mxu0 %v1908
    %2241 = vmatpush.bf16.msra.mxu0 %v1904
    %2242 = vmatmul.bf16.gmra.mxu0 %v1314
    %v2243 = vpop.f32.mrf.mxu0
    %v2244 = vadd.f32 %v2230, %v2243
    %v2245 = vpop.f32.mrf.mxu0
    %v2246 = vadd.f32 %v2232, %v2245
    %2247 = vdwg.mxu0
    %2248 = vmatpush.bf16.msra.mxu0 %v1964
    %2249 = vmatpush.bf16.msra.mxu0 %v1960
    %2250 = vmatpush.bf16.msra.mxu0 %v1956
    %2251 = vmatpush.bf16.msra.mxu0 %v1952
    %2252 = vmatpush.bf16.msra.mxu0 %v1948
    %2253 = vmatpush.bf16.msra.mxu0 %v1944
    %2254 = vmatpush.bf16.msra.mxu0 %v1940
    %2255 = vmatpush.bf16.msra.mxu0 %v1936
    %2256 = vmatmul.bf16.gmra.mxu0 %v1315
    %v2257 = vpop.f32.mrf.mxu0
    %v2258 = vadd.f32 %v2244, %v2257
    %v2259 = vpop.f32.mrf.mxu0
    %v2260 = vadd.f32 %v2246, %v2259
    %2261 = vdwg.mxu0
    %2262 = vmatpush.bf16.msra.mxu0 %v1869
    %2263 = vmatpush.bf16.msra.mxu0 %v1865
    %2264 = vmatpush.bf16.msra.mxu0 %v1861
    %2265 = vmatpush.bf16.msra.mxu0 %v1857
    %2266 = vmatpush.bf16.msra.mxu0 %v1853
    %2267 = vmatpush.bf16.msra.mxu0 %v1849
    %2268 = vmatpush.bf16.msra.mxu0 %v1845
    %2269 = vmatpush.bf16.msra.mxu0 %v1841
    %2270 = vmatmul.bf16.gmra.mxu0 %v1312
    %v2271 = vpop.f32.mrf.mxu0
    %v2272 = vadd.f32 %v1449, %v2271
    %v2273 = vpop.f32.mrf.mxu0
    %v2274 = vadd.f32 %v1449, %v2273
    %2275 = vdwg.mxu0
    %2276 = vmatpush.bf16.msra.mxu0 %v1901
    %2277 = vmatpush.bf16.msra.mxu0 %v1897
    %2278 = vmatpush.bf16.msra.mxu0 %v1893
    %2279 = vmatpush.bf16.msra.mxu0 %v1889
    %2280 = vmatpush.bf16.msra.mxu0 %v1885
    %2281 = vmatpush.bf16.msra.mxu0 %v1881
    %2282 = vmatpush.bf16.msra.mxu0 %v1877
    %2283 = vmatpush.bf16.msra.mxu0 %v1873
    %2284 = vmatmul.bf16.gmra.mxu0 %v1313
    %v2285 = vpop.f32.mrf.mxu0
    %v2286 = vadd.f32 %v2272, %v2285
    %v2287 = vpop.f32.mrf.mxu0
    %v2288 = vadd.f32 %v2274, %v2287
    %2289 = vdwg.mxu0
    %2290 = vmatpush.bf16.msra.mxu0 %v1933
    %2291 = vmatpush.bf16.msra.mxu0 %v1929
    %2292 = vmatpush.bf16.msra.mxu0 %v1925
    %2293 = vmatpush.bf16.msra.mxu0 %v1921
    %2294 = vmatpush.bf16.msra.mxu0 %v1917
    %2295 = vmatpush.bf16.msra.mxu0 %v1913
    %2296 = vmatpush.bf16.msra.mxu0 %v1909
    %2297 = vmatpush.bf16.msra.mxu0 %v1905
    %2298 = vmatmul.bf16.gmra.mxu0 %v1314
    %v2299 = vpop.f32.mrf.mxu0
    %v2300 = vadd.f32 %v2286, %v2299
    %v2301 = vpop.f32.mrf.mxu0
    %v2302 = vadd.f32 %v2288, %v2301
    %2303 = vdwg.mxu0
    %2304 = vmatpush.bf16.msra.mxu0 %v1965
    %2305 = vmatpush.bf16.msra.mxu0 %v1961
    %2306 = vmatpush.bf16.msra.mxu0 %v1957
    %2307 = vmatpush.bf16.msra.mxu0 %v1953
    %2308 = vmatpush.bf16.msra.mxu0 %v1949
    %2309 = vmatpush.bf16.msra.mxu0 %v1945
    %2310 = vmatpush.bf16.msra.mxu0 %v1941
    %2311 = vmatpush.bf16.msra.mxu0 %v1937
    %2312 = vmatmul.bf16.gmra.mxu0 %v1315
    %v2313 = vpop.f32.mrf.mxu0
    %v2314 = vadd.f32 %v2300, %v2313
    %v2315 = vpop.f32.mrf.mxu0
    %v2316 = vadd.f32 %v2302, %v2315
    %2317 = vdwg.mxu0
    %v2318 = vmax.f32 %v2146, 0.0
    %v2319 = vmax.f32 %v2202, 0.0
    %v2320 = vmax.f32 %v2258, 0.0
    %v2321 = vmax.f32 %v2314, 0.0
    %v2322 = vmax.f32 %v2148, 0.0
    %v2323 = vmax.f32 %v2204, 0.0
    %v2324 = vmax.f32 %v2260, 0.0
    %v2325 = vmax.f32 %v2316, 0.0
    %v2326 = vpack.c.bf16 %v2322, %v2318
    %v2327 = vpack.c.bf16 %v2323, %v2319
    %v2328 = vpack.c.bf16 %v2324, %v2320
    %v2329 = vpack.c.bf16 %v2325, %v2321
    %v2330 = vld [vmem:[#allocation8] sm:$0xff]
    %v2331 = vld [vmem:[#allocation8 + $0x8] sm:$0xff]
    %v2332 = vld [vmem:[#allocation8 + $0x10] sm:$0xff]
    %v2333 = vld [vmem:[#allocation8 + $0x18] sm:$0xff]
    %v2334 = vld [vmem:[#allocation8 + $0x20] sm:$0xff]
    %v2335 = vld [vmem:[#allocation8 + $0x28] sm:$0xff]
    %v2336 = vld [vmem:[#allocation8 + $0x30] sm:$0xff]
    %v2337 = vld [vmem:[#allocation8 + $0x38] sm:$0xff]
    %v2338 = vld [vmem:[#allocation8 + $0x40] sm:$0xff]
    %v2339 = vld [vmem:[#allocation8 + $0x48] sm:$0xff]
    %v2340 = vld [vmem:[#allocation8 + $0x50] sm:$0xff]
    %v2341 = vld [vmem:[#allocation8 + $0x58] sm:$0xff]
    %v2342 = vld [vmem:[#allocation8 + $0x60] sm:$0xff]
    %v2343 = vld [vmem:[#allocation8 + $0x68] sm:$0xff]
    %v2344 = vld [vmem:[#allocation8 + $0x70] sm:$0xff]
    %v2345 = vld [vmem:[#allocation8 + $0x78] sm:$0xff]
    %v2346 = vld [vmem:[#allocation8 + $0x80] sm:$0xff]
    %v2347 = vld [vmem:[#allocation8 + $0x88] sm:$0xff]
    %v2348 = vld [vmem:[#allocation8 + $0x90] sm:$0xff]
    %v2349 = vld [vmem:[#allocation8 + $0x98] sm:$0xff]
    %v2350 = vld [vmem:[#allocation8 + $0xa0] sm:$0xff]
    %v2351 = vld [vmem:[#allocation8 + $0xa8] sm:$0xff]
    %v2352 = vld [vmem:[#allocation8 + $0xb0] sm:$0xff]
    %v2353 = vld [vmem:[#allocation8 + $0xb8] sm:$0xff]
    %v2354 = vld [vmem:[#allocation8 + $0xc0] sm:$0xff]
    %v2355 = vld [vmem:[#allocation8 + $0xc8] sm:$0xff]
    %v2356 = vld [vmem:[#allocation8 + $0xd0] sm:$0xff]
    %v2357 = vld [vmem:[#allocation8 + $0xd8] sm:$0xff]
    %v2358 = vld [vmem:[#allocation8 + $0xe0] sm:$0xff]
    %v2359 = vld [vmem:[#allocation8 + $0xe8] sm:$0xff]
    %v2360 = vld [vmem:[#allocation8 + $0xf0] sm:$0xff]
    %v2361 = vld [vmem:[#allocation8 + $0xf8] sm:$0xff]
    %v2362 = vld [vmem:[#allocation8 + $0x100] sm:$0xff]
    %v2363 = vld [vmem:[#allocation8 + $0x108] sm:$0xff]
    %v2364 = vld [vmem:[#allocation8 + $0x110] sm:$0xff]
    %v2365 = vld [vmem:[#allocation8 + $0x118] sm:$0xff]
    %v2366 = vld [vmem:[#allocation8 + $0x120] sm:$0xff]
    %v2367 = vld [vmem:[#allocation8 + $0x128] sm:$0xff]
    %v2368 = vld [vmem:[#allocation8 + $0x130] sm:$0xff]
    %v2369 = vld [vmem:[#allocation8 + $0x138] sm:$0xff]
    %v2370 = vld [vmem:[#allocation8 + $0x140] sm:$0xff]
    %v2371 = vld [vmem:[#allocation8 + $0x148] sm:$0xff]
    %v2372 = vld [vmem:[#allocation8 + $0x150] sm:$0xff]
    %v2373 = vld [vmem:[#allocation8 + $0x158] sm:$0xff]
    %v2374 = vld [vmem:[#allocation8 + $0x160] sm:$0xff]
    %v2375 = vld [vmem:[#allocation8 + $0x168] sm:$0xff]
    %v2376 = vld [vmem:[#allocation8 + $0x170] sm:$0xff]
    %v2377 = vld [vmem:[#allocation8 + $0x178] sm:$0xff]
    %v2378 = vld [vmem:[#allocation8 + $0x180] sm:$0xff]
    %v2379 = vld [vmem:[#allocation8 + $0x188] sm:$0xff]
    %v2380 = vld [vmem:[#allocation8 + $0x190] sm:$0xff]
    %v2381 = vld [vmem:[#allocation8 + $0x198] sm:$0xff]
    %v2382 = vld [vmem:[#allocation8 + $0x1a0] sm:$0xff]
    %v2383 = vld [vmem:[#allocation8 + $0x1a8] sm:$0xff]
    %v2384 = vld [vmem:[#allocation8 + $0x1b0] sm:$0xff]
    %v2385 = vld [vmem:[#allocation8 + $0x1b8] sm:$0xff]
    %v2386 = vld [vmem:[#allocation8 + $0x1c0] sm:$0xff]
    %v2387 = vld [vmem:[#allocation8 + $0x1c8] sm:$0xff]
    %v2388 = vld [vmem:[#allocation8 + $0x1d0] sm:$0xff]
    %v2389 = vld [vmem:[#allocation8 + $0x1d8] sm:$0xff]
    %v2390 = vld [vmem:[#allocation8 + $0x1e0] sm:$0xff]
    %v2391 = vld [vmem:[#allocation8 + $0x1e8] sm:$0xff]
    %v2392 = vld [vmem:[#allocation8 + $0x1f0] sm:$0xff]
    %v2393 = vld [vmem:[#allocation8 + $0x1f8] sm:$0xff]
    %v2394 = vld [vmem:[#allocation8 + $0x200] sm:$0xff]
    %v2395 = vld [vmem:[#allocation8 + $0x208] sm:$0xff]
    %v2396 = vld [vmem:[#allocation8 + $0x210] sm:$0xff]
    %v2397 = vld [vmem:[#allocation8 + $0x218] sm:$0xff]
    %v2398 = vld [vmem:[#allocation8 + $0x220] sm:$0xff]
    %v2399 = vld [vmem:[#allocation8 + $0x228] sm:$0xff]
    %v2400 = vld [vmem:[#allocation8 + $0x230] sm:$0xff]
    %v2401 = vld [vmem:[#allocation8 + $0x238] sm:$0xff]
    %v2402 = vld [vmem:[#allocation8 + $0x240] sm:$0xff]
    %v2403 = vld [vmem:[#allocation8 + $0x248] sm:$0xff]
    %v2404 = vld [vmem:[#allocation8 + $0x250] sm:$0xff]
    %v2405 = vld [vmem:[#allocation8 + $0x258] sm:$0xff]
    %v2406 = vld [vmem:[#allocation8 + $0x260] sm:$0xff]
    %v2407 = vld [vmem:[#allocation8 + $0x268] sm:$0xff]
    %v2408 = vld [vmem:[#allocation8 + $0x270] sm:$0xff]
    %v2409 = vld [vmem:[#allocation8 + $0x278] sm:$0xff]
    %v2410 = vld [vmem:[#allocation8 + $0x280] sm:$0xff]
    %v2411 = vld [vmem:[#allocation8 + $0x288] sm:$0xff]
    %v2412 = vld [vmem:[#allocation8 + $0x290] sm:$0xff]
    %v2413 = vld [vmem:[#allocation8 + $0x298] sm:$0xff]
    %v2414 = vld [vmem:[#allocation8 + $0x2a0] sm:$0xff]
    %v2415 = vld [vmem:[#allocation8 + $0x2a8] sm:$0xff]
    %v2416 = vld [vmem:[#allocation8 + $0x2b0] sm:$0xff]
    %v2417 = vld [vmem:[#allocation8 + $0x2b8] sm:$0xff]
    %v2418 = vld [vmem:[#allocation8 + $0x2c0] sm:$0xff]
    %v2419 = vld [vmem:[#allocation8 + $0x2c8] sm:$0xff]
    %v2420 = vld [vmem:[#allocation8 + $0x2d0] sm:$0xff]
    %v2421 = vld [vmem:[#allocation8 + $0x2d8] sm:$0xff]
    %v2422 = vld [vmem:[#allocation8 + $0x2e0] sm:$0xff]
    %v2423 = vld [vmem:[#allocation8 + $0x2e8] sm:$0xff]
    %v2424 = vld [vmem:[#allocation8 + $0x2f0] sm:$0xff]
    %v2425 = vld [vmem:[#allocation8 + $0x2f8] sm:$0xff]
    %v2426 = vld [vmem:[#allocation8 + $0x300] sm:$0xff]
    %v2427 = vld [vmem:[#allocation8 + $0x308] sm:$0xff]
    %v2428 = vld [vmem:[#allocation8 + $0x310] sm:$0xff]
    %v2429 = vld [vmem:[#allocation8 + $0x318] sm:$0xff]
    %v2430 = vld [vmem:[#allocation8 + $0x320] sm:$0xff]
    %v2431 = vld [vmem:[#allocation8 + $0x328] sm:$0xff]
    %v2432 = vld [vmem:[#allocation8 + $0x330] sm:$0xff]
    %v2433 = vld [vmem:[#allocation8 + $0x338] sm:$0xff]
    %v2434 = vld [vmem:[#allocation8 + $0x340] sm:$0xff]
    %v2435 = vld [vmem:[#allocation8 + $0x348] sm:$0xff]
    %v2436 = vld [vmem:[#allocation8 + $0x350] sm:$0xff]
    %v2437 = vld [vmem:[#allocation8 + $0x358] sm:$0xff]
    %v2438 = vld [vmem:[#allocation8 + $0x360] sm:$0xff]
    %v2439 = vld [vmem:[#allocation8 + $0x368] sm:$0xff]
    %v2440 = vld [vmem:[#allocation8 + $0x370] sm:$0xff]
    %v2441 = vld [vmem:[#allocation8 + $0x378] sm:$0xff]
    %v2442 = vld [vmem:[#allocation8 + $0x380] sm:$0xff]
    %v2443 = vld [vmem:[#allocation8 + $0x388] sm:$0xff]
    %v2444 = vld [vmem:[#allocation8 + $0x390] sm:$0xff]
    %v2445 = vld [vmem:[#allocation8 + $0x398] sm:$0xff]
    %v2446 = vld [vmem:[#allocation8 + $0x3a0] sm:$0xff]
    %v2447 = vld [vmem:[#allocation8 + $0x3a8] sm:$0xff]
    %v2448 = vld [vmem:[#allocation8 + $0x3b0] sm:$0xff]
    %v2449 = vld [vmem:[#allocation8 + $0x3b8] sm:$0xff]
    %v2450 = vld [vmem:[#allocation8 + $0x3c0] sm:$0xff]
    %v2451 = vld [vmem:[#allocation8 + $0x3c8] sm:$0xff]
    %v2452 = vld [vmem:[#allocation8 + $0x3d0] sm:$0xff]
    %v2453 = vld [vmem:[#allocation8 + $0x3d8] sm:$0xff]
    %v2454 = vld [vmem:[#allocation8 + $0x3e0] sm:$0xff]
    %v2455 = vld [vmem:[#allocation8 + $0x3e8] sm:$0xff]
    %v2456 = vld [vmem:[#allocation8 + $0x3f0] sm:$0xff]
    %v2457 = vld [vmem:[#allocation8 + $0x3f8] sm:$0xff]
    %v2458 = vld [vmem:[%s8] sm:$0xf]
    %v2460 = vperm.slane %v2458, 0
    %v2461 = vperm.slane %v2458, 1
    %v2462 = vperm.slane %v2458, 2
    %v2463 = vperm.slane %v2458, 3
    %v2596 = vunpack.c.l.b16 %v2330
    %v2597 = vunpack.c.h.b16 %v2330
    %v2598 = vunpack.c.l.b16 %v2331
    %v2599 = vunpack.c.h.b16 %v2331
    %v2600 = vunpack.c.l.b16 %v2332
    %v2601 = vunpack.c.h.b16 %v2332
    %v2602 = vunpack.c.l.b16 %v2333
    %v2603 = vunpack.c.h.b16 %v2333
    %v2604 = vunpack.c.l.b16 %v2334
    %v2605 = vunpack.c.h.b16 %v2334
    %v2606 = vunpack.c.l.b16 %v2335
    %v2607 = vunpack.c.h.b16 %v2335
    %v2608 = vunpack.c.l.b16 %v2336
    %v2609 = vunpack.c.h.b16 %v2336
    %v2610 = vunpack.c.l.b16 %v2337
    %v2611 = vunpack.c.h.b16 %v2337
    %v2612 = vunpack.c.l.b16 %v2338
    %v2613 = vunpack.c.h.b16 %v2338
    %v2614 = vunpack.c.l.b16 %v2339
    %v2615 = vunpack.c.h.b16 %v2339
    %v2616 = vunpack.c.l.b16 %v2340
    %v2617 = vunpack.c.h.b16 %v2340
    %v2618 = vunpack.c.l.b16 %v2341
    %v2619 = vunpack.c.h.b16 %v2341
    %v2620 = vunpack.c.l.b16 %v2342
    %v2621 = vunpack.c.h.b16 %v2342
    %v2622 = vunpack.c.l.b16 %v2343
    %v2623 = vunpack.c.h.b16 %v2343
    %v2624 = vunpack.c.l.b16 %v2344
    %v2625 = vunpack.c.h.b16 %v2344
    %v2626 = vunpack.c.l.b16 %v2345
    %v2627 = vunpack.c.h.b16 %v2345
    %v2628 = vunpack.c.l.b16 %v2346
    %v2629 = vunpack.c.h.b16 %v2346
    %v2630 = vunpack.c.l.b16 %v2347
    %v2631 = vunpack.c.h.b16 %v2347
    %v2632 = vunpack.c.l.b16 %v2348
    %v2633 = vunpack.c.h.b16 %v2348
    %v2634 = vunpack.c.l.b16 %v2349
    %v2635 = vunpack.c.h.b16 %v2349
    %v2636 = vunpack.c.l.b16 %v2350
    %v2637 = vunpack.c.h.b16 %v2350
    %v2638 = vunpack.c.l.b16 %v2351
    %v2639 = vunpack.c.h.b16 %v2351
    %v2640 = vunpack.c.l.b16 %v2352
    %v2641 = vunpack.c.h.b16 %v2352
    %v2642 = vunpack.c.l.b16 %v2353
    %v2643 = vunpack.c.h.b16 %v2353
    %v2644 = vunpack.c.l.b16 %v2354
    %v2645 = vunpack.c.h.b16 %v2354
    %v2646 = vunpack.c.l.b16 %v2355
    %v2647 = vunpack.c.h.b16 %v2355
    %v2648 = vunpack.c.l.b16 %v2356
    %v2649 = vunpack.c.h.b16 %v2356
    %v2650 = vunpack.c.l.b16 %v2357
    %v2651 = vunpack.c.h.b16 %v2357
    %v2652 = vunpack.c.l.b16 %v2358
    %v2653 = vunpack.c.h.b16 %v2358
    %v2654 = vunpack.c.l.b16 %v2359
    %v2655 = vunpack.c.h.b16 %v2359
    %v2656 = vunpack.c.l.b16 %v2360
    %v2657 = vunpack.c.h.b16 %v2360
    %v2658 = vunpack.c.l.b16 %v2361
    %v2659 = vunpack.c.h.b16 %v2361
    %v2660 = vunpack.c.l.b16 %v2362
    %v2661 = vunpack.c.h.b16 %v2362
    %v2662 = vunpack.c.l.b16 %v2363
    %v2663 = vunpack.c.h.b16 %v2363
    %v2664 = vunpack.c.l.b16 %v2364
    %v2665 = vunpack.c.h.b16 %v2364
    %v2666 = vunpack.c.l.b16 %v2365
    %v2667 = vunpack.c.h.b16 %v2365
    %v2668 = vunpack.c.l.b16 %v2366
    %v2669 = vunpack.c.h.b16 %v2366
    %v2670 = vunpack.c.l.b16 %v2367
    %v2671 = vunpack.c.h.b16 %v2367
    %v2672 = vunpack.c.l.b16 %v2368
    %v2673 = vunpack.c.h.b16 %v2368
    %v2674 = vunpack.c.l.b16 %v2369
    %v2675 = vunpack.c.h.b16 %v2369
    %v2676 = vunpack.c.l.b16 %v2370
    %v2677 = vunpack.c.h.b16 %v2370
    %v2678 = vunpack.c.l.b16 %v2371
    %v2679 = vunpack.c.h.b16 %v2371
    %v2680 = vunpack.c.l.b16 %v2372
    %v2681 = vunpack.c.h.b16 %v2372
    %v2682 = vunpack.c.l.b16 %v2373
    %v2683 = vunpack.c.h.b16 %v2373
    %v2684 = vunpack.c.l.b16 %v2374
    %v2685 = vunpack.c.h.b16 %v2374
    %v2686 = vunpack.c.l.b16 %v2375
    %v2687 = vunpack.c.h.b16 %v2375
    %v2688 = vunpack.c.l.b16 %v2376
    %v2689 = vunpack.c.h.b16 %v2376
    %v2690 = vunpack.c.l.b16 %v2377
    %v2691 = vunpack.c.h.b16 %v2377
    %v2692 = vunpack.c.l.b16 %v2378
    %v2693 = vunpack.c.h.b16 %v2378
    %v2694 = vunpack.c.l.b16 %v2379
    %v2695 = vunpack.c.h.b16 %v2379
    %v2696 = vunpack.c.l.b16 %v2380
    %v2697 = vunpack.c.h.b16 %v2380
    %v2698 = vunpack.c.l.b16 %v2381
    %v2699 = vunpack.c.h.b16 %v2381
    %v2700 = vunpack.c.l.b16 %v2382
    %v2701 = vunpack.c.h.b16 %v2382
    %v2702 = vunpack.c.l.b16 %v2383
    %v2703 = vunpack.c.h.b16 %v2383
    %v2704 = vunpack.c.l.b16 %v2384
    %v2705 = vunpack.c.h.b16 %v2384
    %v2706 = vunpack.c.l.b16 %v2385
    %v2707 = vunpack.c.h.b16 %v2385
    %v2708 = vunpack.c.l.b16 %v2386
    %v2709 = vunpack.c.h.b16 %v2386
    %v2710 = vunpack.c.l.b16 %v2387
    %v2711 = vunpack.c.h.b16 %v2387
    %v2712 = vunpack.c.l.b16 %v2388
    %v2713 = vunpack.c.h.b16 %v2388
    %v2714 = vunpack.c.l.b16 %v2389
    %v2715 = vunpack.c.h.b16 %v2389
    %v2716 = vunpack.c.l.b16 %v2390
    %v2717 = vunpack.c.h.b16 %v2390
    %v2718 = vunpack.c.l.b16 %v2391
    %v2719 = vunpack.c.h.b16 %v2391
    %v2720 = vunpack.c.l.b16 %v2392
    %v2721 = vunpack.c.h.b16 %v2392
    %v2722 = vunpack.c.l.b16 %v2393
    %v2723 = vunpack.c.h.b16 %v2393
    %v2724 = vunpack.c.l.b16 %v2394
    %v2725 = vunpack.c.h.b16 %v2394
    %v2726 = vunpack.c.l.b16 %v2395
    %v2727 = vunpack.c.h.b16 %v2395
    %v2728 = vunpack.c.l.b16 %v2396
    %v2729 = vunpack.c.h.b16 %v2396
    %v2730 = vunpack.c.l.b16 %v2397
    %v2731 = vunpack.c.h.b16 %v2397
    %v2732 = vunpack.c.l.b16 %v2398
    %v2733 = vunpack.c.h.b16 %v2398
    %v2734 = vunpack.c.l.b16 %v2399
    %v2735 = vunpack.c.h.b16 %v2399
    %v2736 = vunpack.c.l.b16 %v2400
    %v2737 = vunpack.c.h.b16 %v2400
    %v2738 = vunpack.c.l.b16 %v2401
    %v2739 = vunpack.c.h.b16 %v2401
    %v2740 = vunpack.c.l.b16 %v2402
    %v2741 = vunpack.c.h.b16 %v2402
    %v2742 = vunpack.c.l.b16 %v2403
    %v2743 = vunpack.c.h.b16 %v2403
    %v2744 = vunpack.c.l.b16 %v2404
    %v2745 = vunpack.c.h.b16 %v2404
    %v2746 = vunpack.c.l.b16 %v2405
    %v2747 = vunpack.c.h.b16 %v2405
    %v2748 = vunpack.c.l.b16 %v2406
    %v2749 = vunpack.c.h.b16 %v2406
    %v2750 = vunpack.c.l.b16 %v2407
    %v2751 = vunpack.c.h.b16 %v2407
    %v2752 = vunpack.c.l.b16 %v2408
    %v2753 = vunpack.c.h.b16 %v2408
    %v2754 = vunpack.c.l.b16 %v2409
    %v2755 = vunpack.c.h.b16 %v2409
    %v2756 = vunpack.c.l.b16 %v2410
    %v2757 = vunpack.c.h.b16 %v2410
    %v2758 = vunpack.c.l.b16 %v2411
    %v2759 = vunpack.c.h.b16 %v2411
    %v2760 = vunpack.c.l.b16 %v2412
    %v2761 = vunpack.c.h.b16 %v2412
    %v2762 = vunpack.c.l.b16 %v2413
    %v2763 = vunpack.c.h.b16 %v2413
    %v2764 = vunpack.c.l.b16 %v2414
    %v2765 = vunpack.c.h.b16 %v2414
    %v2766 = vunpack.c.l.b16 %v2415
    %v2767 = vunpack.c.h.b16 %v2415
    %v2768 = vunpack.c.l.b16 %v2416
    %v2769 = vunpack.c.h.b16 %v2416
    %v2770 = vunpack.c.l.b16 %v2417
    %v2771 = vunpack.c.h.b16 %v2417
    %v2772 = vunpack.c.l.b16 %v2418
    %v2773 = vunpack.c.h.b16 %v2418
    %v2774 = vunpack.c.l.b16 %v2419
    %v2775 = vunpack.c.h.b16 %v2419
    %v2776 = vunpack.c.l.b16 %v2420
    %v2777 = vunpack.c.h.b16 %v2420
    %v2778 = vunpack.c.l.b16 %v2421
    %v2779 = vunpack.c.h.b16 %v2421
    %v2780 = vunpack.c.l.b16 %v2422
    %v2781 = vunpack.c.h.b16 %v2422
    %v2782 = vunpack.c.l.b16 %v2423
    %v2783 = vunpack.c.h.b16 %v2423
    %v2784 = vunpack.c.l.b16 %v2424
    %v2785 = vunpack.c.h.b16 %v2424
    %v2786 = vunpack.c.l.b16 %v2425
    %v2787 = vunpack.c.h.b16 %v2425
    %v2788 = vunpack.c.l.b16 %v2426
    %v2789 = vunpack.c.h.b16 %v2426
    %v2790 = vunpack.c.l.b16 %v2427
    %v2791 = vunpack.c.h.b16 %v2427
    %v2792 = vunpack.c.l.b16 %v2428
    %v2793 = vunpack.c.h.b16 %v2428
    %v2794 = vunpack.c.l.b16 %v2429
    %v2795 = vunpack.c.h.b16 %v2429
    %v2796 = vunpack.c.l.b16 %v2430
    %v2797 = vunpack.c.h.b16 %v2430
    %v2798 = vunpack.c.l.b16 %v2431
    %v2799 = vunpack.c.h.b16 %v2431
    %v2800 = vunpack.c.l.b16 %v2432
    %v2801 = vunpack.c.h.b16 %v2432
    %v2802 = vunpack.c.l.b16 %v2433
    %v2803 = vunpack.c.h.b16 %v2433
    %v2804 = vunpack.c.l.b16 %v2434
    %v2805 = vunpack.c.h.b16 %v2434
    %v2806 = vunpack.c.l.b16 %v2435
    %v2807 = vunpack.c.h.b16 %v2435
    %v2808 = vunpack.c.l.b16 %v2436
    %v2809 = vunpack.c.h.b16 %v2436
    %v2810 = vunpack.c.l.b16 %v2437
    %v2811 = vunpack.c.h.b16 %v2437
    %v2812 = vunpack.c.l.b16 %v2438
    %v2813 = vunpack.c.h.b16 %v2438
    %v2814 = vunpack.c.l.b16 %v2439
    %v2815 = vunpack.c.h.b16 %v2439
    %v2816 = vunpack.c.l.b16 %v2440
    %v2817 = vunpack.c.h.b16 %v2440
    %v2818 = vunpack.c.l.b16 %v2441
    %v2819 = vunpack.c.h.b16 %v2441
    %v2820 = vunpack.c.l.b16 %v2442
    %v2821 = vunpack.c.h.b16 %v2442
    %v2822 = vunpack.c.l.b16 %v2443
    %v2823 = vunpack.c.h.b16 %v2443
    %v2824 = vunpack.c.l.b16 %v2444
    %v2825 = vunpack.c.h.b16 %v2444
    %v2826 = vunpack.c.l.b16 %v2445
    %v2827 = vunpack.c.h.b16 %v2445
    %v2828 = vunpack.c.l.b16 %v2446
    %v2829 = vunpack.c.h.b16 %v2446
    %v2830 = vunpack.c.l.b16 %v2447
    %v2831 = vunpack.c.h.b16 %v2447
    %v2832 = vunpack.c.l.b16 %v2448
    %v2833 = vunpack.c.h.b16 %v2448
    %v2834 = vunpack.c.l.b16 %v2449
    %v2835 = vunpack.c.h.b16 %v2449
    %v2836 = vunpack.c.l.b16 %v2450
    %v2837 = vunpack.c.h.b16 %v2450
    %v2838 = vunpack.c.l.b16 %v2451
    %v2839 = vunpack.c.h.b16 %v2451
    %v2840 = vunpack.c.l.b16 %v2452
    %v2841 = vunpack.c.h.b16 %v2452
    %v2842 = vunpack.c.l.b16 %v2453
    %v2843 = vunpack.c.h.b16 %v2453
    %v2844 = vunpack.c.l.b16 %v2454
    %v2845 = vunpack.c.h.b16 %v2454
    %v2846 = vunpack.c.l.b16 %v2455
    %v2847 = vunpack.c.h.b16 %v2455
    %v2848 = vunpack.c.l.b16 %v2456
    %v2849 = vunpack.c.h.b16 %v2456
    %v2850 = vunpack.c.l.b16 %v2457
    %v2851 = vunpack.c.h.b16 %v2457
    %v2852 = vpack.c.b16 %v2600, %v2596
    %v2853 = vpack.c.b16 %v2601, %v2597
    %v2854 = vpack.c.b16 %v2602, %v2598
    %v2855 = vpack.c.b16 %v2603, %v2599
    %v2856 = vpack.c.b16 %v2608, %v2604
    %v2857 = vpack.c.b16 %v2609, %v2605
    %v2858 = vpack.c.b16 %v2610, %v2606
    %v2859 = vpack.c.b16 %v2611, %v2607
    %v2860 = vpack.c.b16 %v2616, %v2612
    %v2861 = vpack.c.b16 %v2617, %v2613
    %v2862 = vpack.c.b16 %v2618, %v2614
    %v2863 = vpack.c.b16 %v2619, %v2615
    %v2864 = vpack.c.b16 %v2624, %v2620
    %v2865 = vpack.c.b16 %v2625, %v2621
    %v2866 = vpack.c.b16 %v2626, %v2622
    %v2867 = vpack.c.b16 %v2627, %v2623
    %v2868 = vpack.c.b16 %v2632, %v2628
    %v2869 = vpack.c.b16 %v2633, %v2629
    %v2870 = vpack.c.b16 %v2634, %v2630
    %v2871 = vpack.c.b16 %v2635, %v2631
    %v2872 = vpack.c.b16 %v2640, %v2636
    %v2873 = vpack.c.b16 %v2641, %v2637
    %v2874 = vpack.c.b16 %v2642, %v2638
    %v2875 = vpack.c.b16 %v2643, %v2639
    %v2876 = vpack.c.b16 %v2648, %v2644
    %v2877 = vpack.c.b16 %v2649, %v2645
    %v2878 = vpack.c.b16 %v2650, %v2646
    %v2879 = vpack.c.b16 %v2651, %v2647
    %v2880 = vpack.c.b16 %v2656, %v2652
    %v2881 = vpack.c.b16 %v2657, %v2653
    %v2882 = vpack.c.b16 %v2658, %v2654
    %v2883 = vpack.c.b16 %v2659, %v2655
    %v2884 = vpack.c.b16 %v2664, %v2660
    %v2885 = vpack.c.b16 %v2665, %v2661
    %v2886 = vpack.c.b16 %v2666, %v2662
    %v2887 = vpack.c.b16 %v2667, %v2663
    %v2888 = vpack.c.b16 %v2672, %v2668
    %v2889 = vpack.c.b16 %v2673, %v2669
    %v2890 = vpack.c.b16 %v2674, %v2670
    %v2891 = vpack.c.b16 %v2675, %v2671
    %v2892 = vpack.c.b16 %v2680, %v2676
    %v2893 = vpack.c.b16 %v2681, %v2677
    %v2894 = vpack.c.b16 %v2682, %v2678
    %v2895 = vpack.c.b16 %v2683, %v2679
    %v2896 = vpack.c.b16 %v2688, %v2684
    %v2897 = vpack.c.b16 %v2689, %v2685
    %v2898 = vpack.c.b16 %v2690, %v2686
    %v2899 = vpack.c.b16 %v2691, %v2687
    %v2900 = vpack.c.b16 %v2696, %v2692
    %v2901 = vpack.c.b16 %v2697, %v2693
    %v2902 = vpack.c.b16 %v2698, %v2694
    %v2903 = vpack.c.b16 %v2699, %v2695
    %v2904 = vpack.c.b16 %v2704, %v2700
    %v2905 = vpack.c.b16 %v2705, %v2701
    %v2906 = vpack.c.b16 %v2706, %v2702
    %v2907 = vpack.c.b16 %v2707, %v2703
    %v2908 = vpack.c.b16 %v2712, %v2708
    %v2909 = vpack.c.b16 %v2713, %v2709
    %v2910 = vpack.c.b16 %v2714, %v2710
    %v2911 = vpack.c.b16 %v2715, %v2711
    %v2912 = vpack.c.b16 %v2720, %v2716
    %v2913 = vpack.c.b16 %v2721, %v2717
    %v2914 = vpack.c.b16 %v2722, %v2718
    %v2915 = vpack.c.b16 %v2723, %v2719
    %v2916 = vpack.c.b16 %v2728, %v2724
    %v2917 = vpack.c.b16 %v2729, %v2725
    %v2918 = vpack.c.b16 %v2730, %v2726
    %v2919 = vpack.c.b16 %v2731, %v2727
    %v2920 = vpack.c.b16 %v2736, %v2732
    %v2921 = vpack.c.b16 %v2737, %v2733
    %v2922 = vpack.c.b16 %v2738, %v2734
    %v2923 = vpack.c.b16 %v2739, %v2735
    %v2924 = vpack.c.b16 %v2744, %v2740
    %v2925 = vpack.c.b16 %v2745, %v2741
    %v2926 = vpack.c.b16 %v2746, %v2742
    %v2927 = vpack.c.b16 %v2747, %v2743
    %v2928 = vpack.c.b16 %v2752, %v2748
    %v2929 = vpack.c.b16 %v2753, %v2749
    %v2930 = vpack.c.b16 %v2754, %v2750
    %v2931 = vpack.c.b16 %v2755, %v2751
    %v2932 = vpack.c.b16 %v2760, %v2756
    %v2933 = vpack.c.b16 %v2761, %v2757
    %v2934 = vpack.c.b16 %v2762, %v2758
    %v2935 = vpack.c.b16 %v2763, %v2759
    %v2936 = vpack.c.b16 %v2768, %v2764
    %v2937 = vpack.c.b16 %v2769, %v2765
    %v2938 = vpack.c.b16 %v2770, %v2766
    %v2939 = vpack.c.b16 %v2771, %v2767
    %v2940 = vpack.c.b16 %v2776, %v2772
    %v2941 = vpack.c.b16 %v2777, %v2773
    %v2942 = vpack.c.b16 %v2778, %v2774
    %v2943 = vpack.c.b16 %v2779, %v2775
    %v2944 = vpack.c.b16 %v2784, %v2780
    %v2945 = vpack.c.b16 %v2785, %v2781
    %v2946 = vpack.c.b16 %v2786, %v2782
    %v2947 = vpack.c.b16 %v2787, %v2783
    %v2948 = vpack.c.b16 %v2792, %v2788
    %v2949 = vpack.c.b16 %v2793, %v2789
    %v2950 = vpack.c.b16 %v2794, %v2790
    %v2951 = vpack.c.b16 %v2795, %v2791
    %v2952 = vpack.c.b16 %v2800, %v2796
    %v2953 = vpack.c.b16 %v2801, %v2797
    %v2954 = vpack.c.b16 %v2802, %v2798
    %v2955 = vpack.c.b16 %v2803, %v2799
    %v2956 = vpack.c.b16 %v2808, %v2804
    %v2957 = vpack.c.b16 %v2809, %v2805
    %v2958 = vpack.c.b16 %v2810, %v2806
    %v2959 = vpack.c.b16 %v2811, %v2807
    %v2960 = vpack.c.b16 %v2816, %v2812
    %v2961 = vpack.c.b16 %v2817, %v2813
    %v2962 = vpack.c.b16 %v2818, %v2814
    %v2963 = vpack.c.b16 %v2819, %v2815
    %v2964 = vpack.c.b16 %v2824, %v2820
    %v2965 = vpack.c.b16 %v2825, %v2821
    %v2966 = vpack.c.b16 %v2826, %v2822
    %v2967 = vpack.c.b16 %v2827, %v2823
    %v2968 = vpack.c.b16 %v2832, %v2828
    %v2969 = vpack.c.b16 %v2833, %v2829
    %v2970 = vpack.c.b16 %v2834, %v2830
    %v2971 = vpack.c.b16 %v2835, %v2831
    %v2972 = vpack.c.b16 %v2840, %v2836
    %v2973 = vpack.c.b16 %v2841, %v2837
    %v2974 = vpack.c.b16 %v2842, %v2838
    %v2975 = vpack.c.b16 %v2843, %v2839
    %v2976 = vpack.c.b16 %v2848, %v2844
    %v2977 = vpack.c.b16 %v2849, %v2845
    %v2978 = vpack.c.b16 %v2850, %v2846
    %v2979 = vpack.c.b16 %v2851, %v2847
    %3108 = vmatpush.bf16.msra.mxu0 %v2880
    %3109 = vmatpush.bf16.msra.mxu0 %v2876
    %3110 = vmatpush.bf16.msra.mxu0 %v2872
    %3111 = vmatpush.bf16.msra.mxu0 %v2868
    %3112 = vmatpush.bf16.msra.mxu0 %v2864
    %3113 = vmatpush.bf16.msra.mxu0 %v2860
    %3114 = vmatpush.bf16.msra.mxu0 %v2856
    %3115 = vmatpush.bf16.msra.mxu0 %v2852
    %3116 = vmatmul.bf16.gmra.mxu0 %v2326
    %v3117 = vpop.f32.mrf.mxu0
    %v3118 = vadd.f32 %v2460, %v3117
    %v3119 = vpop.f32.mrf.mxu0
    %v3120 = vadd.f32 %v2460, %v3119
    %3121 = vdwg.mxu0
    %3122 = vmatpush.bf16.msra.mxu0 %v2912
    %3123 = vmatpush.bf16.msra.mxu0 %v2908
    %3124 = vmatpush.bf16.msra.mxu0 %v2904
    %3125 = vmatpush.bf16.msra.mxu0 %v2900
    %3126 = vmatpush.bf16.msra.mxu0 %v2896
    %3127 = vmatpush.bf16.msra.mxu0 %v2892
    %3128 = vmatpush.bf16.msra.mxu0 %v2888
    %3129 = vmatpush.bf16.msra.mxu0 %v2884
    %3130 = vmatmul.bf16.gmra.mxu0 %v2327
    %v3131 = vpop.f32.mrf.mxu0
    %v3132 = vadd.f32 %v3118, %v3131
    %v3133 = vpop.f32.mrf.mxu0
    %v3134 = vadd.f32 %v3120, %v3133
    %3135 = vdwg.mxu0
    %3136 = vmatpush.bf16.msra.mxu0 %v2944
    %3137 = vmatpush.bf16.msra.mxu0 %v2940
    %3138 = vmatpush.bf16.msra.mxu0 %v2936
    %3139 = vmatpush.bf16.msra.mxu0 %v2932
    %3140 = vmatpush.bf16.msra.mxu0 %v2928
    %3141 = vmatpush.bf16.msra.mxu0 %v2924
    %3142 = vmatpush.bf16.msra.mxu0 %v2920
    %3143 = vmatpush.bf16.msra.mxu0 %v2916
    %3144 = vmatmul.bf16.gmra.mxu0 %v2328
    %v3145 = vpop.f32.mrf.mxu0
    %v3146 = vadd.f32 %v3132, %v3145
    %v3147 = vpop.f32.mrf.mxu0
    %v3148 = vadd.f32 %v3134, %v3147
    %3149 = vdwg.mxu0
    %3150 = vmatpush.bf16.msra.mxu0 %v2976
    %3151 = vmatpush.bf16.msra.mxu0 %v2972
    %3152 = vmatpush.bf16.msra.mxu0 %v2968
    %3153 = vmatpush.bf16.msra.mxu0 %v2964
    %3154 = vmatpush.bf16.msra.mxu0 %v2960
    %3155 = vmatpush.bf16.msra.mxu0 %v2956
    %3156 = vmatpush.bf16.msra.mxu0 %v2952
    %3157 = vmatpush.bf16.msra.mxu0 %v2948
    %3158 = vmatmul.bf16.gmra.mxu0 %v2329
    %v3159 = vpop.f32.mrf.mxu0
    %v3160 = vadd.f32 %v3146, %v3159
    %v3161 = vpop.f32.mrf.mxu0
    %v3162 = vadd.f32 %v3148, %v3161
    %3163 = vdwg.mxu0
    %3164 = vmatpush.bf16.msra.mxu0 %v2881
    %3165 = vmatpush.bf16.msra.mxu0 %v2877
    %3166 = vmatpush.bf16.msra.mxu0 %v2873
    %3167 = vmatpush.bf16.msra.mxu0 %v2869
    %3168 = vmatpush.bf16.msra.mxu0 %v2865
    %3169 = vmatpush.bf16.msra.mxu0 %v2861
    %3170 = vmatpush.bf16.msra.mxu0 %v2857
    %3171 = vmatpush.bf16.msra.mxu0 %v2853
    %3172 = vmatmul.bf16.gmra.mxu0 %v2326
    %v3173 = vpop.f32.mrf.mxu0
    %v3174 = vadd.f32 %v2461, %v3173
    %v3175 = vpop.f32.mrf.mxu0
    %v3176 = vadd.f32 %v2461, %v3175
    %3177 = vdwg.mxu0
    %3178 = vmatpush.bf16.msra.mxu0 %v2913
    %3179 = vmatpush.bf16.msra.mxu0 %v2909
    %3180 = vmatpush.bf16.msra.mxu0 %v2905
    %3181 = vmatpush.bf16.msra.mxu0 %v2901
    %3182 = vmatpush.bf16.msra.mxu0 %v2897
    %3183 = vmatpush.bf16.msra.mxu0 %v2893
    %3184 = vmatpush.bf16.msra.mxu0 %v2889
    %3185 = vmatpush.bf16.msra.mxu0 %v2885
    %3186 = vmatmul.bf16.gmra.mxu0 %v2327
    %v3187 = vpop.f32.mrf.mxu0
    %v3188 = vadd.f32 %v3174, %v3187
    %v3189 = vpop.f32.mrf.mxu0
    %v3190 = vadd.f32 %v3176, %v3189
    %3191 = vdwg.mxu0
    %3192 = vmatpush.bf16.msra.mxu0 %v2945
    %3193 = vmatpush.bf16.msra.mxu0 %v2941
    %3194 = vmatpush.bf16.msra.mxu0 %v2937
    %3195 = vmatpush.bf16.msra.mxu0 %v2933
    %3196 = vmatpush.bf16.msra.mxu0 %v2929
    %3197 = vmatpush.bf16.msra.mxu0 %v2925
    %3198 = vmatpush.bf16.msra.mxu0 %v2921
    %3199 = vmatpush.bf16.msra.mxu0 %v2917
    %3200 = vmatmul.bf16.gmra.mxu0 %v2328
    %v3201 = vpop.f32.mrf.mxu0
    %v3202 = vadd.f32 %v3188, %v3201
    %v3203 = vpop.f32.mrf.mxu0
    %v3204 = vadd.f32 %v3190, %v3203
    %3205 = vdwg.mxu0
    %3206 = vmatpush.bf16.msra.mxu0 %v2977
    %3207 = vmatpush.bf16.msra.mxu0 %v2973
    %3208 = vmatpush.bf16.msra.mxu0 %v2969
    %3209 = vmatpush.bf16.msra.mxu0 %v2965
    %3210 = vmatpush.bf16.msra.mxu0 %v2961
    %3211 = vmatpush.bf16.msra.mxu0 %v2957
    %3212 = vmatpush.bf16.msra.mxu0 %v2953
    %3213 = vmatpush.bf16.msra.mxu0 %v2949
    %3214 = vmatmul.bf16.gmra.mxu0 %v2329
    %v3215 = vpop.f32.mrf.mxu0
    %v3216 = vadd.f32 %v3202, %v3215
    %v3217 = vpop.f32.mrf.mxu0
    %v3218 = vadd.f32 %v3204, %v3217
    %3219 = vdwg.mxu0
    %3220 = vmatpush.bf16.msra.mxu0 %v2882
    %3221 = vmatpush.bf16.msra.mxu0 %v2878
    %3222 = vmatpush.bf16.msra.mxu0 %v2874
    %3223 = vmatpush.bf16.msra.mxu0 %v2870
    %3224 = vmatpush.bf16.msra.mxu0 %v2866
    %3225 = vmatpush.bf16.msra.mxu0 %v2862
    %3226 = vmatpush.bf16.msra.mxu0 %v2858
    %3227 = vmatpush.bf16.msra.mxu0 %v2854
    %3228 = vmatmul.bf16.gmra.mxu0 %v2326
    %v3229 = vpop.f32.mrf.mxu0
    %v3230 = vadd.f32 %v2462, %v3229
    %v3231 = vpop.f32.mrf.mxu0
    %v3232 = vadd.f32 %v2462, %v3231
    %3233 = vdwg.mxu0
    %3234 = vmatpush.bf16.msra.mxu0 %v2914
    %3235 = vmatpush.bf16.msra.mxu0 %v2910
    %3236 = vmatpush.bf16.msra.mxu0 %v2906
    %3237 = vmatpush.bf16.msra.mxu0 %v2902
    %3238 = vmatpush.bf16.msra.mxu0 %v2898
    %3239 = vmatpush.bf16.msra.mxu0 %v2894
    %3240 = vmatpush.bf16.msra.mxu0 %v2890
    %3241 = vmatpush.bf16.msra.mxu0 %v2886
    %3242 = vmatmul.bf16.gmra.mxu0 %v2327
    %v3243 = vpop.f32.mrf.mxu0
    %v3244 = vadd.f32 %v3230, %v3243
    %v3245 = vpop.f32.mrf.mxu0
    %v3246 = vadd.f32 %v3232, %v3245
    %3247 = vdwg.mxu0
    %3248 = vmatpush.bf16.msra.mxu0 %v2946
    %3249 = vmatpush.bf16.msra.mxu0 %v2942
    %3250 = vmatpush.bf16.msra.mxu0 %v2938
    %3251 = vmatpush.bf16.msra.mxu0 %v2934
    %3252 = vmatpush.bf16.msra.mxu0 %v2930
    %3253 = vmatpush.bf16.msra.mxu0 %v2926
    %3254 = vmatpush.bf16.msra.mxu0 %v2922
    %3255 = vmatpush.bf16.msra.mxu0 %v2918
    %3256 = vmatmul.bf16.gmra.mxu0 %v2328
    %v3257 = vpop.f32.mrf.mxu0
    %v3258 = vadd.f32 %v3244, %v3257
    %v3259 = vpop.f32.mrf.mxu0
    %v3260 = vadd.f32 %v3246, %v3259
    %3261 = vdwg.mxu0
    %3262 = vmatpush.bf16.msra.mxu0 %v2978
    %3263 = vmatpush.bf16.msra.mxu0 %v2974
    %3264 = vmatpush.bf16.msra.mxu0 %v2970
    %3265 = vmatpush.bf16.msra.mxu0 %v2966
    %3266 = vmatpush.bf16.msra.mxu0 %v2962
    %3267 = vmatpush.bf16.msra.mxu0 %v2958
    %3268 = vmatpush.bf16.msra.mxu0 %v2954
    %3269 = vmatpush.bf16.msra.mxu0 %v2950
    %3270 = vmatmul.bf16.gmra.mxu0 %v2329
    %v3271 = vpop.f32.mrf.mxu0
    %v3272 = vadd.f32 %v3258, %v3271
    %v3273 = vpop.f32.mrf.mxu0
    %v3274 = vadd.f32 %v3260, %v3273
    %3275 = vdwg.mxu0
    %3276 = vmatpush.bf16.msra.mxu0 %v2883
    %3277 = vmatpush.bf16.msra.mxu0 %v2879
    %3278 = vmatpush.bf16.msra.mxu0 %v2875
    %3279 = vmatpush.bf16.msra.mxu0 %v2871
    %3280 = vmatpush.bf16.msra.mxu0 %v2867
    %3281 = vmatpush.bf16.msra.mxu0 %v2863
    %3282 = vmatpush.bf16.msra.mxu0 %v2859
    %3283 = vmatpush.bf16.msra.mxu0 %v2855
    %3284 = vmatmul.bf16.gmra.mxu0 %v2326
    %v3285 = vpop.f32.mrf.mxu0
    %v3286 = vadd.f32 %v2463, %v3285
    %v3287 = vpop.f32.mrf.mxu0
    %v3288 = vadd.f32 %v2463, %v3287
    %3289 = vdwg.mxu0
    %3290 = vmatpush.bf16.msra.mxu0 %v2915
    %3291 = vmatpush.bf16.msra.mxu0 %v2911
    %3292 = vmatpush.bf16.msra.mxu0 %v2907
    %3293 = vmatpush.bf16.msra.mxu0 %v2903
    %3294 = vmatpush.bf16.msra.mxu0 %v2899
    %3295 = vmatpush.bf16.msra.mxu0 %v2895
    %3296 = vmatpush.bf16.msra.mxu0 %v2891
    %3297 = vmatpush.bf16.msra.mxu0 %v2887
    %3298 = vmatmul.bf16.gmra.mxu0 %v2327
    %v3299 = vpop.f32.mrf.mxu0
    %v3300 = vadd.f32 %v3286, %v3299
    %v3301 = vpop.f32.mrf.mxu0
    %v3302 = vadd.f32 %v3288, %v3301
    %3303 = vdwg.mxu0
    %3304 = vmatpush.bf16.msra.mxu0 %v2947
    %3305 = vmatpush.bf16.msra.mxu0 %v2943
    %3306 = vmatpush.bf16.msra.mxu0 %v2939
    %3307 = vmatpush.bf16.msra.mxu0 %v2935
    %3308 = vmatpush.bf16.msra.mxu0 %v2931
    %3309 = vmatpush.bf16.msra.mxu0 %v2927
    %3310 = vmatpush.bf16.msra.mxu0 %v2923
    %3311 = vmatpush.bf16.msra.mxu0 %v2919
    %3312 = vmatmul.bf16.gmra.mxu0 %v2328
    %v3313 = vpop.f32.mrf.mxu0
    %v3314 = vadd.f32 %v3300, %v3313
    %v3315 = vpop.f32.mrf.mxu0
    %v3316 = vadd.f32 %v3302, %v3315
    %3317 = vdwg.mxu0
    %3318 = vmatpush.bf16.msra.mxu0 %v2979
    %3319 = vmatpush.bf16.msra.mxu0 %v2975
    %3320 = vmatpush.bf16.msra.mxu0 %v2971
    %3321 = vmatpush.bf16.msra.mxu0 %v2967
    %3322 = vmatpush.bf16.msra.mxu0 %v2963
    %3323 = vmatpush.bf16.msra.mxu0 %v2959
    %3324 = vmatpush.bf16.msra.mxu0 %v2955
    %3325 = vmatpush.bf16.msra.mxu0 %v2951
    %3326 = vmatmul.bf16.gmra.mxu0 %v2329
    %v3327 = vpop.f32.mrf.mxu0
    %v3328 = vadd.f32 %v3314, %v3327
    %v3329 = vpop.f32.mrf.mxu0
    %v3330 = vadd.f32 %v3316, %v3329
    %3331 = vdwg.mxu0
    %v3332 = vmax.f32 %v3160, 0.0
    %v3333 = vmax.f32 %v3216, 0.0
    %v3334 = vmax.f32 %v3272, 0.0
    %v3335 = vmax.f32 %v3328, 0.0
    %v3336 = vmax.f32 %v3162, 0.0
    %v3337 = vmax.f32 %v3218, 0.0
    %v3338 = vmax.f32 %v3274, 0.0
    %v3339 = vmax.f32 %v3330, 0.0
    %v3340 = vpack.c.bf16 %v3336, %v3332
    %v3341 = vpack.c.bf16 %v3337, %v3333
    %v3342 = vpack.c.bf16 %v3338, %v3334
    %v3343 = vpack.c.bf16 %v3339, %v3335
    %v3344 = vld [vmem:[#allocation10] sm:$0xff]
    %v3345 = vld [vmem:[#allocation10 + $0x8] sm:$0xff]
    %v3346 = vld [vmem:[#allocation10 + $0x10] sm:$0xff]
    %v3347 = vld [vmem:[#allocation10 + $0x18] sm:$0xff]
    %v3348 = vld [vmem:[#allocation10 + $0x20] sm:$0xff]
    %v3349 = vld [vmem:[#allocation10 + $0x28] sm:$0xff]
    %v3350 = vld [vmem:[#allocation10 + $0x30] sm:$0xff]
    %v3351 = vld [vmem:[#allocation10 + $0x38] sm:$0xff]
    %v3352 = vld [vmem:[#allocation10 + $0x40] sm:$0xff]
    %v3353 = vld [vmem:[#allocation10 + $0x48] sm:$0xff]
    %v3354 = vld [vmem:[#allocation10 + $0x50] sm:$0xff]
    %v3355 = vld [vmem:[#allocation10 + $0x58] sm:$0xff]
    %v3356 = vld [vmem:[#allocation10 + $0x60] sm:$0xff]
    %v3357 = vld [vmem:[#allocation10 + $0x68] sm:$0xff]
    %v3358 = vld [vmem:[#allocation10 + $0x70] sm:$0xff]
    %v3359 = vld [vmem:[#allocation10 + $0x78] sm:$0xff]
    %v3360 = vld [vmem:[#allocation10 + $0x80] sm:$0xff]
    %v3361 = vld [vmem:[#allocation10 + $0x88] sm:$0xff]
    %v3362 = vld [vmem:[#allocation10 + $0x90] sm:$0xff]
    %v3363 = vld [vmem:[#allocation10 + $0x98] sm:$0xff]
    %v3364 = vld [vmem:[#allocation10 + $0xa0] sm:$0xff]
    %v3365 = vld [vmem:[#allocation10 + $0xa8] sm:$0xff]
    %v3366 = vld [vmem:[#allocation10 + $0xb0] sm:$0xff]
    %v3367 = vld [vmem:[#allocation10 + $0xb8] sm:$0xff]
    %v3368 = vld [vmem:[#allocation10 + $0xc0] sm:$0xff]
    %v3369 = vld [vmem:[#allocation10 + $0xc8] sm:$0xff]
    %v3370 = vld [vmem:[#allocation10 + $0xd0] sm:$0xff]
    %v3371 = vld [vmem:[#allocation10 + $0xd8] sm:$0xff]
    %v3372 = vld [vmem:[#allocation10 + $0xe0] sm:$0xff]
    %v3373 = vld [vmem:[#allocation10 + $0xe8] sm:$0xff]
    %v3374 = vld [vmem:[#allocation10 + $0xf0] sm:$0xff]
    %v3375 = vld [vmem:[#allocation10 + $0xf8] sm:$0xff]
    %v3376 = vld [vmem:[#allocation10 + $0x100] sm:$0xff]
    %v3377 = vld [vmem:[#allocation10 + $0x108] sm:$0xff]
    %v3378 = vld [vmem:[#allocation10 + $0x110] sm:$0xff]
    %v3379 = vld [vmem:[#allocation10 + $0x118] sm:$0xff]
    %v3380 = vld [vmem:[#allocation10 + $0x120] sm:$0xff]
    %v3381 = vld [vmem:[#allocation10 + $0x128] sm:$0xff]
    %v3382 = vld [vmem:[#allocation10 + $0x130] sm:$0xff]
    %v3383 = vld [vmem:[#allocation10 + $0x138] sm:$0xff]
    %v3384 = vld [vmem:[#allocation10 + $0x140] sm:$0xff]
    %v3385 = vld [vmem:[#allocation10 + $0x148] sm:$0xff]
    %v3386 = vld [vmem:[#allocation10 + $0x150] sm:$0xff]
    %v3387 = vld [vmem:[#allocation10 + $0x158] sm:$0xff]
    %v3388 = vld [vmem:[#allocation10 + $0x160] sm:$0xff]
    %v3389 = vld [vmem:[#allocation10 + $0x168] sm:$0xff]
    %v3390 = vld [vmem:[#allocation10 + $0x170] sm:$0xff]
    %v3391 = vld [vmem:[#allocation10 + $0x178] sm:$0xff]
    %v3392 = vld [vmem:[#allocation10 + $0x180] sm:$0xff]
    %v3393 = vld [vmem:[#allocation10 + $0x188] sm:$0xff]
    %v3394 = vld [vmem:[#allocation10 + $0x190] sm:$0xff]
    %v3395 = vld [vmem:[#allocation10 + $0x198] sm:$0xff]
    %v3396 = vld [vmem:[#allocation10 + $0x1a0] sm:$0xff]
    %v3397 = vld [vmem:[#allocation10 + $0x1a8] sm:$0xff]
    %v3398 = vld [vmem:[#allocation10 + $0x1b0] sm:$0xff]
    %v3399 = vld [vmem:[#allocation10 + $0x1b8] sm:$0xff]
    %v3400 = vld [vmem:[#allocation10 + $0x1c0] sm:$0xff]
    %v3401 = vld [vmem:[#allocation10 + $0x1c8] sm:$0xff]
    %v3402 = vld [vmem:[#allocation10 + $0x1d0] sm:$0xff]
    %v3403 = vld [vmem:[#allocation10 + $0x1d8] sm:$0xff]
    %v3404 = vld [vmem:[#allocation10 + $0x1e0] sm:$0xff]
    %v3405 = vld [vmem:[#allocation10 + $0x1e8] sm:$0xff]
    %v3406 = vld [vmem:[#allocation10 + $0x1f0] sm:$0xff]
    %v3407 = vld [vmem:[#allocation10 + $0x1f8] sm:$0xff]
    %v3408 = vld [vmem:[#allocation10 + $0x200] sm:$0xff]
    %v3409 = vld [vmem:[#allocation10 + $0x208] sm:$0xff]
    %v3410 = vld [vmem:[#allocation10 + $0x210] sm:$0xff]
    %v3411 = vld [vmem:[#allocation10 + $0x218] sm:$0xff]
    %v3412 = vld [vmem:[#allocation10 + $0x220] sm:$0xff]
    %v3413 = vld [vmem:[#allocation10 + $0x228] sm:$0xff]
    %v3414 = vld [vmem:[#allocation10 + $0x230] sm:$0xff]
    %v3415 = vld [vmem:[#allocation10 + $0x238] sm:$0xff]
    %v3416 = vld [vmem:[#allocation10 + $0x240] sm:$0xff]
    %v3417 = vld [vmem:[#allocation10 + $0x248] sm:$0xff]
    %v3418 = vld [vmem:[#allocation10 + $0x250] sm:$0xff]
    %v3419 = vld [vmem:[#allocation10 + $0x258] sm:$0xff]
    %v3420 = vld [vmem:[#allocation10 + $0x260] sm:$0xff]
    %v3421 = vld [vmem:[#allocation10 + $0x268] sm:$0xff]
    %v3422 = vld [vmem:[#allocation10 + $0x270] sm:$0xff]
    %v3423 = vld [vmem:[#allocation10 + $0x278] sm:$0xff]
    %v3424 = vld [vmem:[#allocation10 + $0x280] sm:$0xff]
    %v3425 = vld [vmem:[#allocation10 + $0x288] sm:$0xff]
    %v3426 = vld [vmem:[#allocation10 + $0x290] sm:$0xff]
    %v3427 = vld [vmem:[#allocation10 + $0x298] sm:$0xff]
    %v3428 = vld [vmem:[#allocation10 + $0x2a0] sm:$0xff]
    %v3429 = vld [vmem:[#allocation10 + $0x2a8] sm:$0xff]
    %v3430 = vld [vmem:[#allocation10 + $0x2b0] sm:$0xff]
    %v3431 = vld [vmem:[#allocation10 + $0x2b8] sm:$0xff]
    %v3432 = vld [vmem:[#allocation10 + $0x2c0] sm:$0xff]
    %v3433 = vld [vmem:[#allocation10 + $0x2c8] sm:$0xff]
    %v3434 = vld [vmem:[#allocation10 + $0x2d0] sm:$0xff]
    %v3435 = vld [vmem:[#allocation10 + $0x2d8] sm:$0xff]
    %v3436 = vld [vmem:[#allocation10 + $0x2e0] sm:$0xff]
    %v3437 = vld [vmem:[#allocation10 + $0x2e8] sm:$0xff]
    %v3438 = vld [vmem:[#allocation10 + $0x2f0] sm:$0xff]
    %v3439 = vld [vmem:[#allocation10 + $0x2f8] sm:$0xff]
    %v3440 = vld [vmem:[#allocation10 + $0x300] sm:$0xff]
    %v3441 = vld [vmem:[#allocation10 + $0x308] sm:$0xff]
    %v3442 = vld [vmem:[#allocation10 + $0x310] sm:$0xff]
    %v3443 = vld [vmem:[#allocation10 + $0x318] sm:$0xff]
    %v3444 = vld [vmem:[#allocation10 + $0x320] sm:$0xff]
    %v3445 = vld [vmem:[#allocation10 + $0x328] sm:$0xff]
    %v3446 = vld [vmem:[#allocation10 + $0x330] sm:$0xff]
    %v3447 = vld [vmem:[#allocation10 + $0x338] sm:$0xff]
    %v3448 = vld [vmem:[#allocation10 + $0x340] sm:$0xff]
    %v3449 = vld [vmem:[#allocation10 + $0x348] sm:$0xff]
    %v3450 = vld [vmem:[#allocation10 + $0x350] sm:$0xff]
    %v3451 = vld [vmem:[#allocation10 + $0x358] sm:$0xff]
    %v3452 = vld [vmem:[#allocation10 + $0x360] sm:$0xff]
    %v3453 = vld [vmem:[#allocation10 + $0x368] sm:$0xff]
    %v3454 = vld [vmem:[#allocation10 + $0x370] sm:$0xff]
    %v3455 = vld [vmem:[#allocation10 + $0x378] sm:$0xff]
    %v3456 = vld [vmem:[#allocation10 + $0x380] sm:$0xff]
    %v3457 = vld [vmem:[#allocation10 + $0x388] sm:$0xff]
    %v3458 = vld [vmem:[#allocation10 + $0x390] sm:$0xff]
    %v3459 = vld [vmem:[#allocation10 + $0x398] sm:$0xff]
    %v3460 = vld [vmem:[#allocation10 + $0x3a0] sm:$0xff]
    %v3461 = vld [vmem:[#allocation10 + $0x3a8] sm:$0xff]
    %v3462 = vld [vmem:[#allocation10 + $0x3b0] sm:$0xff]
    %v3463 = vld [vmem:[#allocation10 + $0x3b8] sm:$0xff]
    %v3464 = vld [vmem:[#allocation10 + $0x3c0] sm:$0xff]
    %v3465 = vld [vmem:[#allocation10 + $0x3c8] sm:$0xff]
    %v3466 = vld [vmem:[#allocation10 + $0x3d0] sm:$0xff]
    %v3467 = vld [vmem:[#allocation10 + $0x3d8] sm:$0xff]
    %v3468 = vld [vmem:[#allocation10 + $0x3e0] sm:$0xff]
    %v3469 = vld [vmem:[#allocation10 + $0x3e8] sm:$0xff]
    %v3470 = vld [vmem:[#allocation10 + $0x3f0] sm:$0xff]
    %v3471 = vld [vmem:[#allocation10 + $0x3f8] sm:$0xff]
    %v3472 = vld [vmem:[%s10] sm:$0xf]
    %v3474 = vperm.slane %v3472, 0
    %v3475 = vperm.slane %v3472, 1
    %v3476 = vperm.slane %v3472, 2
    %v3477 = vperm.slane %v3472, 3
    %v3610 = vunpack.c.l.b16 %v3344
    %v3611 = vunpack.c.h.b16 %v3344
    %v3612 = vunpack.c.l.b16 %v3345
    %v3613 = vunpack.c.h.b16 %v3345
    %v3614 = vunpack.c.l.b16 %v3346
    %v3615 = vunpack.c.h.b16 %v3346
    %v3616 = vunpack.c.l.b16 %v3347
    %v3617 = vunpack.c.h.b16 %v3347
    %v3618 = vunpack.c.l.b16 %v3348
    %v3619 = vunpack.c.h.b16 %v3348
    %v3620 = vunpack.c.l.b16 %v3349
    %v3621 = vunpack.c.h.b16 %v3349
    %v3622 = vunpack.c.l.b16 %v3350
    %v3623 = vunpack.c.h.b16 %v3350
    %v3624 = vunpack.c.l.b16 %v3351
    %v3625 = vunpack.c.h.b16 %v3351
    %v3626 = vunpack.c.l.b16 %v3352
    %v3627 = vunpack.c.h.b16 %v3352
    %v3628 = vunpack.c.l.b16 %v3353
    %v3629 = vunpack.c.h.b16 %v3353
    %v3630 = vunpack.c.l.b16 %v3354
    %v3631 = vunpack.c.h.b16 %v3354
    %v3632 = vunpack.c.l.b16 %v3355
    %v3633 = vunpack.c.h.b16 %v3355
    %v3634 = vunpack.c.l.b16 %v3356
    %v3635 = vunpack.c.h.b16 %v3356
    %v3636 = vunpack.c.l.b16 %v3357
    %v3637 = vunpack.c.h.b16 %v3357
    %v3638 = vunpack.c.l.b16 %v3358
    %v3639 = vunpack.c.h.b16 %v3358
    %v3640 = vunpack.c.l.b16 %v3359
    %v3641 = vunpack.c.h.b16 %v3359
    %v3642 = vunpack.c.l.b16 %v3360
    %v3643 = vunpack.c.h.b16 %v3360
    %v3644 = vunpack.c.l.b16 %v3361
    %v3645 = vunpack.c.h.b16 %v3361
    %v3646 = vunpack.c.l.b16 %v3362
    %v3647 = vunpack.c.h.b16 %v3362
    %v3648 = vunpack.c.l.b16 %v3363
    %v3649 = vunpack.c.h.b16 %v3363
    %v3650 = vunpack.c.l.b16 %v3364
    %v3651 = vunpack.c.h.b16 %v3364
    %v3652 = vunpack.c.l.b16 %v3365
    %v3653 = vunpack.c.h.b16 %v3365
    %v3654 = vunpack.c.l.b16 %v3366
    %v3655 = vunpack.c.h.b16 %v3366
    %v3656 = vunpack.c.l.b16 %v3367
    %v3657 = vunpack.c.h.b16 %v3367
    %v3658 = vunpack.c.l.b16 %v3368
    %v3659 = vunpack.c.h.b16 %v3368
    %v3660 = vunpack.c.l.b16 %v3369
    %v3661 = vunpack.c.h.b16 %v3369
    %v3662 = vunpack.c.l.b16 %v3370
    %v3663 = vunpack.c.h.b16 %v3370
    %v3664 = vunpack.c.l.b16 %v3371
    %v3665 = vunpack.c.h.b16 %v3371
    %v3666 = vunpack.c.l.b16 %v3372
    %v3667 = vunpack.c.h.b16 %v3372
    %v3668 = vunpack.c.l.b16 %v3373
    %v3669 = vunpack.c.h.b16 %v3373
    %v3670 = vunpack.c.l.b16 %v3374
    %v3671 = vunpack.c.h.b16 %v3374
    %v3672 = vunpack.c.l.b16 %v3375
    %v3673 = vunpack.c.h.b16 %v3375
    %v3674 = vunpack.c.l.b16 %v3376
    %v3675 = vunpack.c.h.b16 %v3376
    %v3676 = vunpack.c.l.b16 %v3377
    %v3677 = vunpack.c.h.b16 %v3377
    %v3678 = vunpack.c.l.b16 %v3378
    %v3679 = vunpack.c.h.b16 %v3378
    %v3680 = vunpack.c.l.b16 %v3379
    %v3681 = vunpack.c.h.b16 %v3379
    %v3682 = vunpack.c.l.b16 %v3380
    %v3683 = vunpack.c.h.b16 %v3380
    %v3684 = vunpack.c.l.b16 %v3381
    %v3685 = vunpack.c.h.b16 %v3381
    %v3686 = vunpack.c.l.b16 %v3382
    %v3687 = vunpack.c.h.b16 %v3382
    %v3688 = vunpack.c.l.b16 %v3383
    %v3689 = vunpack.c.h.b16 %v3383
    %v3690 = vunpack.c.l.b16 %v3384
    %v3691 = vunpack.c.h.b16 %v3384
    %v3692 = vunpack.c.l.b16 %v3385
    %v3693 = vunpack.c.h.b16 %v3385
    %v3694 = vunpack.c.l.b16 %v3386
    %v3695 = vunpack.c.h.b16 %v3386
    %v3696 = vunpack.c.l.b16 %v3387
    %v3697 = vunpack.c.h.b16 %v3387
    %v3698 = vunpack.c.l.b16 %v3388
    %v3699 = vunpack.c.h.b16 %v3388
    %v3700 = vunpack.c.l.b16 %v3389
    %v3701 = vunpack.c.h.b16 %v3389
    %v3702 = vunpack.c.l.b16 %v3390
    %v3703 = vunpack.c.h.b16 %v3390
    %v3704 = vunpack.c.l.b16 %v3391
    %v3705 = vunpack.c.h.b16 %v3391
    %v3706 = vunpack.c.l.b16 %v3392
    %v3707 = vunpack.c.h.b16 %v3392
    %v3708 = vunpack.c.l.b16 %v3393
    %v3709 = vunpack.c.h.b16 %v3393
    %v3710 = vunpack.c.l.b16 %v3394
    %v3711 = vunpack.c.h.b16 %v3394
    %v3712 = vunpack.c.l.b16 %v3395
    %v3713 = vunpack.c.h.b16 %v3395
    %v3714 = vunpack.c.l.b16 %v3396
    %v3715 = vunpack.c.h.b16 %v3396
    %v3716 = vunpack.c.l.b16 %v3397
    %v3717 = vunpack.c.h.b16 %v3397
    %v3718 = vunpack.c.l.b16 %v3398
    %v3719 = vunpack.c.h.b16 %v3398
    %v3720 = vunpack.c.l.b16 %v3399
    %v3721 = vunpack.c.h.b16 %v3399
    %v3722 = vunpack.c.l.b16 %v3400
    %v3723 = vunpack.c.h.b16 %v3400
    %v3724 = vunpack.c.l.b16 %v3401
    %v3725 = vunpack.c.h.b16 %v3401
    %v3726 = vunpack.c.l.b16 %v3402
    %v3727 = vunpack.c.h.b16 %v3402
    %v3728 = vunpack.c.l.b16 %v3403
    %v3729 = vunpack.c.h.b16 %v3403
    %v3730 = vunpack.c.l.b16 %v3404
    %v3731 = vunpack.c.h.b16 %v3404
    %v3732 = vunpack.c.l.b16 %v3405
    %v3733 = vunpack.c.h.b16 %v3405
    %v3734 = vunpack.c.l.b16 %v3406
    %v3735 = vunpack.c.h.b16 %v3406
    %v3736 = vunpack.c.l.b16 %v3407
    %v3737 = vunpack.c.h.b16 %v3407
    %v3738 = vunpack.c.l.b16 %v3408
    %v3739 = vunpack.c.h.b16 %v3408
    %v3740 = vunpack.c.l.b16 %v3409
    %v3741 = vunpack.c.h.b16 %v3409
    %v3742 = vunpack.c.l.b16 %v3410
    %v3743 = vunpack.c.h.b16 %v3410
    %v3744 = vunpack.c.l.b16 %v3411
    %v3745 = vunpack.c.h.b16 %v3411
    %v3746 = vunpack.c.l.b16 %v3412
    %v3747 = vunpack.c.h.b16 %v3412
    %v3748 = vunpack.c.l.b16 %v3413
    %v3749 = vunpack.c.h.b16 %v3413
    %v3750 = vunpack.c.l.b16 %v3414
    %v3751 = vunpack.c.h.b16 %v3414
    %v3752 = vunpack.c.l.b16 %v3415
    %v3753 = vunpack.c.h.b16 %v3415
    %v3754 = vunpack.c.l.b16 %v3416
    %v3755 = vunpack.c.h.b16 %v3416
    %v3756 = vunpack.c.l.b16 %v3417
    %v3757 = vunpack.c.h.b16 %v3417
    %v3758 = vunpack.c.l.b16 %v3418
    %v3759 = vunpack.c.h.b16 %v3418
    %v3760 = vunpack.c.l.b16 %v3419
    %v3761 = vunpack.c.h.b16 %v3419
    %v3762 = vunpack.c.l.b16 %v3420
    %v3763 = vunpack.c.h.b16 %v3420
    %v3764 = vunpack.c.l.b16 %v3421
    %v3765 = vunpack.c.h.b16 %v3421
    %v3766 = vunpack.c.l.b16 %v3422
    %v3767 = vunpack.c.h.b16 %v3422
    %v3768 = vunpack.c.l.b16 %v3423
    %v3769 = vunpack.c.h.b16 %v3423
    %v3770 = vunpack.c.l.b16 %v3424
    %v3771 = vunpack.c.h.b16 %v3424
    %v3772 = vunpack.c.l.b16 %v3425
    %v3773 = vunpack.c.h.b16 %v3425
    %v3774 = vunpack.c.l.b16 %v3426
    %v3775 = vunpack.c.h.b16 %v3426
    %v3776 = vunpack.c.l.b16 %v3427
    %v3777 = vunpack.c.h.b16 %v3427
    %v3778 = vunpack.c.l.b16 %v3428
    %v3779 = vunpack.c.h.b16 %v3428
    %v3780 = vunpack.c.l.b16 %v3429
    %v3781 = vunpack.c.h.b16 %v3429
    %v3782 = vunpack.c.l.b16 %v3430
    %v3783 = vunpack.c.h.b16 %v3430
    %v3784 = vunpack.c.l.b16 %v3431
    %v3785 = vunpack.c.h.b16 %v3431
    %v3786 = vunpack.c.l.b16 %v3432
    %v3787 = vunpack.c.h.b16 %v3432
    %v3788 = vunpack.c.l.b16 %v3433
    %v3789 = vunpack.c.h.b16 %v3433
    %v3790 = vunpack.c.l.b16 %v3434
    %v3791 = vunpack.c.h.b16 %v3434
    %v3792 = vunpack.c.l.b16 %v3435
    %v3793 = vunpack.c.h.b16 %v3435
    %v3794 = vunpack.c.l.b16 %v3436
    %v3795 = vunpack.c.h.b16 %v3436
    %v3796 = vunpack.c.l.b16 %v3437
    %v3797 = vunpack.c.h.b16 %v3437
    %v3798 = vunpack.c.l.b16 %v3438
    %v3799 = vunpack.c.h.b16 %v3438
    %v3800 = vunpack.c.l.b16 %v3439
    %v3801 = vunpack.c.h.b16 %v3439
    %v3802 = vunpack.c.l.b16 %v3440
    %v3803 = vunpack.c.h.b16 %v3440
    %v3804 = vunpack.c.l.b16 %v3441
    %v3805 = vunpack.c.h.b16 %v3441
    %v3806 = vunpack.c.l.b16 %v3442
    %v3807 = vunpack.c.h.b16 %v3442
    %v3808 = vunpack.c.l.b16 %v3443
    %v3809 = vunpack.c.h.b16 %v3443
    %v3810 = vunpack.c.l.b16 %v3444
    %v3811 = vunpack.c.h.b16 %v3444
    %v3812 = vunpack.c.l.b16 %v3445
    %v3813 = vunpack.c.h.b16 %v3445
    %v3814 = vunpack.c.l.b16 %v3446
    %v3815 = vunpack.c.h.b16 %v3446
    %v3816 = vunpack.c.l.b16 %v3447
    %v3817 = vunpack.c.h.b16 %v3447
    %v3818 = vunpack.c.l.b16 %v3448
    %v3819 = vunpack.c.h.b16 %v3448
    %v3820 = vunpack.c.l.b16 %v3449
    %v3821 = vunpack.c.h.b16 %v3449
    %v3822 = vunpack.c.l.b16 %v3450
    %v3823 = vunpack.c.h.b16 %v3450
    %v3824 = vunpack.c.l.b16 %v3451
    %v3825 = vunpack.c.h.b16 %v3451
    %v3826 = vunpack.c.l.b16 %v3452
    %v3827 = vunpack.c.h.b16 %v3452
    %v3828 = vunpack.c.l.b16 %v3453
    %v3829 = vunpack.c.h.b16 %v3453
    %v3830 = vunpack.c.l.b16 %v3454
    %v3831 = vunpack.c.h.b16 %v3454
    %v3832 = vunpack.c.l.b16 %v3455
    %v3833 = vunpack.c.h.b16 %v3455
    %v3834 = vunpack.c.l.b16 %v3456
    %v3835 = vunpack.c.h.b16 %v3456
    %v3836 = vunpack.c.l.b16 %v3457
    %v3837 = vunpack.c.h.b16 %v3457
    %v3838 = vunpack.c.l.b16 %v3458
    %v3839 = vunpack.c.h.b16 %v3458
    %v3840 = vunpack.c.l.b16 %v3459
    %v3841 = vunpack.c.h.b16 %v3459
    %v3842 = vunpack.c.l.b16 %v3460
    %v3843 = vunpack.c.h.b16 %v3460
    %v3844 = vunpack.c.l.b16 %v3461
    %v3845 = vunpack.c.h.b16 %v3461
    %v3846 = vunpack.c.l.b16 %v3462
    %v3847 = vunpack.c.h.b16 %v3462
    %v3848 = vunpack.c.l.b16 %v3463
    %v3849 = vunpack.c.h.b16 %v3463
    %v3850 = vunpack.c.l.b16 %v3464
    %v3851 = vunpack.c.h.b16 %v3464
    %v3852 = vunpack.c.l.b16 %v3465
    %v3853 = vunpack.c.h.b16 %v3465
    %v3854 = vunpack.c.l.b16 %v3466
    %v3855 = vunpack.c.h.b16 %v3466
    %v3856 = vunpack.c.l.b16 %v3467
    %v3857 = vunpack.c.h.b16 %v3467
    %v3858 = vunpack.c.l.b16 %v3468
    %v3859 = vunpack.c.h.b16 %v3468
    %v3860 = vunpack.c.l.b16 %v3469
    %v3861 = vunpack.c.h.b16 %v3469
    %v3862 = vunpack.c.l.b16 %v3470
    %v3863 = vunpack.c.h.b16 %v3470
    %v3864 = vunpack.c.l.b16 %v3471
    %v3865 = vunpack.c.h.b16 %v3471
    %v3866 = vpack.c.b16 %v3614, %v3610
    %v3867 = vpack.c.b16 %v3615, %v3611
    %v3868 = vpack.c.b16 %v3616, %v3612
    %v3869 = vpack.c.b16 %v3617, %v3613
    %v3870 = vpack.c.b16 %v3622, %v3618
    %v3871 = vpack.c.b16 %v3623, %v3619
    %v3872 = vpack.c.b16 %v3624, %v3620
    %v3873 = vpack.c.b16 %v3625, %v3621
    %v3874 = vpack.c.b16 %v3630, %v3626
    %v3875 = vpack.c.b16 %v3631, %v3627
    %v3876 = vpack.c.b16 %v3632, %v3628
    %v3877 = vpack.c.b16 %v3633, %v3629
    %v3878 = vpack.c.b16 %v3638, %v3634
    %v3879 = vpack.c.b16 %v3639, %v3635
    %v3880 = vpack.c.b16 %v3640, %v3636
    %v3881 = vpack.c.b16 %v3641, %v3637
    %v3882 = vpack.c.b16 %v3646, %v3642
    %v3883 = vpack.c.b16 %v3647, %v3643
    %v3884 = vpack.c.b16 %v3648, %v3644
    %v3885 = vpack.c.b16 %v3649, %v3645
    %v3886 = vpack.c.b16 %v3654, %v3650
    %v3887 = vpack.c.b16 %v3655, %v3651
    %v3888 = vpack.c.b16 %v3656, %v3652
    %v3889 = vpack.c.b16 %v3657, %v3653
    %v3890 = vpack.c.b16 %v3662, %v3658
    %v3891 = vpack.c.b16 %v3663, %v3659
    %v3892 = vpack.c.b16 %v3664, %v3660
    %v3893 = vpack.c.b16 %v3665, %v3661
    %v3894 = vpack.c.b16 %v3670, %v3666
    %v3895 = vpack.c.b16 %v3671, %v3667
    %v3896 = vpack.c.b16 %v3672, %v3668
    %v3897 = vpack.c.b16 %v3673, %v3669
    %v3898 = vpack.c.b16 %v3678, %v3674
    %v3899 = vpack.c.b16 %v3679, %v3675
    %v3900 = vpack.c.b16 %v3680, %v3676
    %v3901 = vpack.c.b16 %v3681, %v3677
    %v3902 = vpack.c.b16 %v3686, %v3682
    %v3903 = vpack.c.b16 %v3687, %v3683
    %v3904 = vpack.c.b16 %v3688, %v3684
    %v3905 = vpack.c.b16 %v3689, %v3685
    %v3906 = vpack.c.b16 %v3694, %v3690
    %v3907 = vpack.c.b16 %v3695, %v3691
    %v3908 = vpack.c.b16 %v3696, %v3692
    %v3909 = vpack.c.b16 %v3697, %v3693
    %v3910 = vpack.c.b16 %v3702, %v3698
    %v3911 = vpack.c.b16 %v3703, %v3699
    %v3912 = vpack.c.b16 %v3704, %v3700
    %v3913 = vpack.c.b16 %v3705, %v3701
    %v3914 = vpack.c.b16 %v3710, %v3706
    %v3915 = vpack.c.b16 %v3711, %v3707
    %v3916 = vpack.c.b16 %v3712, %v3708
    %v3917 = vpack.c.b16 %v3713, %v3709
    %v3918 = vpack.c.b16 %v3718, %v3714
    %v3919 = vpack.c.b16 %v3719, %v3715
    %v3920 = vpack.c.b16 %v3720, %v3716
    %v3921 = vpack.c.b16 %v3721, %v3717
    %v3922 = vpack.c.b16 %v3726, %v3722
    %v3923 = vpack.c.b16 %v3727, %v3723
    %v3924 = vpack.c.b16 %v3728, %v3724
    %v3925 = vpack.c.b16 %v3729, %v3725
    %v3926 = vpack.c.b16 %v3734, %v3730
    %v3927 = vpack.c.b16 %v3735, %v3731
    %v3928 = vpack.c.b16 %v3736, %v3732
    %v3929 = vpack.c.b16 %v3737, %v3733
    %v3930 = vpack.c.b16 %v3742, %v3738
    %v3931 = vpack.c.b16 %v3743, %v3739
    %v3932 = vpack.c.b16 %v3744, %v3740
    %v3933 = vpack.c.b16 %v3745, %v3741
    %v3934 = vpack.c.b16 %v3750, %v3746
    %v3935 = vpack.c.b16 %v3751, %v3747
    %v3936 = vpack.c.b16 %v3752, %v3748
    %v3937 = vpack.c.b16 %v3753, %v3749
    %v3938 = vpack.c.b16 %v3758, %v3754
    %v3939 = vpack.c.b16 %v3759, %v3755
    %v3940 = vpack.c.b16 %v3760, %v3756
    %v3941 = vpack.c.b16 %v3761, %v3757
    %v3942 = vpack.c.b16 %v3766, %v3762
    %v3943 = vpack.c.b16 %v3767, %v3763
    %v3944 = vpack.c.b16 %v3768, %v3764
    %v3945 = vpack.c.b16 %v3769, %v3765
    %v3946 = vpack.c.b16 %v3774, %v3770
    %v3947 = vpack.c.b16 %v3775, %v3771
    %v3948 = vpack.c.b16 %v3776, %v3772
    %v3949 = vpack.c.b16 %v3777, %v3773
    %v3950 = vpack.c.b16 %v3782, %v3778
    %v3951 = vpack.c.b16 %v3783, %v3779
    %v3952 = vpack.c.b16 %v3784, %v3780
    %v3953 = vpack.c.b16 %v3785, %v3781
    %v3954 = vpack.c.b16 %v3790, %v3786
    %v3955 = vpack.c.b16 %v3791, %v3787
    %v3956 = vpack.c.b16 %v3792, %v3788
    %v3957 = vpack.c.b16 %v3793, %v3789
    %v3958 = vpack.c.b16 %v3798, %v3794
    %v3959 = vpack.c.b16 %v3799, %v3795
    %v3960 = vpack.c.b16 %v3800, %v3796
    %v3961 = vpack.c.b16 %v3801, %v3797
    %v3962 = vpack.c.b16 %v3806, %v3802
    %v3963 = vpack.c.b16 %v3807, %v3803
    %v3964 = vpack.c.b16 %v3808, %v3804
    %v3965 = vpack.c.b16 %v3809, %v3805
    %v3966 = vpack.c.b16 %v3814, %v3810
    %v3967 = vpack.c.b16 %v3815, %v3811
    %v3968 = vpack.c.b16 %v3816, %v3812
    %v3969 = vpack.c.b16 %v3817, %v3813
    %v3970 = vpack.c.b16 %v3822, %v3818
    %v3971 = vpack.c.b16 %v3823, %v3819
    %v3972 = vpack.c.b16 %v3824, %v3820
    %v3973 = vpack.c.b16 %v3825, %v3821
    %v3974 = vpack.c.b16 %v3830, %v3826
    %v3975 = vpack.c.b16 %v3831, %v3827
    %v3976 = vpack.c.b16 %v3832, %v3828
    %v3977 = vpack.c.b16 %v3833, %v3829
    %v3978 = vpack.c.b16 %v3838, %v3834
    %v3979 = vpack.c.b16 %v3839, %v3835
    %v3980 = vpack.c.b16 %v3840, %v3836
    %v3981 = vpack.c.b16 %v3841, %v3837
    %v3982 = vpack.c.b16 %v3846, %v3842
    %v3983 = vpack.c.b16 %v3847, %v3843
    %v3984 = vpack.c.b16 %v3848, %v3844
    %v3985 = vpack.c.b16 %v3849, %v3845
    %v3986 = vpack.c.b16 %v3854, %v3850
    %v3987 = vpack.c.b16 %v3855, %v3851
    %v3988 = vpack.c.b16 %v3856, %v3852
    %v3989 = vpack.c.b16 %v3857, %v3853
    %v3990 = vpack.c.b16 %v3862, %v3858
    %v3991 = vpack.c.b16 %v3863, %v3859
    %v3992 = vpack.c.b16 %v3864, %v3860
    %v3993 = vpack.c.b16 %v3865, %v3861
    %4122 = vmatpush.bf16.msra.mxu0 %v3894
    %4123 = vmatpush.bf16.msra.mxu0 %v3890
    %4124 = vmatpush.bf16.msra.mxu0 %v3886
    %4125 = vmatpush.bf16.msra.mxu0 %v3882
    %4126 = vmatpush.bf16.msra.mxu0 %v3878
    %4127 = vmatpush.bf16.msra.mxu0 %v3874
    %4128 = vmatpush.bf16.msra.mxu0 %v3870
    %4129 = vmatpush.bf16.msra.mxu0 %v3866
    %4130 = vmatmul.bf16.gmra.mxu0 %v3340
    %v4131 = vpop.f32.mrf.mxu0
    %v4132 = vadd.f32 %v3474, %v4131
    %v4133 = vpop.f32.mrf.mxu0
    %v4134 = vadd.f32 %v3474, %v4133
    %4135 = vdwg.mxu0
    %4136 = vmatpush.bf16.msra.mxu0 %v3926
    %4137 = vmatpush.bf16.msra.mxu0 %v3922
    %4138 = vmatpush.bf16.msra.mxu0 %v3918
    %4139 = vmatpush.bf16.msra.mxu0 %v3914
    %4140 = vmatpush.bf16.msra.mxu0 %v3910
    %4141 = vmatpush.bf16.msra.mxu0 %v3906
    %4142 = vmatpush.bf16.msra.mxu0 %v3902
    %4143 = vmatpush.bf16.msra.mxu0 %v3898
    %4144 = vmatmul.bf16.gmra.mxu0 %v3341
    %v4145 = vpop.f32.mrf.mxu0
    %v4146 = vadd.f32 %v4132, %v4145
    %v4147 = vpop.f32.mrf.mxu0
    %v4148 = vadd.f32 %v4134, %v4147
    %4149 = vdwg.mxu0
    %4150 = vmatpush.bf16.msra.mxu0 %v3958
    %4151 = vmatpush.bf16.msra.mxu0 %v3954
    %4152 = vmatpush.bf16.msra.mxu0 %v3950
    %4153 = vmatpush.bf16.msra.mxu0 %v3946
    %4154 = vmatpush.bf16.msra.mxu0 %v3942
    %4155 = vmatpush.bf16.msra.mxu0 %v3938
    %4156 = vmatpush.bf16.msra.mxu0 %v3934
    %4157 = vmatpush.bf16.msra.mxu0 %v3930
    %4158 = vmatmul.bf16.gmra.mxu0 %v3342
    %v4159 = vpop.f32.mrf.mxu0
    %v4160 = vadd.f32 %v4146, %v4159
    %v4161 = vpop.f32.mrf.mxu0
    %v4162 = vadd.f32 %v4148, %v4161
    %4163 = vdwg.mxu0
    %4164 = vmatpush.bf16.msra.mxu0 %v3990
    %4165 = vmatpush.bf16.msra.mxu0 %v3986
    %4166 = vmatpush.bf16.msra.mxu0 %v3982
    %4167 = vmatpush.bf16.msra.mxu0 %v3978
    %4168 = vmatpush.bf16.msra.mxu0 %v3974
    %4169 = vmatpush.bf16.msra.mxu0 %v3970
    %4170 = vmatpush.bf16.msra.mxu0 %v3966
    %4171 = vmatpush.bf16.msra.mxu0 %v3962
    %4172 = vmatmul.bf16.gmra.mxu0 %v3343
    %v4173 = vpop.f32.mrf.mxu0
    %v4174 = vadd.f32 %v4160, %v4173
    %v4175 = vpop.f32.mrf.mxu0
    %v4176 = vadd.f32 %v4162, %v4175
    %4177 = vdwg.mxu0
    %4178 = vmatpush.bf16.msra.mxu0 %v3895
    %4179 = vmatpush.bf16.msra.mxu0 %v3891
    %4180 = vmatpush.bf16.msra.mxu0 %v3887
    %4181 = vmatpush.bf16.msra.mxu0 %v3883
    %4182 = vmatpush.bf16.msra.mxu0 %v3879
    %4183 = vmatpush.bf16.msra.mxu0 %v3875
    %4184 = vmatpush.bf16.msra.mxu0 %v3871
    %4185 = vmatpush.bf16.msra.mxu0 %v3867
    %4186 = vmatmul.bf16.gmra.mxu0 %v3340
    %v4187 = vpop.f32.mrf.mxu0
    %v4188 = vadd.f32 %v3475, %v4187
    %v4189 = vpop.f32.mrf.mxu0
    %v4190 = vadd.f32 %v3475, %v4189
    %4191 = vdwg.mxu0
    %4192 = vmatpush.bf16.msra.mxu0 %v3927
    %4193 = vmatpush.bf16.msra.mxu0 %v3923
    %4194 = vmatpush.bf16.msra.mxu0 %v3919
    %4195 = vmatpush.bf16.msra.mxu0 %v3915
    %4196 = vmatpush.bf16.msra.mxu0 %v3911
    %4197 = vmatpush.bf16.msra.mxu0 %v3907
    %4198 = vmatpush.bf16.msra.mxu0 %v3903
    %4199 = vmatpush.bf16.msra.mxu0 %v3899
    %4200 = vmatmul.bf16.gmra.mxu0 %v3341
    %v4201 = vpop.f32.mrf.mxu0
    %v4202 = vadd.f32 %v4188, %v4201
    %v4203 = vpop.f32.mrf.mxu0
    %v4204 = vadd.f32 %v4190, %v4203
    %4205 = vdwg.mxu0
    %4206 = vmatpush.bf16.msra.mxu0 %v3959
    %4207 = vmatpush.bf16.msra.mxu0 %v3955
    %4208 = vmatpush.bf16.msra.mxu0 %v3951
    %4209 = vmatpush.bf16.msra.mxu0 %v3947
    %4210 = vmatpush.bf16.msra.mxu0 %v3943
    %4211 = vmatpush.bf16.msra.mxu0 %v3939
    %4212 = vmatpush.bf16.msra.mxu0 %v3935
    %4213 = vmatpush.bf16.msra.mxu0 %v3931
    %4214 = vmatmul.bf16.gmra.mxu0 %v3342
    %v4215 = vpop.f32.mrf.mxu0
    %v4216 = vadd.f32 %v4202, %v4215
    %v4217 = vpop.f32.mrf.mxu0
    %v4218 = vadd.f32 %v4204, %v4217
    %4219 = vdwg.mxu0
    %4220 = vmatpush.bf16.msra.mxu0 %v3991
    %4221 = vmatpush.bf16.msra.mxu0 %v3987
    %4222 = vmatpush.bf16.msra.mxu0 %v3983
    %4223 = vmatpush.bf16.msra.mxu0 %v3979
    %4224 = vmatpush.bf16.msra.mxu0 %v3975
    %4225 = vmatpush.bf16.msra.mxu0 %v3971
    %4226 = vmatpush.bf16.msra.mxu0 %v3967
    %4227 = vmatpush.bf16.msra.mxu0 %v3963
    %4228 = vmatmul.bf16.gmra.mxu0 %v3343
    %v4229 = vpop.f32.mrf.mxu0
    %v4230 = vadd.f32 %v4216, %v4229
    %v4231 = vpop.f32.mrf.mxu0
    %v4232 = vadd.f32 %v4218, %v4231
    %4233 = vdwg.mxu0
    %4234 = vmatpush.bf16.msra.mxu0 %v3896
    %4235 = vmatpush.bf16.msra.mxu0 %v3892
    %4236 = vmatpush.bf16.msra.mxu0 %v3888
    %4237 = vmatpush.bf16.msra.mxu0 %v3884
    %4238 = vmatpush.bf16.msra.mxu0 %v3880
    %4239 = vmatpush.bf16.msra.mxu0 %v3876
    %4240 = vmatpush.bf16.msra.mxu0 %v3872
    %4241 = vmatpush.bf16.msra.mxu0 %v3868
    %4242 = vmatmul.bf16.gmra.mxu0 %v3340
    %v4243 = vpop.f32.mrf.mxu0
    %v4244 = vadd.f32 %v3476, %v4243
    %v4245 = vpop.f32.mrf.mxu0
    %v4246 = vadd.f32 %v3476, %v4245
    %4247 = vdwg.mxu0
    %4248 = vmatpush.bf16.msra.mxu0 %v3928
    %4249 = vmatpush.bf16.msra.mxu0 %v3924
    %4250 = vmatpush.bf16.msra.mxu0 %v3920
    %4251 = vmatpush.bf16.msra.mxu0 %v3916
    %4252 = vmatpush.bf16.msra.mxu0 %v3912
    %4253 = vmatpush.bf16.msra.mxu0 %v3908
    %4254 = vmatpush.bf16.msra.mxu0 %v3904
    %4255 = vmatpush.bf16.msra.mxu0 %v3900
    %4256 = vmatmul.bf16.gmra.mxu0 %v3341
    %v4257 = vpop.f32.mrf.mxu0
    %v4258 = vadd.f32 %v4244, %v4257
    %v4259 = vpop.f32.mrf.mxu0
    %v4260 = vadd.f32 %v4246, %v4259
    %4261 = vdwg.mxu0
    %4262 = vmatpush.bf16.msra.mxu0 %v3960
    %4263 = vmatpush.bf16.msra.mxu0 %v3956
    %4264 = vmatpush.bf16.msra.mxu0 %v3952
    %4265 = vmatpush.bf16.msra.mxu0 %v3948
    %4266 = vmatpush.bf16.msra.mxu0 %v3944
    %4267 = vmatpush.bf16.msra.mxu0 %v3940
    %4268 = vmatpush.bf16.msra.mxu0 %v3936
    %4269 = vmatpush.bf16.msra.mxu0 %v3932
    %4270 = vmatmul.bf16.gmra.mxu0 %v3342
    %v4271 = vpop.f32.mrf.mxu0
    %v4272 = vadd.f32 %v4258, %v4271
    %v4273 = vpop.f32.mrf.mxu0
    %v4274 = vadd.f32 %v4260, %v4273
    %4275 = vdwg.mxu0
    %4276 = vmatpush.bf16.msra.mxu0 %v3992
    %4277 = vmatpush.bf16.msra.mxu0 %v3988
    %4278 = vmatpush.bf16.msra.mxu0 %v3984
    %4279 = vmatpush.bf16.msra.mxu0 %v3980
    %4280 = vmatpush.bf16.msra.mxu0 %v3976
    %4281 = vmatpush.bf16.msra.mxu0 %v3972
    %4282 = vmatpush.bf16.msra.mxu0 %v3968
    %4283 = vmatpush.bf16.msra.mxu0 %v3964
    %4284 = vmatmul.bf16.gmra.mxu0 %v3343
    %v4285 = vpop.f32.mrf.mxu0
    %v4286 = vadd.f32 %v4272, %v4285
    %v4287 = vpop.f32.mrf.mxu0
    %v4288 = vadd.f32 %v4274, %v4287
    %4289 = vdwg.mxu0
    %4290 = vmatpush.bf16.msra.mxu0 %v3897
    %4291 = vmatpush.bf16.msra.mxu0 %v3893
    %4292 = vmatpush.bf16.msra.mxu0 %v3889
    %4293 = vmatpush.bf16.msra.mxu0 %v3885
    %4294 = vmatpush.bf16.msra.mxu0 %v3881
    %4295 = vmatpush.bf16.msra.mxu0 %v3877
    %4296 = vmatpush.bf16.msra.mxu0 %v3873
    %4297 = vmatpush.bf16.msra.mxu0 %v3869
    %4298 = vmatmul.bf16.gmra.mxu0 %v3340
    %v4299 = vpop.f32.mrf.mxu0
    %v4300 = vadd.f32 %v3477, %v4299
    %v4301 = vpop.f32.mrf.mxu0
    %v4302 = vadd.f32 %v3477, %v4301
    %4303 = vdwg.mxu0
    %4304 = vmatpush.bf16.msra.mxu0 %v3929
    %4305 = vmatpush.bf16.msra.mxu0 %v3925
    %4306 = vmatpush.bf16.msra.mxu0 %v3921
    %4307 = vmatpush.bf16.msra.mxu0 %v3917
    %4308 = vmatpush.bf16.msra.mxu0 %v3913
    %4309 = vmatpush.bf16.msra.mxu0 %v3909
    %4310 = vmatpush.bf16.msra.mxu0 %v3905
    %4311 = vmatpush.bf16.msra.mxu0 %v3901
    %4312 = vmatmul.bf16.gmra.mxu0 %v3341
    %v4313 = vpop.f32.mrf.mxu0
    %v4314 = vadd.f32 %v4300, %v4313
    %v4315 = vpop.f32.mrf.mxu0
    %v4316 = vadd.f32 %v4302, %v4315
    %4317 = vdwg.mxu0
    %4318 = vmatpush.bf16.msra.mxu0 %v3961
    %4319 = vmatpush.bf16.msra.mxu0 %v3957
    %4320 = vmatpush.bf16.msra.mxu0 %v3953
    %4321 = vmatpush.bf16.msra.mxu0 %v3949
    %4322 = vmatpush.bf16.msra.mxu0 %v3945
    %4323 = vmatpush.bf16.msra.mxu0 %v3941
    %4324 = vmatpush.bf16.msra.mxu0 %v3937
    %4325 = vmatpush.bf16.msra.mxu0 %v3933
    %4326 = vmatmul.bf16.gmra.mxu0 %v3342
    %v4327 = vpop.f32.mrf.mxu0
    %v4328 = vadd.f32 %v4314, %v4327
    %v4329 = vpop.f32.mrf.mxu0
    %v4330 = vadd.f32 %v4316, %v4329
    %4331 = vdwg.mxu0
    %4332 = vmatpush.bf16.msra.mxu0 %v3993
    %4333 = vmatpush.bf16.msra.mxu0 %v3989
    %4334 = vmatpush.bf16.msra.mxu0 %v3985
    %4335 = vmatpush.bf16.msra.mxu0 %v3981
    %4336 = vmatpush.bf16.msra.mxu0 %v3977
    %4337 = vmatpush.bf16.msra.mxu0 %v3973
    %4338 = vmatpush.bf16.msra.mxu0 %v3969
    %4339 = vmatpush.bf16.msra.mxu0 %v3965
    %4340 = vmatmul.bf16.gmra.mxu0 %v3343
    %v4341 = vpop.f32.mrf.mxu0
    %v4342 = vadd.f32 %v4328, %v4341
    %v4343 = vpop.f32.mrf.mxu0
    %v4344 = vadd.f32 %v4330, %v4343
    %4345 = vdwg.mxu0
    %v4346 = vmax.f32 %v4174, 0.0
    %v4347 = vmax.f32 %v4230, 0.0
    %v4348 = vmax.f32 %v4286, 0.0
    %v4349 = vmax.f32 %v4342, 0.0
    %v4350 = vmax.f32 %v4176, 0.0
    %v4351 = vmax.f32 %v4232, 0.0
    %v4352 = vmax.f32 %v4288, 0.0
    %v4353 = vmax.f32 %v4344, 0.0
    %v4354 = vld [vmem:[%s11] sm:$0xf]
    %v4356 = vperm.slane %v4354, 0
    %v4357 = vperm.slane %v4354, 1
    %v4358 = vperm.slane %v4354, 2
    %v4359 = vperm.slane %v4354, 3
    %v4364 = vmul.f32 %v4346, %v4356
    %v4365 = vmul.f32 %v4347, %v4357
    %v4366 = vmul.f32 %v4348, %v4358
    %v4367 = vmul.f32 %v4349, %v4359
    %v4368 = vmul.f32 %v4350, %v4356
    %v4369 = vmul.f32 %v4351, %v4357
    %v4370 = vmul.f32 %v4352, %v4358
    %v4371 = vmul.f32 %v4353, %v4359
    %v4372 = vadd.f32 %v4364, %v4365
    %v4373 = vadd.f32 %v4372, %v4366
    %v4374 = vadd.f32 %v4373, %v4367
    %4375 = vadd.xlane.f32.xlu0 %v4374
    %v4376 = vpop.xlane.xlu0 %4375
    %v4377 = vadd.f32 %v4368, %v4369
    %v4378 = vadd.f32 %v4377, %v4370
    %v4379 = vadd.f32 %v4378, %v4371
    %4380 = vadd.xlane.f32.xlu0 %v4379
    %v4381 = vpop.xlane.xlu0 %4380
    %v4382 = vld [vmem:[#allocation2] sm:$0x1]
    %v4384 = vperm.slane %v4382, 0
    %v4386 = vadd.f32 %v4376, %v4384
    %v4387 = vadd.f32 %v4381, %v4384
    %vm4388 = vcmask 7168
    %4389 = vst.msk [vmem:[%s13] sm:$0xff] %vm4388, %v4386
    %4390 = vst.msk [vmem:[%s13 + $0x8] sm:$0xff] %vm4388, %v4387
    // Predicated region
    $region74: #{_fwd.1} parent=1 // pred_check
      _
    $region75: #{_fwd.1} parent=1 // pred_check_branch
      %4392 = sbr.rel (0) target = $region77
    $region76: #{_fwd.1} parent=1 // pred_region
      _
    $region77: #{_fwd.1} parent=1 // pred_fallthru
      _
    // Predicated region
    $region78: #{_fwd.1} parent=1 // pred_check
      _
    $region79: #{_fwd.1} parent=1 // pred_check_branch
      %4394 = sbr.rel (0) target = $region81
    $region80: #{_fwd.1} parent=1 // pred_region
      _
    $region81: #{_fwd.1} parent=1 // pred_fallthru
      _
    %4395 = vsyncpa [#allocation4], 1
    %4396 = vsyncpa [#allocation6], 1
    %4397 = vsyncpa [#allocation9], 1

</llo_original>
